<compile_context>
chip_gen: v7x
topology: tpu7x:2x2x1
jax: 0.10.0
libtpu: 0.0.40
codegen_flags: <defaults>
</compile_context>

<pallas_src>
import math
import functools

import jax
import jax.numpy as jnp
from jax.experimental import pallas as pl
from jax.experimental.pallas import tpu as pltpu


def _multiheads_kernel(q_ref, k_ref, v_ref, mask_ref,
                       gamma_ref, beta_ref,
                       wq_ref, bq_ref, wk_ref, bk_ref, wv_ref, bv_ref,
                       o_ref,
                       kh_ref, vh_ref,
                       *, heads):
    bt, tq, e = q_ref.shape
    n = k_ref.shape[1]
    d = e // heads
    inv_sqrt_d = 1.0 / math.sqrt(d)

    gamma = gamma_ref[0]          # (e,)
    beta = beta_ref[0]            # (e,)

    def layernorm(x):             # x: (rows, e) f32
        mu = jnp.mean(x, axis=-1, keepdims=True)
        xc = x - mu
        var = jnp.mean(xc * xc, axis=-1, keepdims=True)
        return xc * jax.lax.rsqrt(var + 1e-5) * gamma + beta

    def to_heads(x, rows):        # (bt*rows, e) f32 -> (bt*heads, rows, d) bf16
        x = x.reshape(bt, rows, heads, d)
        x = jnp.swapaxes(x, 1, 2)                       # (bt, heads, rows, d)
        return x.reshape(bt * heads, rows, d).astype(jnp.bfloat16)

    # K/V path once per batch tile; cached (head-split, bf16) in VMEM for all q-row tiles.
    @pl.when(pl.program_id(1) == 0)
    def _():
        kn = layernorm(k_ref[...].astype(jnp.float32).reshape(bt * n, e)).astype(jnp.bfloat16)
        vn = layernorm(v_ref[...].astype(jnp.float32).reshape(bt * n, e)).astype(jnp.bfloat16)
        kp = jnp.dot(kn, wk_ref[...], preferred_element_type=jnp.float32) + bk_ref[0]
        vp = jnp.dot(vn, wv_ref[...], preferred_element_type=jnp.float32) + bv_ref[0]
        kh_ref[...] = to_heads(kp, n)
        vh_ref[...] = to_heads(vp, n)

    # Q path for this q-row tile.
    q = q_ref[...]                                      # (bt, tq, e) kept for residual
    qn = layernorm(q.astype(jnp.float32).reshape(bt * tq, e)).astype(jnp.bfloat16)
    qp = jnp.dot(qn, wq_ref[...], preferred_element_type=jnp.float32) + bq_ref[0]
    qh = to_heads(qp * inv_sqrt_d, tq)                  # 1/sqrt(d) folded into Q once

    # Scores: one batched contraction over d (batch dim bt*heads, no explicit K^T).
    s = jax.lax.dot_general(qh, kh_ref[...], (((2,), (2,)), ((0,), (0,))),
                            preferred_element_type=jnp.float32)    # (bt*heads, tq, n)
    s = s.reshape(bt, heads, tq, n)

    masked = mask_ref[...] != 0                         # (bt, 1, tq, n): broadcast on heads
    s = jnp.where(masked, jnp.float32(-1e30), s)        # finite sentinel: no inf-inf NaN

    # Unnormalized softmax; normalize after PV (touches tq*d elements instead of tq*n).
    p = jnp.exp(s - jnp.max(s, axis=-1, keepdims=True))
    denom = jnp.sum(p, axis=-1, keepdims=True)          # (bt, heads, tq, 1) f32
    p = p.reshape(bt * heads, tq, n).astype(jnp.bfloat16)

    attn = jax.lax.dot_general(p, vh_ref[...], (((2,), (1,)), ((0,), (0,))),
                               preferred_element_type=jnp.float32)  # (bt*heads, tq, d)
    attn = attn.reshape(bt, heads, tq, d) * pl.reciprocal(denom, approx=True)

    # Lane-dense output: merge heads back into the e axis and store ONCE; residual adds
    # the *unnormalized* Q (matches the PyTorch forward).
    out = jnp.swapaxes(attn, 1, 2).reshape(bt, tq, e)
    o_ref[...] = (out + q.astype(jnp.float32)).astype(o_ref.dtype)


def _vmem_budget_bytes():
    cap = 64 << 20                            # conservative default (v7x per-core VMEM)
    try:
        info = pltpu.get_tpu_info()
        cap = int(getattr(info, "vmem_capacity_bytes", cap) or cap)
    except Exception:
        pass
    return (cap * 3) // 4                     # ~48 MiB on v7x, ~96 MiB on v5e/v6e


def _vmem_estimate(bt, tq, n, e, heads):
    f32, bf16 = 4, 2
    est = 2 * bt * tq * e * f32               # Q tile (double-buffered)
    est += 2 * 2 * bt * n * e * f32           # K, V tiles (double-buffered)
    est += 2 * bt * tq * n                    # int8 mask (double-buffered)
    est += 2 * bt * tq * e * f32              # output (double-buffered)
    est += 3 * e * e * bf16 + 5 * e * f32     # weights / biases / LN params (single)
    est += 2 * bt * n * e * bf16              # kh/vh head-split caches (scratch)
    est += bt * heads * tq * n * (f32 + bf16)                 # score + prob temporaries
    est += 4 * bt * n * e * bf16 + 4 * bt * tq * e * f32      # LN / proj / attn temporaries
    return est


def _choose_tiles(b, n, e, heads, budget):
    def tq_options():
        yield n                                                # full rows (block == array)
        for t in (1024, 512, 256, 128, 64, 32, 16, 8):         # multiples of 8 dividing n
            if t < n and n % t == 0:
                yield t

    bt = min(b, 8)
    if b > 1:
        bt = min(bt, max(1, b // 2))   # keep >= 2 batch steps: v7x has 2 TCs + pipelining
    while bt >= 1:
        if b % bt == 0:
            for tq in tq_options():    # shrink the q-row tile before shrinking batch tile
                if _vmem_estimate(bt, tq, n, e, heads) <= budget:
                    return bt, tq
        bt -= 1
    return 1, n


def multiheads_forward(q, k, v, mask, params, heads, block_b=None, block_q=None):
    b, n, e = q.shape
    assert e % heads == 0, "embed dim must be divisible by heads"
    d = e // heads

    budget = _vmem_budget_bytes()
    bt, tq = _choose_tiles(b, n, e, heads, budget)
    if block_b is not None:
        bt = math.gcd(b, block_b)
    if block_q is not None and n % block_q == 0 and (block_q % 8 == 0 or block_q == n):
        tq = block_q
    nb, nq = b // bt, n // tq

    mask_i8 = mask.astype(jnp.int8)            # 4x less DMA than int32
    # TODO(synk): if the mask is static/causal, generate it in-kernel from
    # broadcasted_iota comparisons instead of DMAing the (b, 1, n, n) tensor.

    gamma = params["gamma"].reshape(1, e).astype(jnp.float32)
    beta = params["beta"].reshape(1, e).astype(jnp.float32)
    wq = params["wq"].astype(jnp.bfloat16)     # bf16 weights: MXU fast path, half the VMEM
    wk = params["wk"].astype(jnp.bfloat16)
    wv = params["wv"].astype(jnp.bfloat16)
    bq = params["bq"].reshape(1, e).astype(jnp.float32)
    bk = params["bk"].reshape(1, e).astype(jnp.float32)
    bv = params["bv"].reshape(1, e).astype(jnp.float32)

    kernel = functools.partial(_multiheads_kernel, heads=heads)

    def call(single_buffer_consts):
        const_kw = {"pipeline_mode": pl.Buffered(1)} if single_buffer_consts else {}
        row = pl.BlockSpec((1, e), lambda i, j: (0, 0), **const_kw)
        full2d = pl.BlockSpec((e, e), lambda i, j: (0, 0), **const_kw)
        q_spec = pl.BlockSpec((bt, tq, e), lambda i, j: (i, j, 0))
        kv_spec = pl.BlockSpec((bt, n, e), lambda i, j: (i, 0, 0))
        return pl.pallas_call(
            kernel,
            out_shape=jax.ShapeDtypeStruct((b, n, e), q.dtype),
            grid=(nb, nq),
            in_specs=[
                q_spec,                                                   # Q (row tile)
                kv_spec,                                                  # K (full rows)
                kv_spec,                                                  # V (full rows)
                pl.BlockSpec((bt, 1, tq, n), lambda i, j: (i, 0, j, 0)),  # mask (int8)
                row, row,                                                 # gamma, beta
                full2d, row,                                              # Wq, bq
                full2d, row,                                              # Wk, bk
                full2d, row,                                              # Wv, bv
            ],
            out_specs=q_spec,
            scratch_shapes=[
                pltpu.VMEM((bt * heads, n, d), jnp.bfloat16),   # cached K head projections
                pltpu.VMEM((bt * heads, n, d), jnp.bfloat16),   # cached V head projections
            ],
            compiler_params=pltpu.CompilerParams(
                dimension_semantics=("parallel", "arbitrary"),
                vmem_limit_bytes=budget),
        )(q, k, v, mask_i8, gamma, beta, wq, bq, wk, bk, wv, bv)

    try:
        return call(True)      # single-buffer the grid-constant operands (saves VMEM)
    except Exception:
        return call(False)     # fall back if pipeline_mode=pl.Buffered(1) is unsupported


def multiheads_reference(q, k, v, mask, params, heads):
    """Pure-JAX (f32) reference mirroring the PyTorch forward."""
    b, n, e = q.shape
    d = e // heads

    def ln(x):
        mu = x.mean(-1, keepdims=True)
        var = ((x - mu) ** 2).mean(-1, keepdims=True)
        return (x - mu) / jnp.sqrt(var + 1e-5) * params["gamma"] + params["beta"]

    qp = ln(q) @ params["wq"] + params["bq"]
    kp = ln(k) @ params["wk"] + params["bk"]
    vp = ln(v) @ params["wv"] + params["bv"]

    qh = qp.reshape(b, n, heads, d).transpose(0, 2, 1, 3)
    kh = kp.reshape(b, n, heads, d).transpose(0, 2, 1, 3)
    vh = vp.reshape(b, n, heads, d).transpose(0, 2, 1, 3)

    s = jnp.einsum("bhqd,bhkd->bhqk", qh, kh) / math.sqrt(d)
    s = jnp.where(mask, -jnp.inf, s)
    p = jax.nn.softmax(s, axis=-1)
    o = jnp.einsum("bhqk,bhkd->bhqd", p, vh).transpose(0, 2, 1, 3).reshape(b, n, e)
    return o + q


if __name__ == "__main__":
    # Small shapes consistent with the module's forward: [b, n, e]
    b, n, e, heads = 2, 8, 32, 4

    key = jax.random.PRNGKey(0)
    keys = jax.random.split(key, 12)

    q = jax.random.normal(keys[0], (b, n, e), dtype=jnp.float32)
    k = jax.random.normal(keys[1], (b, n, e), dtype=jnp.float32)
    v = jax.random.normal(keys[2], (b, n, e), dtype=jnp.float32)

    # Causal mask, broadcast over heads: True means "mask out" (filled with -inf)
    causal = jnp.triu(jnp.ones((n, n), dtype=bool), k=1)
    mask = jnp.broadcast_to(causal[None, None, :, :], (b, 1, n, n))

    # Deterministic synthetic parameters. PyTorch Linear stores W as [out, in] and
    # computes x @ W.T + b; here we directly generate the equivalent [in, out] matrices.
    scale = 0.05
    params = {
        "gamma": jax.random.normal(keys[3], (e,), dtype=jnp.float32) * 0.1 + 1.0,
        "beta": jax.random.normal(keys[4], (e,), dtype=jnp.float32) * 0.1,
        "wq": jax.random.normal(keys[5], (e, e), dtype=jnp.float32) * scale,
        "bq": jax.random.normal(keys[6], (e,), dtype=jnp.float32) * scale,
        "wk": jax.random.normal(keys[7], (e, e), dtype=jnp.float32) * scale,
        "bk": jax.random.normal(keys[8], (e,), dtype=jnp.float32) * scale,
        "wv": jax.random.normal(keys[9], (e, e), dtype=jnp.float32) * scale,
        "bv": jax.random.normal(keys[10], (e,), dtype=jnp.float32) * scale,
    }

    out = multiheads_forward(q, k, v, mask, params, heads)
    out = jax.block_until_ready(out)

    ref = multiheads_reference(q, k, v, mask, params, heads)
    assert out.shape == (b, n, e)
    # Tolerance relaxed vs the f32 reference: MXU inputs are bf16 (f32 accumulation)
    # and the softmax denominator uses the approximate EUP reciprocal.
    assert jnp.allclose(out, ref, atol=2e-2, rtol=2e-2), "mismatch vs reference"

    print("KERNEL_OK")
</pallas_src>

<mosaic_0001>
module attributes {stable_mosaic.version = 11 : i64} {
  func.func @_multiheads_kernel(%arg0: i32, %arg1: i32, %arg2: memref<1x8x32xf32, #tpu.memory_space<vmem>>, %arg3: memref<1x8x32xf32, #tpu.memory_space<vmem>>, %arg4: memref<1x8x32xf32, #tpu.memory_space<vmem>>, %arg5: memref<1x1x8x8xi8, #tpu.memory_space<vmem>>, %arg6: memref<1x32xf32, #tpu.memory_space<vmem>>, %arg7: memref<1x32xf32, #tpu.memory_space<vmem>>, %arg8: memref<32x32xbf16, #tpu.memory_space<vmem>>, %arg9: memref<1x32xf32, #tpu.memory_space<vmem>>, %arg10: memref<32x32xbf16, #tpu.memory_space<vmem>>, %arg11: memref<1x32xf32, #tpu.memory_space<vmem>>, %arg12: memref<32x32xbf16, #tpu.memory_space<vmem>>, %arg13: memref<1x32xf32, #tpu.memory_space<vmem>>, %arg14: memref<1x8x32xf32, #tpu.memory_space<vmem>>, %arg15: memref<4x8x8xbf16, #tpu.memory_space<vmem>>, %arg16: memref<4x8x8xbf16, #tpu.memory_space<vmem>>) attributes {dimension_semantics = [#tpu.dimension_semantics<parallel>, #tpu.dimension_semantics<arbitrary>], iteration_bounds = array<i64: 2, 1>, scalar_prefetch = 0 : i64, scratch_operands = 2 : i64, tpu.core_type = #tpu.core_type<tc>, window_params = [{transform_indices = @transform_0, window_bounds = array<i64: 1, 8, 32>}, {transform_indices = @transform_1, window_bounds = array<i64: 1, 8, 32>}, {transform_indices = @transform_2, window_bounds = array<i64: 1, 8, 32>}, {transform_indices = @transform_3, window_bounds = array<i64: 1, 1, 8, 8>}, {pipeline_mode = #tpu.pipeline_mode<synchronous>, transform_indices = @transform_4, window_bounds = array<i64: 1, 32>}, {pipeline_mode = #tpu.pipeline_mode<synchronous>, transform_indices = @transform_5, window_bounds = array<i64: 1, 32>}, {pipeline_mode = #tpu.pipeline_mode<synchronous>, transform_indices = @transform_6, window_bounds = array<i64: 32, 32>}, {pipeline_mode = #tpu.pipeline_mode<synchronous>, transform_indices = @transform_7, window_bounds = array<i64: 1, 32>}, {pipeline_mode = #tpu.pipeline_mode<synchronous>, transform_indices = @transform_8, window_bounds = array<i64: 32, 32>}, {pipeline_mode = #tpu.pipeline_mode<synchronous>, transform_indices = @transform_9, window_bounds = array<i64: 1, 32>}, {pipeline_mode = #tpu.pipeline_mode<synchronous>, transform_indices = @transform_10, window_bounds = array<i64: 32, 32>}, {pipeline_mode = #tpu.pipeline_mode<synchronous>, transform_indices = @transform_11, window_bounds = array<i64: 1, 32>}, {transform_indices = @transform_12, window_bounds = array<i64: 1, 8, 32>}]} {
    %c0 = arith.constant 0 : index
    %c0_0 = arith.constant 0 : index
    %0 = vector.load %arg6[%c0, %c0_0] : memref<1x32xf32, #tpu.memory_space<vmem>>, vector<1x32xf32>
    %1 = vector.shape_cast %0 : vector<1x32xf32> to vector<32xf32>
    %c0_1 = arith.constant 0 : index
    %c0_2 = arith.constant 0 : index
    %2 = vector.load %arg7[%c0_1, %c0_2] : memref<1x32xf32, #tpu.memory_space<vmem>>, vector<1x32xf32>
    %3 = vector.shape_cast %2 : vector<1x32xf32> to vector<32xf32>
    %c0_i32 = arith.constant 0 : i32
    %4 = arith.cmpi eq, %arg1, %c0_i32 : i32
    %5 = arith.extui %4 : i1 to i32
    %c0_i32_3 = arith.constant 0 : i32
    %6 = arith.cmpi ne, %5, %c0_i32_3 : i32
    scf.if %6 {
      %c0_35 = arith.constant 0 : index
      %c0_36 = arith.constant 0 : index
      %c0_37 = arith.constant 0 : index
      %74 = vector.load %arg3[%c0_35, %c0_36, %c0_37] : memref<1x8x32xf32, #tpu.memory_space<vmem>>, vector<1x8x32xf32>
      %75 = vector.shape_cast %74 : vector<1x8x32xf32> to vector<8x32xf32>
      %cst_38 = arith.constant dense<0.000000e+00> : vector<8xf32>
      %76 = vector.multi_reduction <add>, %75, %cst_38 [1] : vector<8x32xf32> to vector<8xf32>
      %77 = vector.shape_cast %76 : vector<8xf32> to vector<8x1xf32>
      %cst_39 = arith.constant 3.200000e+01 : f32
      %78 = vector.broadcast %cst_39 : f32 to vector<8x1xf32>
      %79 = arith.divf %77, %78 : vector<8x1xf32>
      %80 = vector.broadcast %79 : vector<8x1xf32> to vector<8x32xf32>
      %81 = arith.subf %75, %80 : vector<8x32xf32>
      %82 = arith.mulf %81, %81 : vector<8x32xf32>
      %cst_40 = arith.constant dense<0.000000e+00> : vector<8xf32>
      %83 = vector.multi_reduction <add>, %82, %cst_40 [1] : vector<8x32xf32> to vector<8xf32>
      %84 = vector.shape_cast %83 : vector<8xf32> to vector<8x1xf32>
      %cst_41 = arith.constant 3.200000e+01 : f32
      %85 = vector.broadcast %cst_41 : f32 to vector<8x1xf32>
      %86 = arith.divf %84, %85 : vector<8x1xf32>
      %cst_42 = arith.constant 9.99999974E-6 : f32
      %87 = vector.broadcast %cst_42 : f32 to vector<8x1xf32>
      %88 = arith.addf %86, %87 : vector<8x1xf32>
      %89 = math.rsqrt %88 : vector<8x1xf32>
      %90 = vector.broadcast %89 : vector<8x1xf32> to vector<8x32xf32>
      %91 = arith.mulf %81, %90 : vector<8x32xf32>
      %92 = vector.shape_cast %1 : vector<32xf32> to vector<1x32xf32>
      %93 = vector.broadcast %92 : vector<1x32xf32> to vector<8x32xf32>
      %94 = arith.mulf %91, %93 : vector<8x32xf32>
      %95 = vector.shape_cast %3 : vector<32xf32> to vector<1x32xf32>
      %96 = vector.broadcast %95 : vector<1x32xf32> to vector<8x32xf32>
      %97 = arith.addf %94, %96 : vector<8x32xf32>
      %98 = arith.truncf %97 : vector<8x32xf32> to vector<8x32xbf16>
      %c0_43 = arith.constant 0 : index
      %c0_44 = arith.constant 0 : index
      %c0_45 = arith.constant 0 : index
      %99 = vector.load %arg4[%c0_43, %c0_44, %c0_45] : memref<1x8x32xf32, #tpu.memory_space<vmem>>, vector<1x8x32xf32>
      %100 = vector.shape_cast %99 : vector<1x8x32xf32> to vector<8x32xf32>
      %cst_46 = arith.constant dense<0.000000e+00> : vector<8xf32>
      %101 = vector.multi_reduction <add>, %100, %cst_46 [1] : vector<8x32xf32> to vector<8xf32>
      %102 = vector.shape_cast %101 : vector<8xf32> to vector<8x1xf32>
      %cst_47 = arith.constant 3.200000e+01 : f32
      %103 = vector.broadcast %cst_47 : f32 to vector<8x1xf32>
      %104 = arith.divf %102, %103 : vector<8x1xf32>
      %105 = vector.broadcast %104 : vector<8x1xf32> to vector<8x32xf32>
      %106 = arith.subf %100, %105 : vector<8x32xf32>
      %107 = arith.mulf %106, %106 : vector<8x32xf32>
      %cst_48 = arith.constant dense<0.000000e+00> : vector<8xf32>
      %108 = vector.multi_reduction <add>, %107, %cst_48 [1] : vector<8x32xf32> to vector<8xf32>
      %109 = vector.shape_cast %108 : vector<8xf32> to vector<8x1xf32>
      %cst_49 = arith.constant 3.200000e+01 : f32
      %110 = vector.broadcast %cst_49 : f32 to vector<8x1xf32>
      %111 = arith.divf %109, %110 : vector<8x1xf32>
      %cst_50 = arith.constant 9.99999974E-6 : f32
      %112 = vector.broadcast %cst_50 : f32 to vector<8x1xf32>
      %113 = arith.addf %111, %112 : vector<8x1xf32>
      %114 = math.rsqrt %113 : vector<8x1xf32>
      %115 = vector.broadcast %114 : vector<8x1xf32> to vector<8x32xf32>
      %116 = arith.mulf %106, %115 : vector<8x32xf32>
      %117 = vector.shape_cast %1 : vector<32xf32> to vector<1x32xf32>
      %118 = vector.broadcast %117 : vector<1x32xf32> to vector<8x32xf32>
      %119 = arith.mulf %116, %118 : vector<8x32xf32>
      %120 = vector.shape_cast %3 : vector<32xf32> to vector<1x32xf32>
      %121 = vector.broadcast %120 : vector<1x32xf32> to vector<8x32xf32>
      %122 = arith.addf %119, %121 : vector<8x32xf32>
      %123 = arith.truncf %122 : vector<8x32xf32> to vector<8x32xbf16>
      %c0_51 = arith.constant 0 : index
      %c0_52 = arith.constant 0 : index
      %124 = vector.load %arg10[%c0_51, %c0_52] : memref<32x32xbf16, #tpu.memory_space<vmem>>, vector<32x32xbf16>
      %cst_53 = arith.constant dense<0.000000e+00> : vector<8x32xf32>
      %125 = tpu.matmul %98, %124, %cst_53 {dimension_numbers = #tpu.dot_dimension_numbers<[1], [0], [0], [1], [0, 0, 1, 1], [], []>} : vector<8x32xbf16>, vector<32x32xbf16>, vector<8x32xf32> -> vector<8x32xf32>
      %c0_54 = arith.constant 0 : index
      %c0_55 = arith.constant 0 : index
      %126 = vector.load %arg11[%c0_54, %c0_55] : memref<1x32xf32, #tpu.memory_space<vmem>>, vector<1x32xf32>
      %127 = vector.shape_cast %126 : vector<1x32xf32> to vector<32xf32>
      %128 = vector.shape_cast %127 : vector<32xf32> to vector<1x32xf32>
      %129 = vector.broadcast %128 : vector<1x32xf32> to vector<8x32xf32>
      %130 = arith.addf %125, %129 : vector<8x32xf32>
      %c0_56 = arith.constant 0 : index
      %c0_57 = arith.constant 0 : index
      %131 = vector.load %arg12[%c0_56, %c0_57] : memref<32x32xbf16, #tpu.memory_space<vmem>>, vector<32x32xbf16>
      %cst_58 = arith.constant dense<0.000000e+00> : vector<8x32xf32>
      %132 = tpu.matmul %123, %131, %cst_58 {dimension_numbers = #tpu.dot_dimension_numbers<[1], [0], [0], [1], [0, 0, 1, 1], [], []>} : vector<8x32xbf16>, vector<32x32xbf16>, vector<8x32xf32> -> vector<8x32xf32>
      %c0_59 = arith.constant 0 : index
      %c0_60 = arith.constant 0 : index
      %133 = vector.load %arg13[%c0_59, %c0_60] : memref<1x32xf32, #tpu.memory_space<vmem>>, vector<1x32xf32>
      %134 = vector.shape_cast %133 : vector<1x32xf32> to vector<32xf32>
      %135 = vector.shape_cast %134 : vector<32xf32> to vector<1x32xf32>
      %136 = vector.broadcast %135 : vector<1x32xf32> to vector<8x32xf32>
      %137 = arith.addf %132, %136 : vector<8x32xf32>
      %138 = vector.shape_cast %130 : vector<8x32xf32> to vector<1x8x4x8xf32>
      %139 = tpu.transpose %138, [0, 2, 1, 3] : vector<1x8x4x8xf32> -> vector<1x4x8x8xf32>
      %140 = vector.shape_cast %139 : vector<1x4x8x8xf32> to vector<4x8x8xf32>
      %141 = arith.truncf %140 : vector<4x8x8xf32> to vector<4x8x8xbf16>
      %c0_61 = arith.constant 0 : index
      %c0_62 = arith.constant 0 : index
      %c0_63 = arith.constant 0 : index
      %142 = vector.load %arg15[%c0_61, %c0_62, %c0_63] : memref<4x8x8xbf16, #tpu.memory_space<vmem>>, vector<4x8x8xbf16>
      tpu.vector_store %arg15[%c0_61, %c0_62, %c0_63], %141 {strides = array<i32>} : memref<4x8x8xbf16, #tpu.memory_space<vmem>>, vector<4x8x8xbf16>,
      %143 = vector.shape_cast %137 : vector<8x32xf32> to vector<1x8x4x8xf32>
      %144 = tpu.transpose %143, [0, 2, 1, 3] : vector<1x8x4x8xf32> -> vector<1x4x8x8xf32>
      %145 = vector.shape_cast %144 : vector<1x4x8x8xf32> to vector<4x8x8xf32>
      %146 = arith.truncf %145 : vector<4x8x8xf32> to vector<4x8x8xbf16>
      %c0_64 = arith.constant 0 : index
      %c0_65 = arith.constant 0 : index
      %c0_66 = arith.constant 0 : index
      %147 = vector.load %arg16[%c0_64, %c0_65, %c0_66] : memref<4x8x8xbf16, #tpu.memory_space<vmem>>, vector<4x8x8xbf16>
      tpu.vector_store %arg16[%c0_64, %c0_65, %c0_66], %146 {strides = array<i32>} : memref<4x8x8xbf16, #tpu.memory_space<vmem>>, vector<4x8x8xbf16>,
    } else {
    }
    %c0_4 = arith.constant 0 : index
    %c0_5 = arith.constant 0 : index
    %c0_6 = arith.constant 0 : index
    %7 = vector.load %arg2[%c0_4, %c0_5, %c0_6] : memref<1x8x32xf32, #tpu.memory_space<vmem>>, vector<1x8x32xf32>
    %8 = vector.shape_cast %7 : vector<1x8x32xf32> to vector<8x32xf32>
    %cst = arith.constant dense<0.000000e+00> : vector<8xf32>
    %9 = vector.multi_reduction <add>, %8, %cst [1] : vector<8x32xf32> to vector<8xf32>
    %10 = vector.shape_cast %9 : vector<8xf32> to vector<8x1xf32>
    %cst_7 = arith.constant 3.200000e+01 : f32
    %11 = vector.broadcast %cst_7 : f32 to vector<8x1xf32>
    %12 = arith.divf %10, %11 : vector<8x1xf32>
    %13 = vector.broadcast %12 : vector<8x1xf32> to vector<8x32xf32>
    %14 = arith.subf %8, %13 : vector<8x32xf32>
    %15 = arith.mulf %14, %14 : vector<8x32xf32>
    %cst_8 = arith.constant dense<0.000000e+00> : vector<8xf32>
    %16 = vector.multi_reduction <add>, %15, %cst_8 [1] : vector<8x32xf32> to vector<8xf32>
    %17 = vector.shape_cast %16 : vector<8xf32> to vector<8x1xf32>
    %cst_9 = arith.constant 3.200000e+01 : f32
    %18 = vector.broadcast %cst_9 : f32 to vector<8x1xf32>
    %19 = arith.divf %17, %18 : vector<8x1xf32>
    %cst_10 = arith.constant 9.99999974E-6 : f32
    %20 = vector.broadcast %cst_10 : f32 to vector<8x1xf32>
    %21 = arith.addf %19, %20 : vector<8x1xf32>
    %22 = math.rsqrt %21 : vector<8x1xf32>
    %23 = vector.broadcast %22 : vector<8x1xf32> to vector<8x32xf32>
    %24 = arith.mulf %14, %23 : vector<8x32xf32>
    %25 = vector.shape_cast %1 : vector<32xf32> to vector<1x32xf32>
    %26 = vector.broadcast %25 : vector<1x32xf32> to vector<8x32xf32>
    %27 = arith.mulf %24, %26 : vector<8x32xf32>
    %28 = vector.shape_cast %3 : vector<32xf32> to vector<1x32xf32>
    %29 = vector.broadcast %28 : vector<1x32xf32> to vector<8x32xf32>
    %30 = arith.addf %27, %29 : vector<8x32xf32>
    %31 = arith.truncf %30 : vector<8x32xf32> to vector<8x32xbf16>
    %c0_11 = arith.constant 0 : index
    %c0_12 = arith.constant 0 : index
    %32 = vector.load %arg8[%c0_11, %c0_12] : memref<32x32xbf16, #tpu.memory_space<vmem>>, vector<32x32xbf16>
    %cst_13 = arith.constant dense<0.000000e+00> : vector<8x32xf32>
    %33 = tpu.matmul %31, %32, %cst_13 {dimension_numbers = #tpu.dot_dimension_numbers<[1], [0], [0], [1], [0, 0, 1, 1], [], []>} : vector<8x32xbf16>, vector<32x32xbf16>, vector<8x32xf32> -> vector<8x32xf32>
    %c0_14 = arith.constant 0 : index
    %c0_15 = arith.constant 0 : index
    %34 = vector.load %arg9[%c0_14, %c0_15] : memref<1x32xf32, #tpu.memory_space<vmem>>, vector<1x32xf32>
    %35 = vector.shape_cast %34 : vector<1x32xf32> to vector<32xf32>
    %36 = vector.shape_cast %35 : vector<32xf32> to vector<1x32xf32>
    %37 = vector.broadcast %36 : vector<1x32xf32> to vector<8x32xf32>
    %38 = arith.addf %33, %37 : vector<8x32xf32>
    %cst_16 = arith.constant 0.353553385 : f32
    %39 = vector.broadcast %cst_16 : f32 to vector<8x32xf32>
    %40 = arith.mulf %38, %39 : vector<8x32xf32>
    %41 = vector.shape_cast %40 : vector<8x32xf32> to vector<1x8x4x8xf32>
    %42 = tpu.transpose %41, [0, 2, 1, 3] : vector<1x8x4x8xf32> -> vector<1x4x8x8xf32>
    %43 = vector.shape_cast %42 : vector<1x4x8x8xf32> to vector<4x8x8xf32>
    %44 = arith.truncf %43 : vector<4x8x8xf32> to vector<4x8x8xbf16>
    %c0_17 = arith.constant 0 : index
    %c0_18 = arith.constant 0 : index
    %c0_19 = arith.constant 0 : index
    %45 = vector.load %arg15[%c0_17, %c0_18, %c0_19] : memref<4x8x8xbf16, #tpu.memory_space<vmem>>, vector<4x8x8xbf16>
    %cst_20 = arith.constant dense<0.000000e+00> : vector<4x8x8xf32>
    %46 = tpu.matmul %44, %45, %cst_20 {dimension_numbers = #tpu.dot_dimension_numbers<[2], [2], [1], [1], [0, 0, 0, 1, 1, 1], [0], [0]>} : vector<4x8x8xbf16>, vector<4x8x8xbf16>, vector<4x8x8xf32> -> vector<4x8x8xf32>
    %47 = vector.shape_cast %46 : vector<4x8x8xf32> to vector<1x4x8x8xf32>
    %c0_21 = arith.constant 0 : index
    %c0_22 = arith.constant 0 : index
    %c0_23 = arith.constant 0 : index
    %c0_24 = arith.constant 0 : index
    %48 = vector.load %arg5[%c0_21, %c0_22, %c0_23, %c0_24] : memref<1x1x8x8xi8, #tpu.memory_space<vmem>>, vector<1x1x8x8xi8>
    %c0_i8 = arith.constant 0 : i8
    %49 = vector.broadcast %c0_i8 : i8 to vector<1x1x8x8xi8>
    %50 = arith.cmpi ne, %48, %49 : vector<1x1x8x8xi8>
    %cst_25 = arith.constant -1.000000e+30 : f32
    %51 = vector.shape_cast %50 : vector<1x1x8x8xi1> to vector<1x1x8x8xi1>
    %52 = vector.broadcast %51 : vector<1x1x8x8xi1> to vector<1x4x8x8xi1>
    %53 = vector.broadcast %cst_25 : f32 to vector<1x4x8x8xf32>
    %54 = arith.select %52, %53, %47 : vector<1x4x8x8xi1>, vector<1x4x8x8xf32>
    %cst_26 = arith.constant dense<0xFF800000> : vector<1x4x8xf32>
    %55 = vector.multi_reduction <maximumf>, %54, %cst_26 [3] : vector<1x4x8x8xf32> to vector<1x4x8xf32>
    %56 = vector.shape_cast %55 : vector<1x4x8xf32> to vector<1x4x8x1xf32>
    %57 = vector.broadcast %56 : vector<1x4x8x1xf32> to vector<1x4x8x8xf32>
    %58 = arith.subf %54, %57 : vector<1x4x8x8xf32>
    %59 = math.exp %58 : vector<1x4x8x8xf32>
    %cst_27 = arith.constant dense<0.000000e+00> : vector<1x4x8xf32>
    %60 = vector.multi_reduction <add>, %59, %cst_27 [3] : vector<1x4x8x8xf32> to vector<1x4x8xf32>
    %61 = vector.shape_cast %60 : vector<1x4x8xf32> to vector<1x4x8x1xf32>
    %62 = vector.shape_cast %59 : vector<1x4x8x8xf32> to vector<4x8x8xf32>
    %63 = arith.truncf %62 : vector<4x8x8xf32> to vector<4x8x8xbf16>
    %c0_28 = arith.constant 0 : index
    %c0_29 = arith.constant 0 : index
    %c0_30 = arith.constant 0 : index
    %64 = vector.load %arg16[%c0_28, %c0_29, %c0_30] : memref<4x8x8xbf16, #tpu.memory_space<vmem>>, vector<4x8x8xbf16>
    %cst_31 = arith.constant dense<0.000000e+00> : vector<4x8x8xf32>
    %65 = tpu.matmul %63, %64, %cst_31 {dimension_numbers = #tpu.dot_dimension_numbers<[2], [1], [1], [2], [0, 0, 0, 1, 1, 2], [0], [0]>} : vector<4x8x8xbf16>, vector<4x8x8xbf16>, vector<4x8x8xf32> -> vector<4x8x8xf32>
    %66 = vector.shape_cast %65 : vector<4x8x8xf32> to vector<1x4x8x8xf32>
    %67 = tpu.reciprocal %61 {approx = true} : vector<1x4x8x1xf32> -> vector<1x4x8x1xf32>
    %68 = vector.broadcast %67 : vector<1x4x8x1xf32> to vector<1x4x8x8xf32>
    %69 = arith.mulf %66, %68 : vector<1x4x8x8xf32>
    %70 = tpu.transpose %69, [0, 2, 1, 3] : vector<1x4x8x8xf32> -> vector<1x8x4x8xf32>
    %71 = vector.shape_cast %70 : vector<1x8x4x8xf32> to vector<1x8x32xf32>
    %72 = arith.addf %71, %7 : vector<1x8x32xf32>
    %c0_32 = arith.constant 0 : index
    %c0_33 = arith.constant 0 : index
    %c0_34 = arith.constant 0 : index
    %73 = vector.load %arg14[%c0_32, %c0_33, %c0_34] : memref<1x8x32xf32, #tpu.memory_space<vmem>>, vector<1x8x32xf32>
    tpu.vector_store %arg14[%c0_32, %c0_33, %c0_34], %72 {strides = array<i32>} : memref<1x8x32xf32, #tpu.memory_space<vmem>>, vector<1x8x32xf32>,
    return
  }
  func.func @transform_0(%arg0: i32, %arg1: i32) -> (i32, i32, i32) {
    %c0_i32 = arith.constant 0 : i32
    %c0_i32_0 = arith.constant 0 : i32
    return %arg0, %arg1, %c0_i32 : i32, i32, i32
  }
  func.func @transform_1(%arg0: i32, %arg1: i32) -> (i32, i32, i32) {
    %c0_i32 = arith.constant 0 : i32
    %c0_i32_0 = arith.constant 0 : i32
    %c0_i32_1 = arith.constant 0 : i32
    return %arg0, %c0_i32, %c0_i32_0 : i32, i32, i32
  }
  func.func @transform_2(%arg0: i32, %arg1: i32) -> (i32, i32, i32) {
    %c0_i32 = arith.constant 0 : i32
    %c0_i32_0 = arith.constant 0 : i32
    %c0_i32_1 = arith.constant 0 : i32
    return %arg0, %c0_i32, %c0_i32_0 : i32, i32, i32
  }
  func.func @transform_3(%arg0: i32, %arg1: i32) -> (i32, i32, i32, i32) {
    %c0_i32 = arith.constant 0 : i32
    %c0_i32_0 = arith.constant 0 : i32
    %c0_i32_1 = arith.constant 0 : i32
    return %arg0, %c0_i32, %arg1, %c0_i32_0 : i32, i32, i32, i32
  }
  func.func @transform_4(%arg0: i32, %arg1: i32) -> (i32, i32) {
    %c0_i32 = arith.constant 0 : i32
    %c0_i32_0 = arith.constant 0 : i32
    %c0_i32_1 = arith.constant 0 : i32
    return %c0_i32, %c0_i32_0 : i32, i32
  }
  func.func @transform_5(%arg0: i32, %arg1: i32) -> (i32, i32) {
    %c0_i32 = arith.constant 0 : i32
    %c0_i32_0 = arith.constant 0 : i32
    %c0_i32_1 = arith.constant 0 : i32
    return %c0_i32, %c0_i32_0 : i32, i32
  }
  func.func @transform_6(%arg0: i32, %arg1: i32) -> (i32, i32) {
    %c0_i32 = arith.constant 0 : i32
    %c0_i32_0 = arith.constant 0 : i32
    %c0_i32_1 = arith.constant 0 : i32
    return %c0_i32, %c0_i32_0 : i32, i32
  }
  func.func @transform_7(%arg0: i32, %arg1: i32) -> (i32, i32) {
    %c0_i32 = arith.constant 0 : i32
    %c0_i32_0 = arith.constant 0 : i32
    %c0_i32_1 = arith.constant 0 : i32
    return %c0_i32, %c0_i32_0 : i32, i32
  }
  func.func @transform_8(%arg0: i32, %arg1: i32) -> (i32, i32) {
    %c0_i32 = arith.constant 0 : i32
    %c0_i32_0 = arith.constant 0 : i32
    %c0_i32_1 = arith.constant 0 : i32
    return %c0_i32, %c0_i32_0 : i32, i32
  }
  func.func @transform_9(%arg0: i32, %arg1: i32) -> (i32, i32) {
    %c0_i32 = arith.constant 0 : i32
    %c0_i32_0 = arith.constant 0 : i32
    %c0_i32_1 = arith.constant 0 : i32
    return %c0_i32, %c0_i32_0 : i32, i32
  }
  func.func @transform_10(%arg0: i32, %arg1: i32) -> (i32, i32) {
    %c0_i32 = arith.constant 0 : i32
    %c0_i32_0 = arith.constant 0 : i32
    %c0_i32_1 = arith.constant 0 : i32
    return %c0_i32, %c0_i32_0 : i32, i32
  }
  func.func @transform_11(%arg0: i32, %arg1: i32) -> (i32, i32) {
    %c0_i32 = arith.constant 0 : i32
    %c0_i32_0 = arith.constant 0 : i32
    %c0_i32_1 = arith.constant 0 : i32
    return %c0_i32, %c0_i32_0 : i32, i32
  }
  func.func @transform_12(%arg0: i32, %arg1: i32) -> (i32, i32, i32) {
    %c0_i32 = arith.constant 0 : i32
    %c0_i32_0 = arith.constant 0 : i32
    return %arg0, %arg1, %c0_i32 : i32, i32, i32
  }
}

module attributes {stable_mosaic.version = 11 : i64} {
  func.func @_multiheads_kernel(%arg0: i32, %arg1: i32, %arg2: memref<1x8x32xf32, #tpu.memory_space<vmem>>, %arg3: memref<1x8x32xf32, #tpu.memory_space<vmem>>, %arg4: memref<1x8x32xf32, #tpu.memory_space<vmem>>, %arg5: memref<1x1x8x8xi8, #tpu.memory_space<vmem>>, %arg6: memref<1x32xf32, #tpu.memory_space<vmem>>, %arg7: memref<1x32xf32, #tpu.memory_space<vmem>>, %arg8: memref<32x32xbf16, #tpu.memory_space<vmem>>, %arg9: memref<1x32xf32, #tpu.memory_space<vmem>>, %arg10: memref<32x32xbf16, #tpu.memory_space<vmem>>, %arg11: memref<1x32xf32, #tpu.memory_space<vmem>>, %arg12: memref<32x32xbf16, #tpu.memory_space<vmem>>, %arg13: memref<1x32xf32, #tpu.memory_space<vmem>>, %arg14: memref<1x8x32xf32, #tpu.memory_space<vmem>>, %arg15: memref<4x8x8xbf16, #tpu.memory_space<vmem>>, %arg16: memref<4x8x8xbf16, #tpu.memory_space<vmem>>) attributes {dimension_semantics = [#tpu.dimension_semantics<parallel>, #tpu.dimension_semantics<arbitrary>], iteration_bounds = array<i64: 2, 1>, scalar_prefetch = 0 : i64, scratch_operands = 2 : i64, tpu.core_type = #tpu.core_type<tc>, window_params = [{transform_indices = @transform_0, window_bounds = array<i64: 1, 8, 32>}, {transform_indices = @transform_1, window_bounds = array<i64: 1, 8, 32>}, {transform_indices = @transform_2, window_bounds = array<i64: 1, 8, 32>}, {transform_indices = @transform_3, window_bounds = array<i64: 1, 1, 8, 8>}, {pipeline_mode = #tpu.pipeline_mode<synchronous>, transform_indices = @transform_4, window_bounds = array<i64: 1, 32>}, {pipeline_mode = #tpu.pipeline_mode<synchronous>, transform_indices = @transform_5, window_bounds = array<i64: 1, 32>}, {pipeline_mode = #tpu.pipeline_mode<synchronous>, transform_indices = @transform_6, window_bounds = array<i64: 32, 32>}, {pipeline_mode = #tpu.pipeline_mode<synchronous>, transform_indices = @transform_7, window_bounds = array<i64: 1, 32>}, {pipeline_mode = #tpu.pipeline_mode<synchronous>, transform_indices = @transform_8, window_bounds = array<i64: 32, 32>}, {pipeline_mode = #tpu.pipeline_mode<synchronous>, transform_indices = @transform_9, window_bounds = array<i64: 1, 32>}, {pipeline_mode = #tpu.pipeline_mode<synchronous>, transform_indices = @transform_10, window_bounds = array<i64: 32, 32>}, {pipeline_mode = #tpu.pipeline_mode<synchronous>, transform_indices = @transform_11, window_bounds = array<i64: 1, 32>}, {transform_indices = @transform_12, window_bounds = array<i64: 1, 8, 32>}]} {
    %c0 = arith.constant 0 : index
    %c0_0 = arith.constant 0 : index
    %0 = vector.load %arg6[%c0, %c0_0] : memref<1x32xf32, #tpu.memory_space<vmem>>, vector<1x32xf32>
    %1 = vector.shape_cast %0 : vector<1x32xf32> to vector<32xf32>
    %c0_1 = arith.constant 0 : index
    %c0_2 = arith.constant 0 : index
    %2 = vector.load %arg7[%c0_1, %c0_2] : memref<1x32xf32, #tpu.memory_space<vmem>>, vector<1x32xf32>
    %3 = vector.shape_cast %2 : vector<1x32xf32> to vector<32xf32>
    %c0_i32 = arith.constant 0 : i32
    %4 = arith.cmpi eq, %arg1, %c0_i32 : i32
    %5 = arith.extui %4 : i1 to i32
    %c0_i32_3 = arith.constant 0 : i32
    %6 = arith.cmpi ne, %5, %c0_i32_3 : i32
    scf.if %6 {
      %c0_35 = arith.constant 0 : index
      %c0_36 = arith.constant 0 : index
      %c0_37 = arith.constant 0 : index
      %74 = vector.load %arg3[%c0_35, %c0_36, %c0_37] : memref<1x8x32xf32, #tpu.memory_space<vmem>>, vector<1x8x32xf32>
      %75 = vector.shape_cast %74 : vector<1x8x32xf32> to vector<8x32xf32>
      %cst_38 = arith.constant dense<0.000000e+00> : vector<8xf32>
      %76 = vector.multi_reduction <add>, %75, %cst_38 [1] : vector<8x32xf32> to vector<8xf32>
      %77 = vector.shape_cast %76 : vector<8xf32> to vector<8x1xf32>
      %cst_39 = arith.constant 3.200000e+01 : f32
      %78 = vector.broadcast %cst_39 : f32 to vector<8x1xf32>
      %79 = arith.divf %77, %78 : vector<8x1xf32>
      %80 = vector.broadcast %79 : vector<8x1xf32> to vector<8x32xf32>
      %81 = arith.subf %75, %80 : vector<8x32xf32>
      %82 = arith.mulf %81, %81 : vector<8x32xf32>
      %cst_40 = arith.constant dense<0.000000e+00> : vector<8xf32>
      %83 = vector.multi_reduction <add>, %82, %cst_40 [1] : vector<8x32xf32> to vector<8xf32>
      %84 = vector.shape_cast %83 : vector<8xf32> to vector<8x1xf32>
      %cst_41 = arith.constant 3.200000e+01 : f32
      %85 = vector.broadcast %cst_41 : f32 to vector<8x1xf32>
      %86 = arith.divf %84, %85 : vector<8x1xf32>
      %cst_42 = arith.constant 9.99999974E-6 : f32
      %87 = vector.broadcast %cst_42 : f32 to vector<8x1xf32>
      %88 = arith.addf %86, %87 : vector<8x1xf32>
      %89 = math.rsqrt %88 : vector<8x1xf32>
      %90 = vector.broadcast %89 : vector<8x1xf32> to vector<8x32xf32>
      %91 = arith.mulf %81, %90 : vector<8x32xf32>
      %92 = vector.shape_cast %1 : vector<32xf32> to vector<1x32xf32>
      %93 = vector.broadcast %92 : vector<1x32xf32> to vector<8x32xf32>
      %94 = arith.mulf %91, %93 : vector<8x32xf32>
      %95 = vector.shape_cast %3 : vector<32xf32> to vector<1x32xf32>
      %96 = vector.broadcast %95 : vector<1x32xf32> to vector<8x32xf32>
      %97 = arith.addf %94, %96 : vector<8x32xf32>
      %98 = arith.truncf %97 : vector<8x32xf32> to vector<8x32xbf16>
      %c0_43 = arith.constant 0 : index
      %c0_44 = arith.constant 0 : index
      %c0_45 = arith.constant 0 : index
      %99 = vector.load %arg4[%c0_43, %c0_44, %c0_45] : memref<1x8x32xf32, #tpu.memory_space<vmem>>, vector<1x8x32xf32>
      %100 = vector.shape_cast %99 : vector<1x8x32xf32> to vector<8x32xf32>
      %cst_46 = arith.constant dense<0.000000e+00> : vector<8xf32>
      %101 = vector.multi_reduction <add>, %100, %cst_46 [1] : vector<8x32xf32> to vector<8xf32>
      %102 = vector.shape_cast %101 : vector<8xf32> to vector<8x1xf32>
      %cst_47 = arith.constant 3.200000e+01 : f32
      %103 = vector.broadcast %cst_47 : f32 to vector<8x1xf32>
      %104 = arith.divf %102, %103 : vector<8x1xf32>
      %105 = vector.broadcast %104 : vector<8x1xf32> to vector<8x32xf32>
      %106 = arith.subf %100, %105 : vector<8x32xf32>
      %107 = arith.mulf %106, %106 : vector<8x32xf32>
      %cst_48 = arith.constant dense<0.000000e+00> : vector<8xf32>
      %108 = vector.multi_reduction <add>, %107, %cst_48 [1] : vector<8x32xf32> to vector<8xf32>
      %109 = vector.shape_cast %108 : vector<8xf32> to vector<8x1xf32>
      %cst_49 = arith.constant 3.200000e+01 : f32
      %110 = vector.broadcast %cst_49 : f32 to vector<8x1xf32>
      %111 = arith.divf %109, %110 : vector<8x1xf32>
      %cst_50 = arith.constant 9.99999974E-6 : f32
      %112 = vector.broadcast %cst_50 : f32 to vector<8x1xf32>
      %113 = arith.addf %111, %112 : vector<8x1xf32>
      %114 = math.rsqrt %113 : vector<8x1xf32>
      %115 = vector.broadcast %114 : vector<8x1xf32> to vector<8x32xf32>
      %116 = arith.mulf %106, %115 : vector<8x32xf32>
      %117 = vector.shape_cast %1 : vector<32xf32> to vector<1x32xf32>
      %118 = vector.broadcast %117 : vector<1x32xf32> to vector<8x32xf32>
      %119 = arith.mulf %116, %118 : vector<8x32xf32>
      %120 = vector.shape_cast %3 : vector<32xf32> to vector<1x32xf32>
      %121 = vector.broadcast %120 : vector<1x32xf32> to vector<8x32xf32>
      %122 = arith.addf %119, %121 : vector<8x32xf32>
      %123 = arith.truncf %122 : vector<8x32xf32> to vector<8x32xbf16>
      %c0_51 = arith.constant 0 : index
      %c0_52 = arith.constant 0 : index
      %124 = vector.load %arg10[%c0_51, %c0_52] : memref<32x32xbf16, #tpu.memory_space<vmem>>, vector<32x32xbf16>
      %cst_53 = arith.constant dense<0.000000e+00> : vector<8x32xf32>
      %125 = tpu.matmul %98, %124, %cst_53 {dimension_numbers = #tpu.dot_dimension_numbers<[1], [0], [0], [1], [0, 0, 1, 1], [], []>} : vector<8x32xbf16>, vector<32x32xbf16>, vector<8x32xf32> -> vector<8x32xf32>
      %c0_54 = arith.constant 0 : index
      %c0_55 = arith.constant 0 : index
      %126 = vector.load %arg11[%c0_54, %c0_55] : memref<1x32xf32, #tpu.memory_space<vmem>>, vector<1x32xf32>
      %127 = vector.shape_cast %126 : vector<1x32xf32> to vector<32xf32>
      %128 = vector.shape_cast %127 : vector<32xf32> to vector<1x32xf32>
      %129 = vector.broadcast %128 : vector<1x32xf32> to vector<8x32xf32>
      %130 = arith.addf %125, %129 : vector<8x32xf32>
      %c0_56 = arith.constant 0 : index
      %c0_57 = arith.constant 0 : index
      %131 = vector.load %arg12[%c0_56, %c0_57] : memref<32x32xbf16, #tpu.memory_space<vmem>>, vector<32x32xbf16>
      %cst_58 = arith.constant dense<0.000000e+00> : vector<8x32xf32>
      %132 = tpu.matmul %123, %131, %cst_58 {dimension_numbers = #tpu.dot_dimension_numbers<[1], [0], [0], [1], [0, 0, 1, 1], [], []>} : vector<8x32xbf16>, vector<32x32xbf16>, vector<8x32xf32> -> vector<8x32xf32>
      %c0_59 = arith.constant 0 : index
      %c0_60 = arith.constant 0 : index
      %133 = vector.load %arg13[%c0_59, %c0_60] : memref<1x32xf32, #tpu.memory_space<vmem>>, vector<1x32xf32>
      %134 = vector.shape_cast %133 : vector<1x32xf32> to vector<32xf32>
      %135 = vector.shape_cast %134 : vector<32xf32> to vector<1x32xf32>
      %136 = vector.broadcast %135 : vector<1x32xf32> to vector<8x32xf32>
      %137 = arith.addf %132, %136 : vector<8x32xf32>
      %138 = vector.shape_cast %130 : vector<8x32xf32> to vector<1x8x4x8xf32>
      %139 = tpu.transpose %138, [0, 2, 1, 3] : vector<1x8x4x8xf32> -> vector<1x4x8x8xf32>
      %140 = vector.shape_cast %139 : vector<1x4x8x8xf32> to vector<4x8x8xf32>
      %141 = arith.truncf %140 : vector<4x8x8xf32> to vector<4x8x8xbf16>
      %c0_61 = arith.constant 0 : index
      %c0_62 = arith.constant 0 : index
      %c0_63 = arith.constant 0 : index
      %142 = vector.load %arg15[%c0_61, %c0_62, %c0_63] : memref<4x8x8xbf16, #tpu.memory_space<vmem>>, vector<4x8x8xbf16>
      tpu.vector_store %arg15[%c0_61, %c0_62, %c0_63], %141 {strides = array<i32>} : memref<4x8x8xbf16, #tpu.memory_space<vmem>>, vector<4x8x8xbf16>,
      %143 = vector.shape_cast %137 : vector<8x32xf32> to vector<1x8x4x8xf32>
      %144 = tpu.transpose %143, [0, 2, 1, 3] : vector<1x8x4x8xf32> -> vector<1x4x8x8xf32>
      %145 = vector.shape_cast %144 : vector<1x4x8x8xf32> to vector<4x8x8xf32>
      %146 = arith.truncf %145 : vector<4x8x8xf32> to vector<4x8x8xbf16>
      %c0_64 = arith.constant 0 : index
      %c0_65 = arith.constant 0 : index
      %c0_66 = arith.constant 0 : index
      %147 = vector.load %arg16[%c0_64, %c0_65, %c0_66] : memref<4x8x8xbf16, #tpu.memory_space<vmem>>, vector<4x8x8xbf16>
      tpu.vector_store %arg16[%c0_64, %c0_65, %c0_66], %146 {strides = array<i32>} : memref<4x8x8xbf16, #tpu.memory_space<vmem>>, vector<4x8x8xbf16>,
    } else {
    }
    %c0_4 = arith.constant 0 : index
    %c0_5 = arith.constant 0 : index
    %c0_6 = arith.constant 0 : index
    %7 = vector.load %arg2[%c0_4, %c0_5, %c0_6] : memref<1x8x32xf32, #tpu.memory_space<vmem>>, vector<1x8x32xf32>
    %8 = vector.shape_cast %7 : vector<1x8x32xf32> to vector<8x32xf32>
    %cst = arith.constant dense<0.000000e+00> : vector<8xf32>
    %9 = vector.multi_reduction <add>, %8, %cst [1] : vector<8x32xf32> to vector<8xf32>
    %10 = vector.shape_cast %9 : vector<8xf32> to vector<8x1xf32>
    %cst_7 = arith.constant 3.200000e+01 : f32
    %11 = vector.broadcast %cst_7 : f32 to vector<8x1xf32>
    %12 = arith.divf %10, %11 : vector<8x1xf32>
    %13 = vector.broadcast %12 : vector<8x1xf32> to vector<8x32xf32>
    %14 = arith.subf %8, %13 : vector<8x32xf32>
    %15 = arith.mulf %14, %14 : vector<8x32xf32>
    %cst_8 = arith.constant dense<0.000000e+00> : vector<8xf32>
    %16 = vector.multi_reduction <add>, %15, %cst_8 [1] : vector<8x32xf32> to vector<8xf32>
    %17 = vector.shape_cast %16 : vector<8xf32> to vector<8x1xf32>
    %cst_9 = arith.constant 3.200000e+01 : f32
    %18 = vector.broadcast %cst_9 : f32 to vector<8x1xf32>
    %19 = arith.divf %17, %18 : vector<8x1xf32>
    %cst_10 = arith.constant 9.99999974E-6 : f32
    %20 = vector.broadcast %cst_10 : f32 to vector<8x1xf32>
    %21 = arith.addf %19, %20 : vector<8x1xf32>
    %22 = math.rsqrt %21 : vector<8x1xf32>
    %23 = vector.broadcast %22 : vector<8x1xf32> to vector<8x32xf32>
    %24 = arith.mulf %14, %23 : vector<8x32xf32>
    %25 = vector.shape_cast %1 : vector<32xf32> to vector<1x32xf32>
    %26 = vector.broadcast %25 : vector<1x32xf32> to vector<8x32xf32>
    %27 = arith.mulf %24, %26 : vector<8x32xf32>
    %28 = vector.shape_cast %3 : vector<32xf32> to vector<1x32xf32>
    %29 = vector.broadcast %28 : vector<1x32xf32> to vector<8x32xf32>
    %30 = arith.addf %27, %29 : vector<8x32xf32>
    %31 = arith.truncf %30 : vector<8x32xf32> to vector<8x32xbf16>
    %c0_11 = arith.constant 0 : index
    %c0_12 = arith.constant 0 : index
    %32 = vector.load %arg8[%c0_11, %c0_12] : memref<32x32xbf16, #tpu.memory_space<vmem>>, vector<32x32xbf16>
    %cst_13 = arith.constant dense<0.000000e+00> : vector<8x32xf32>
    %33 = tpu.matmul %31, %32, %cst_13 {dimension_numbers = #tpu.dot_dimension_numbers<[1], [0], [0], [1], [0, 0, 1, 1], [], []>} : vector<8x32xbf16>, vector<32x32xbf16>, vector<8x32xf32> -> vector<8x32xf32>
    %c0_14 = arith.constant 0 : index
    %c0_15 = arith.constant 0 : index
    %34 = vector.load %arg9[%c0_14, %c0_15] : memref<1x32xf32, #tpu.memory_space<vmem>>, vector<1x32xf32>
    %35 = vector.shape_cast %34 : vector<1x32xf32> to vector<32xf32>
    %36 = vector.shape_cast %35 : vector<32xf32> to vector<1x32xf32>
    %37 = vector.broadcast %36 : vector<1x32xf32> to vector<8x32xf32>
    %38 = arith.addf %33, %37 : vector<8x32xf32>
    %cst_16 = arith.constant 0.353553385 : f32
    %39 = vector.broadcast %cst_16 : f32 to vector<8x32xf32>
    %40 = arith.mulf %38, %39 : vector<8x32xf32>
    %41 = vector.shape_cast %40 : vector<8x32xf32> to vector<1x8x4x8xf32>
    %42 = tpu.transpose %41, [0, 2, 1, 3] : vector<1x8x4x8xf32> -> vector<1x4x8x8xf32>
    %43 = vector.shape_cast %42 : vector<1x4x8x8xf32> to vector<4x8x8xf32>
    %44 = arith.truncf %43 : vector<4x8x8xf32> to vector<4x8x8xbf16>
    %c0_17 = arith.constant 0 : index
    %c0_18 = arith.constant 0 : index
    %c0_19 = arith.constant 0 : index
    %45 = vector.load %arg15[%c0_17, %c0_18, %c0_19] : memref<4x8x8xbf16, #tpu.memory_space<vmem>>, vector<4x8x8xbf16>
    %cst_20 = arith.constant dense<0.000000e+00> : vector<4x8x8xf32>
    %46 = tpu.matmul %44, %45, %cst_20 {dimension_numbers = #tpu.dot_dimension_numbers<[2], [2], [1], [1], [0, 0, 0, 1, 1, 1], [0], [0]>} : vector<4x8x8xbf16>, vector<4x8x8xbf16>, vector<4x8x8xf32> -> vector<4x8x8xf32>
    %47 = vector.shape_cast %46 : vector<4x8x8xf32> to vector<1x4x8x8xf32>
    %c0_21 = arith.constant 0 : index
    %c0_22 = arith.constant 0 : index
    %c0_23 = arith.constant 0 : index
    %c0_24 = arith.constant 0 : index
    %48 = vector.load %arg5[%c0_21, %c0_22, %c0_23, %c0_24] : memref<1x1x8x8xi8, #tpu.memory_space<vmem>>, vector<1x1x8x8xi8>
    %c0_i8 = arith.constant 0 : i8
    %49 = vector.broadcast %c0_i8 : i8 to vector<1x1x8x8xi8>
    %50 = arith.cmpi ne, %48, %49 : vector<1x1x8x8xi8>
    %cst_25 = arith.constant -1.000000e+30 : f32
    %51 = vector.shape_cast %50 : vector<1x1x8x8xi1> to vector<1x1x8x8xi1>
    %52 = vector.broadcast %51 : vector<1x1x8x8xi1> to vector<1x4x8x8xi1>
    %53 = vector.broadcast %cst_25 : f32 to vector<1x4x8x8xf32>
    %54 = arith.select %52, %53, %47 : vector<1x4x8x8xi1>, vector<1x4x8x8xf32>
    %cst_26 = arith.constant dense<0xFF800000> : vector<1x4x8xf32>
    %55 = vector.multi_reduction <maximumf>, %54, %cst_26 [3] : vector<1x4x8x8xf32> to vector<1x4x8xf32>
    %56 = vector.shape_cast %55 : vector<1x4x8xf32> to vector<1x4x8x1xf32>
    %57 = vector.broadcast %56 : vector<1x4x8x1xf32> to vector<1x4x8x8xf32>
    %58 = arith.subf %54, %57 : vector<1x4x8x8xf32>
    %59 = math.exp %58 : vector<1x4x8x8xf32>
    %cst_27 = arith.constant dense<0.000000e+00> : vector<1x4x8xf32>
    %60 = vector.multi_reduction <add>, %59, %cst_27 [3] : vector<1x4x8x8xf32> to vector<1x4x8xf32>
    %61 = vector.shape_cast %60 : vector<1x4x8xf32> to vector<1x4x8x1xf32>
    %62 = vector.shape_cast %59 : vector<1x4x8x8xf32> to vector<4x8x8xf32>
    %63 = arith.truncf %62 : vector<4x8x8xf32> to vector<4x8x8xbf16>
    %c0_28 = arith.constant 0 : index
    %c0_29 = arith.constant 0 : index
    %c0_30 = arith.constant 0 : index
    %64 = vector.load %arg16[%c0_28, %c0_29, %c0_30] : memref<4x8x8xbf16, #tpu.memory_space<vmem>>, vector<4x8x8xbf16>
    %cst_31 = arith.constant dense<0.000000e+00> : vector<4x8x8xf32>
    %65 = tpu.matmul %63, %64, %cst_31 {dimension_numbers = #tpu.dot_dimension_numbers<[2], [1], [1], [2], [0, 0, 0, 1, 1, 2], [0], [0]>} : vector<4x8x8xbf16>, vector<4x8x8xbf16>, vector<4x8x8xf32> -> vector<4x8x8xf32>
    %66 = vector.shape_cast %65 : vector<4x8x8xf32> to vector<1x4x8x8xf32>
    %67 = tpu.reciprocal %61 {approx = true} : vector<1x4x8x1xf32> -> vector<1x4x8x1xf32>
    %68 = vector.broadcast %67 : vector<1x4x8x1xf32> to vector<1x4x8x8xf32>
    %69 = arith.mulf %66, %68 : vector<1x4x8x8xf32>
    %70 = tpu.transpose %69, [0, 2, 1, 3] : vector<1x4x8x8xf32> -> vector<1x8x4x8xf32>
    %71 = vector.shape_cast %70 : vector<1x8x4x8xf32> to vector<1x8x32xf32>
    %72 = arith.addf %71, %7 : vector<1x8x32xf32>
    %c0_32 = arith.constant 0 : index
    %c0_33 = arith.constant 0 : index
    %c0_34 = arith.constant 0 : index
    %73 = vector.load %arg14[%c0_32, %c0_33, %c0_34] : memref<1x8x32xf32, #tpu.memory_space<vmem>>, vector<1x8x32xf32>
    tpu.vector_store %arg14[%c0_32, %c0_33, %c0_34], %72 {strides = array<i32>} : memref<1x8x32xf32, #tpu.memory_space<vmem>>, vector<1x8x32xf32>,
    return
  }
  func.func @transform_0(%arg0: i32, %arg1: i32) -> (i32, i32, i32) {
    %c0_i32 = arith.constant 0 : i32
    %c0_i32_0 = arith.constant 0 : i32
    return %arg0, %arg1, %c0_i32 : i32, i32, i32
  }
  func.func @transform_1(%arg0: i32, %arg1: i32) -> (i32, i32, i32) {
    %c0_i32 = arith.constant 0 : i32
    %c0_i32_0 = arith.constant 0 : i32
    %c0_i32_1 = arith.constant 0 : i32
    return %arg0, %c0_i32, %c0_i32_0 : i32, i32, i32
  }
  func.func @transform_2(%arg0: i32, %arg1: i32) -> (i32, i32, i32) {
    %c0_i32 = arith.constant 0 : i32
    %c0_i32_0 = arith.constant 0 : i32
    %c0_i32_1 = arith.constant 0 : i32
    return %arg0, %c0_i32, %c0_i32_0 : i32, i32, i32
  }
  func.func @transform_3(%arg0: i32, %arg1: i32) -> (i32, i32, i32, i32) {
    %c0_i32 = arith.constant 0 : i32
    %c0_i32_0 = arith.constant 0 : i32
    %c0_i32_1 = arith.constant 0 : i32
    return %arg0, %c0_i32, %arg1, %c0_i32_0 : i32, i32, i32, i32
  }
  func.func @transform_4(%arg0: i32, %arg1: i32) -> (i32, i32) {
    %c0_i32 = arith.constant 0 : i32
    %c0_i32_0 = arith.constant 0 : i32
    %c0_i32_1 = arith.constant 0 : i32
    return %c0_i32, %c0_i32_0 : i32, i32
  }
  func.func @transform_5(%arg0: i32, %arg1: i32) -> (i32, i32) {
    %c0_i32 = arith.constant 0 : i32
    %c0_i32_0 = arith.constant 0 : i32
    %c0_i32_1 = arith.constant 0 : i32
    return %c0_i32, %c0_i32_0 : i32, i32
  }
  func.func @transform_6(%arg0: i32, %arg1: i32) -> (i32, i32) {
    %c0_i32 = arith.constant 0 : i32
    %c0_i32_0 = arith.constant 0 : i32
    %c0_i32_1 = arith.constant 0 : i32
    return %c0_i32, %c0_i32_0 : i32, i32
  }
  func.func @transform_7(%arg0: i32, %arg1: i32) -> (i32, i32) {
    %c0_i32 = arith.constant 0 : i32
    %c0_i32_0 = arith.constant 0 : i32
    %c0_i32_1 = arith.constant 0 : i32
    return %c0_i32, %c0_i32_0 : i32, i32
  }
  func.func @transform_8(%arg0: i32, %arg1: i32) -> (i32, i32) {
    %c0_i32 = arith.constant 0 : i32
    %c0_i32_0 = arith.constant 0 : i32
    %c0_i32_1 = arith.constant 0 : i32
    return %c0_i32, %c0_i32_0 : i32, i32
  }
  func.func @transform_9(%arg0: i32, %arg1: i32) -> (i32, i32) {
    %c0_i32 = arith.constant 0 : i32
    %c0_i32_0 = arith.constant 0 : i32
    %c0_i32_1 = arith.constant 0 : i32
    return %c0_i32, %c0_i32_0 : i32, i32
  }
  func.func @transform_10(%arg0: i32, %arg1: i32) -> (i32, i32) {
    %c0_i32 = arith.constant 0 : i32
    %c0_i32_0 = arith.constant 0 : i32
    %c0_i32_1 = arith.constant 0 : i32
    return %c0_i32, %c0_i32_0 : i32, i32
  }
  func.func @transform_11(%arg0: i32, %arg1: i32) -> (i32, i32) {
    %c0_i32 = arith.constant 0 : i32
    %c0_i32_0 = arith.constant 0 : i32
    %c0_i32_1 = arith.constant 0 : i32
    return %c0_i32, %c0_i32_0 : i32, i32
  }
  func.func @transform_12(%arg0: i32, %arg1: i32) -> (i32, i32, i32) {
    %c0_i32 = arith.constant 0 : i32
    %c0_i32_0 = arith.constant 0 : i32
    return %arg0, %arg1, %c0_i32 : i32, i32, i32
  }
}

</mosaic_0001>

<llo_original>
// kernel: tpu_custom_call.1
$region0: #{tpu_custom_call.1}
  #allocation0 [shape = 'u32[]', space=smem, size = 0x4, offset = 0x4, fixed_abs, tag = 'smem constant byte address 0x4 - core index']
  #allocation1 [shape = 'u32[144,128]{1,0:T(1,128)}', space=vmem, size = 0x12000, scoped, tag = 'internal scratch']
  #allocation2 [shape = 'bf16[4,8,8]{2,1,0:T(8,128)(2,1)}', space=vmem, size = 0x2000, scoped, tag = 'scratch operand']
  #allocation3 [shape = 'bf16[4,8,8]{2,1,0:T(8,128)(2,1)}', space=vmem, size = 0x2000, scoped, tag = 'scratch operand']
  %s0 = inlined_call_operand.hbm [shape: f32[2,8,32], index: 0, kind: input, shape index: {}]
  %s1 = inlined_call_operand.hbm [shape: f32[2,8,32], index: 1, kind: input, shape index: {}]
  %s2 = inlined_call_operand.hbm [shape: f32[2,8,32], index: 2, kind: input, shape index: {}]
  %s3 = inlined_call_operand.hbm [shape: s8[2,1,8,8], index: 3, kind: input, shape index: {}]
  %s4 = inlined_call_operand.vmem [shape: f32[1,32], index: 4, kind: input, shape index: {}]
  %s5 = inlined_call_operand.vmem [shape: f32[1,32], index: 5, kind: input, shape index: {}]
  %s6 = inlined_call_operand.vmem [shape: bf16[32,32], index: 6, kind: input, shape index: {}]
  %s7 = inlined_call_operand.hbm [shape: f32[1,32], index: 7, kind: input, shape index: {}]
  %s8 = inlined_call_operand.hbm [shape: bf16[32,32], index: 8, kind: input, shape index: {}]
  %s9 = inlined_call_operand.hbm [shape: f32[1,32], index: 9, kind: input, shape index: {}]
  %s10 = inlined_call_operand.vmem [shape: bf16[32,32], index: 10, kind: input, shape index: {}]
  %s11 = inlined_call_operand.vmem [shape: f32[1,32], index: 11, kind: input, shape index: {}]
  %s12 = inlined_call_operand.hbm [shape: f32[2,8,32], index: 12, kind: output, shape index: {}]
  %s13 = sld [smem:[#allocation0]]
  $region113: #{tpu_custom_call.1} parent=0
    _
  %s15 = ssub.s32 1, %s13
  %s16 = scalar_select 0, %s15, %s13
  $region1: #{tpu_custom_call.1} parent=0
    #allocation4 [shape = 'u8[8192]{0}', space=vmem, size = 0x2000, scoped, tag = 'input window, operand 0']
    #allocation5 [shape = 's32[2]{0}', space=sflag, size = 0x8, scoped, tag = 'scoped memory for tpu_custom_call.1']
    #allocation6 [shape = 's32[2]{0}', space=sflag, size = 0x8, scoped, tag = 'scoped memory for tpu_custom_call.1']
    #allocation7 [shape = 'u8[8192]{0}', space=vmem, size = 0x2000, scoped, tag = 'input window, operand 1']
    #allocation8 [shape = 's32[2]{0}', space=sflag, size = 0x8, scoped, tag = 'scoped memory for tpu_custom_call.1']
    #allocation9 [shape = 'u8[8192]{0}', space=vmem, size = 0x2000, scoped, tag = 'input window, operand 2']
    #allocation10 [shape = 'u8[2048]{0}', space=vmem, size = 0x800, scoped, tag = 'input window, operand 3']
    #allocation11 [shape = 's32[2]{0}', space=sflag, size = 0x8, scoped, tag = 'scoped memory for tpu_custom_call.1']
    #allocation12 [shape = 'u8[512]{0}', space=vmem, size = 0x400, scoped, tag = 'input window, operand 7, single buffered']
    #allocation13 [shape = 'u8[8192]{0}', space=vmem, size = 0x2000, scoped, tag = 'input window, operand 8, single buffered']
    #allocation14 [shape = 's32[1]{0}', space=sflag, size = 0x4, scoped, tag = 'scoped memory for tpu_custom_call.1']
    #allocation15 [shape = 'u8[512]{0}', space=vmem, size = 0x400, scoped, tag = 'input window, operand 9, single buffered']
    #allocation16 [shape = 'u8[8192]{0}', space=vmem, size = 0x2000, scoped, tag = 'output window, operand 0']
    %17 = vsyncpa [#allocation5], 0
    %s18 = scalar_lea.sflag [#allocation5], 1
    %19 = vsyncpa %s18, 0
    %20 = vsyncpa [#allocation8], 0
    %s21 = scalar_lea.sflag [#allocation8], 1
    %22 = vsyncpa %s21, 0
    %23 = vsyncpa [#allocation11], 0
    %s24 = scalar_lea.sflag [#allocation11], 1
    %25 = vsyncpa %s24, 0
    %26 = vsyncpa [#allocation14], 0
    %27 = vsyncpa [#allocation6], 0
    %s28 = scalar_lea.sflag [#allocation6], 1
    %29 = vsyncpa %s28, 0
    loop: start=0, step=1, limit=4
    $region2: #{tpu_custom_call.1} parent=1 // loop_pre_header
      _
    $region3: #{tpu_custom_call.1} parent=1 // loop_header
      %s31 = sphi 0, %s35
      %p32 = scmp.ge.s32.totalorder %s31, 4
      %s38 = sphi 0, %s50
      %s39 = sphi 0, %s46
      %s40 = sphi 0, %s38
      %s41 = sphi 0, %s39
      %s42 = sphi 0, %s40
      %s43 = sphi 0, %s41
      %s55 = sphi 0, %s57
      %s58 = sphi 0, %s55
      %s59 = sphi 0, %s58
      %s75 = sphi 0, %s59
      %s81 = sphi 0, %s83
      %s84 = sphi 0, %s81
      %s85 = sphi 0, %s84
      %s101 = sphi 0, %s85
      %s107 = sphi 0, %s109
      %s110 = sphi 0, %s107
      %s111 = sphi 0, %s110
      %s127 = sphi 0, %s111
      %s135 = sphi 0, %s137
      %s138 = sphi 0, %s135
      %s139 = sphi 0, %s138
      %s155 = sphi 0, %s139
      %s159 = sphi 0, %s159
      %s161 = sphi 0, %s159
      %s162 = sphi 0, %s161
      %s176 = sphi 0, %s162
      %s180 = sphi 0, %s180
      %s182 = sphi 0, %s180
      %s183 = sphi 0, %s182
      %s197 = sphi 0, %s183
      %s201 = sphi 0, %s201
      %s203 = sphi 0, %s201
      %s204 = sphi 0, %s203
      %s218 = sphi 0, %s204
      %s222 = sphi 0, %s222
      %s224 = sphi 0, %s222
      %s225 = sphi 0, %s224
      %s239 = sphi 0, %s225
      %s243 = sphi 0, %s243
      %s245 = sphi 0, %s243
      %s246 = sphi 0, %s245
      %s260 = sphi 0, %s246
      %s264 = sphi 0, %s264
      %s266 = sphi 0, %s264
      %s267 = sphi 0, %s266
      %s281 = sphi 0, %s267
      %s285 = sphi 0, %s285
      %s287 = sphi 0, %s285
      %s288 = sphi 0, %s287
      %s302 = sphi 0, %s288
      %s306 = sphi 0, %s306
      %s308 = sphi 0, %s306
      %s309 = sphi 0, %s308
      %s323 = sphi 0, %s309
      %s331 = sphi 0, %s333
      %s334 = sphi 0, %s331
      %s335 = sphi 0, %s334
      %s351 = sphi 0, %s335
    $region4: #{tpu_custom_call.1} parent=1 // loop_header_branch
      %34 = sbr.rel (%p32) target = $region8
    $region5: #{tpu_custom_call.1} parent=1 // loop_body
      %s36 = ssub.s32 %s31, 1
      %s37 = ssub.s32 %s31, 2
      %s44 = sadd.s32 1, %s39
      %p45 = scmp.ge.s32.totalorder %s44, 1
      %s46 = scalar_select %p45, 0, %s44
      %s47 = sadd.s32 1, %s38
      %s48 = scalar_select %p45, %s47, %s38
      %p49 = scmp.ge.s32.totalorder %s48, 2
      %s50 = scalar_select %p49, 0, %s48
      %s51 = ssub.s32 %s38, %s50
      %s52 = ssub.s32 %s39, %s46
      %s53 = sor.u32 %s51, %s52
      %p54 = scmp.eq.s32.totalorder %s53, 0
      %s56 = sadd.s32 %s55, 1
      %s57 = scalar_select %p54, %s55, %s56
      %p60 = pneg %p54
      %p61 = scmp.eq.s32.totalorder %s31, 1
      %p62 = por %p60, %p61
      %p63 = scmp.ne.s32.totalorder %s55, %s58
      %p64 = scmp.eq.s32.totalorder %s31, 0
      %p65 = por %p63, %p64
      %p66 = scmp.ne.s32.totalorder %s55, %s58
      %p67 = scmp.eq.s32.totalorder %s36, 1
      %p68 = por %p66, %p67
      %p69 = scmp.ne.s32.totalorder %s58, %s59
      %p70 = scmp.eq.s32.totalorder %s36, 0
      %p71 = por %p69, %p70
      %p72 = scmp.ne.s32.totalorder %s58, %s59
      %p73 = scmp.eq.s32.totalorder %s37, 1
      %p74 = por %p72, %p73
      %p76 = scmp.ne.s32.totalorder %s59, %s75
      %p77 = scmp.eq.s32.totalorder %s37, 0
      %p78 = por %p76, %p77
      %s79 = ssub.s32 %s38, %s50
      %p80 = scmp.eq.s32.totalorder %s79, 0
      %s82 = sadd.s32 %s81, 1
      %s83 = scalar_select %p80, %s81, %s82
      %p86 = pneg %p80
      %p87 = scmp.eq.s32.totalorder %s31, 1
      %p88 = por %p86, %p87
      %p89 = scmp.ne.s32.totalorder %s81, %s84
      %p90 = scmp.eq.s32.totalorder %s31, 0
      %p91 = por %p89, %p90
      %p92 = scmp.ne.s32.totalorder %s81, %s84
      %p93 = scmp.eq.s32.totalorder %s36, 1
      %p94 = por %p92, %p93
      %p95 = scmp.ne.s32.totalorder %s84, %s85
      %p96 = scmp.eq.s32.totalorder %s36, 0
      %p97 = por %p95, %p96
      %p98 = scmp.ne.s32.totalorder %s84, %s85
      %p99 = scmp.eq.s32.totalorder %s37, 1
      %p100 = por %p98, %p99
      %p102 = scmp.ne.s32.totalorder %s85, %s101
      %p103 = scmp.eq.s32.totalorder %s37, 0
      %p104 = por %p102, %p103
      %s105 = ssub.s32 %s38, %s50
      %p106 = scmp.eq.s32.totalorder %s105, 0
      %s108 = sadd.s32 %s107, 1
      %s109 = scalar_select %p106, %s107, %s108
      %p112 = pneg %p106
      %p113 = scmp.eq.s32.totalorder %s31, 1
      %p114 = por %p112, %p113
      %p115 = scmp.ne.s32.totalorder %s107, %s110
      %p116 = scmp.eq.s32.totalorder %s31, 0
      %p117 = por %p115, %p116
      %p118 = scmp.ne.s32.totalorder %s107, %s110
      %p119 = scmp.eq.s32.totalorder %s36, 1
      %p120 = por %p118, %p119
      %p121 = scmp.ne.s32.totalorder %s110, %s111
      %p122 = scmp.eq.s32.totalorder %s36, 0
      %p123 = por %p121, %p122
      %p124 = scmp.ne.s32.totalorder %s110, %s111
      %p125 = scmp.eq.s32.totalorder %s37, 1
      %p126 = por %p124, %p125
      %p128 = scmp.ne.s32.totalorder %s111, %s127
      %p129 = scmp.eq.s32.totalorder %s37, 0
      %p130 = por %p128, %p129
      %s131 = ssub.s32 %s38, %s50
      %s132 = ssub.s32 %s39, %s46
      %s133 = sor.u32 %s131, %s132
      %p134 = scmp.eq.s32.totalorder %s133, 0
      %s136 = sadd.s32 %s135, 1
      %s137 = scalar_select %p134, %s135, %s136
      %p140 = pneg %p134
      %p141 = scmp.eq.s32.totalorder %s31, 1
      %p142 = por %p140, %p141
      %p143 = scmp.ne.s32.totalorder %s135, %s138
      %p144 = scmp.eq.s32.totalorder %s31, 0
      %p145 = por %p143, %p144
      %p146 = scmp.ne.s32.totalorder %s135, %s138
      %p147 = scmp.eq.s32.totalorder %s36, 1
      %p148 = por %p146, %p147
      %p149 = scmp.ne.s32.totalorder %s138, %s139
      %p150 = scmp.eq.s32.totalorder %s36, 0
      %p151 = por %p149, %p150
      %p152 = scmp.ne.s32.totalorder %s138, %s139
      %p153 = scmp.eq.s32.totalorder %s37, 1
      %p154 = por %p152, %p153
      %p156 = scmp.ne.s32.totalorder %s139, %s155
      %p157 = scmp.eq.s32.totalorder %s37, 0
      %p158 = por %p156, %p157
      %s160 = sadd.s32 %s159, 1
      %p163 = scmp.eq.s32.totalorder %s31, 1
      %p164 = scmp.ne.s32.totalorder %s159, %s161
      %p165 = scmp.eq.s32.totalorder %s31, 0
      %p166 = por %p164, %p165
      %p167 = scmp.ne.s32.totalorder %s159, %s161
      %p168 = scmp.eq.s32.totalorder %s36, 1
      %p169 = por %p167, %p168
      %p170 = scmp.ne.s32.totalorder %s161, %s162
      %p171 = scmp.eq.s32.totalorder %s36, 0
      %p172 = por %p170, %p171
      %p173 = scmp.ne.s32.totalorder %s161, %s162
      %p174 = scmp.eq.s32.totalorder %s37, 1
      %p175 = por %p173, %p174
      %p177 = scmp.ne.s32.totalorder %s162, %s176
      %p178 = scmp.eq.s32.totalorder %s37, 0
      %p179 = por %p177, %p178
      %s181 = sadd.s32 %s180, 1
      %p184 = scmp.eq.s32.totalorder %s31, 1
      %p185 = scmp.ne.s32.totalorder %s180, %s182
      %p186 = scmp.eq.s32.totalorder %s31, 0
      %p187 = por %p185, %p186
      %p188 = scmp.ne.s32.totalorder %s180, %s182
      %p189 = scmp.eq.s32.totalorder %s36, 1
      %p190 = por %p188, %p189
      %p191 = scmp.ne.s32.totalorder %s182, %s183
      %p192 = scmp.eq.s32.totalorder %s36, 0
      %p193 = por %p191, %p192
      %p194 = scmp.ne.s32.totalorder %s182, %s183
      %p195 = scmp.eq.s32.totalorder %s37, 1
      %p196 = por %p194, %p195
      %p198 = scmp.ne.s32.totalorder %s183, %s197
      %p199 = scmp.eq.s32.totalorder %s37, 0
      %p200 = por %p198, %p199
      %s202 = sadd.s32 %s201, 1
      %p205 = scmp.eq.s32.totalorder %s31, 1
      %p206 = scmp.ne.s32.totalorder %s201, %s203
      %p207 = scmp.eq.s32.totalorder %s31, 0
      %p208 = por %p206, %p207
      %p209 = scmp.ne.s32.totalorder %s201, %s203
      %p210 = scmp.eq.s32.totalorder %s36, 1
      %p211 = por %p209, %p210
      %p212 = scmp.ne.s32.totalorder %s203, %s204
      %p213 = scmp.eq.s32.totalorder %s36, 0
      %p214 = por %p212, %p213
      %p215 = scmp.ne.s32.totalorder %s203, %s204
      %p216 = scmp.eq.s32.totalorder %s37, 1
      %p217 = por %p215, %p216
      %p219 = scmp.ne.s32.totalorder %s204, %s218
      %p220 = scmp.eq.s32.totalorder %s37, 0
      %p221 = por %p219, %p220
      %s223 = sadd.s32 %s222, 1
      %p226 = scmp.eq.s32.totalorder %s31, 1
      %p227 = scmp.ne.s32.totalorder %s222, %s224
      %p228 = scmp.eq.s32.totalorder %s31, 0
      %p229 = por %p227, %p228
      %p230 = scmp.ne.s32.totalorder %s222, %s224
      %p231 = scmp.eq.s32.totalorder %s36, 1
      %p232 = por %p230, %p231
      %p233 = scmp.ne.s32.totalorder %s224, %s225
      %p234 = scmp.eq.s32.totalorder %s36, 0
      %p235 = por %p233, %p234
      %p236 = scmp.ne.s32.totalorder %s224, %s225
      %p237 = scmp.eq.s32.totalorder %s37, 1
      %p238 = por %p236, %p237
      %p240 = scmp.ne.s32.totalorder %s225, %s239
      %p241 = scmp.eq.s32.totalorder %s37, 0
      %p242 = por %p240, %p241
      %s244 = sadd.s32 %s243, 1
      %p247 = scmp.eq.s32.totalorder %s31, 1
      %p248 = scmp.ne.s32.totalorder %s243, %s245
      %p249 = scmp.eq.s32.totalorder %s31, 0
      %p250 = por %p248, %p249
      %p251 = scmp.ne.s32.totalorder %s243, %s245
      %p252 = scmp.eq.s32.totalorder %s36, 1
      %p253 = por %p251, %p252
      %p254 = scmp.ne.s32.totalorder %s245, %s246
      %p255 = scmp.eq.s32.totalorder %s36, 0
      %p256 = por %p254, %p255
      %p257 = scmp.ne.s32.totalorder %s245, %s246
      %p258 = scmp.eq.s32.totalorder %s37, 1
      %p259 = por %p257, %p258
      %p261 = scmp.ne.s32.totalorder %s246, %s260
      %p262 = scmp.eq.s32.totalorder %s37, 0
      %p263 = por %p261, %p262
      %s265 = sadd.s32 %s264, 1
      %p268 = scmp.eq.s32.totalorder %s31, 1
      %p269 = scmp.ne.s32.totalorder %s264, %s266
      %p270 = scmp.eq.s32.totalorder %s31, 0
      %p271 = por %p269, %p270
      %p272 = scmp.ne.s32.totalorder %s264, %s266
      %p273 = scmp.eq.s32.totalorder %s36, 1
      %p274 = por %p272, %p273
      %p275 = scmp.ne.s32.totalorder %s266, %s267
      %p276 = scmp.eq.s32.totalorder %s36, 0
      %p277 = por %p275, %p276
      %p278 = scmp.ne.s32.totalorder %s266, %s267
      %p279 = scmp.eq.s32.totalorder %s37, 1
      %p280 = por %p278, %p279
      %p282 = scmp.ne.s32.totalorder %s267, %s281
      %p283 = scmp.eq.s32.totalorder %s37, 0
      %p284 = por %p282, %p283
      %s286 = sadd.s32 %s285, 1
      %p289 = scmp.eq.s32.totalorder %s31, 1
      %p290 = scmp.ne.s32.totalorder %s285, %s287
      %p291 = scmp.eq.s32.totalorder %s31, 0
      %p292 = por %p290, %p291
      %p293 = scmp.ne.s32.totalorder %s285, %s287
      %p294 = scmp.eq.s32.totalorder %s36, 1
      %p295 = por %p293, %p294
      %p296 = scmp.ne.s32.totalorder %s287, %s288
      %p297 = scmp.eq.s32.totalorder %s36, 0
      %p298 = por %p296, %p297
      %p299 = scmp.ne.s32.totalorder %s287, %s288
      %p300 = scmp.eq.s32.totalorder %s37, 1
      %p301 = por %p299, %p300
      %p303 = scmp.ne.s32.totalorder %s288, %s302
      %p304 = scmp.eq.s32.totalorder %s37, 0
      %p305 = por %p303, %p304
      %s307 = sadd.s32 %s306, 1
      %p310 = scmp.eq.s32.totalorder %s31, 1
      %p311 = scmp.ne.s32.totalorder %s306, %s308
      %p312 = scmp.eq.s32.totalorder %s31, 0
      %p313 = por %p311, %p312
      %p314 = scmp.ne.s32.totalorder %s306, %s308
      %p315 = scmp.eq.s32.totalorder %s36, 1
      %p316 = por %p314, %p315
      %p317 = scmp.ne.s32.totalorder %s308, %s309
      %p318 = scmp.eq.s32.totalorder %s36, 0
      %p319 = por %p317, %p318
      %p320 = scmp.ne.s32.totalorder %s308, %s309
      %p321 = scmp.eq.s32.totalorder %s37, 1
      %p322 = por %p320, %p321
      %p324 = scmp.ne.s32.totalorder %s309, %s323
      %p325 = scmp.eq.s32.totalorder %s37, 0
      %p326 = por %p324, %p325
      %s327 = ssub.s32 %s38, %s50
      %s328 = ssub.s32 %s39, %s46
      %s329 = sor.u32 %s327, %s328
      %p330 = scmp.eq.s32.totalorder %s329, 0
      %s332 = sadd.s32 %s331, 1
      %s333 = scalar_select %p330, %s331, %s332
      %p336 = pneg %p330
      %p337 = scmp.eq.s32.totalorder %s31, 1
      %p338 = por %p336, %p337
      %p339 = scmp.ne.s32.totalorder %s331, %s334
      %p340 = scmp.eq.s32.totalorder %s31, 0
      %p341 = por %p339, %p340
      %p342 = scmp.ne.s32.totalorder %s331, %s334
      %p343 = scmp.eq.s32.totalorder %s36, 1
      %p344 = por %p342, %p343
      %p345 = scmp.ne.s32.totalorder %s334, %s335
      %p346 = scmp.eq.s32.totalorder %s36, 0
      %p347 = por %p345, %p346
      %p348 = scmp.ne.s32.totalorder %s334, %s335
      %p349 = scmp.eq.s32.totalorder %s37, 1
      %p350 = por %p348, %p349
      %p352 = scmp.ne.s32.totalorder %s335, %s351
      %p353 = scmp.eq.s32.totalorder %s37, 0
      %p354 = por %p352, %p353
      %p355 = scmp.le.s32.totalorder 1, %s31
      %p356 = scmp.lt.s32.totalorder %s31, 3
      %p357 = pnand %p355, %p356
      %p358 = pneg %p357
      // Predicated region
      $region9: #{tpu_custom_call.1} parent=5 // pred_check
        _
      $region10: #{tpu_custom_call.1} parent=5 // pred_check_branch
        %360 = sbr.rel (%p357) target = $region12
      $region11: #{tpu_custom_call.1} parent=5 // pred_region
        %s361 = ssub.s32 %s31, 1
        // Predicated region
        $region13: #{tpu_custom_call.1} parent=11 // pred_check
          %p362 = pneg %p172
        $region14: #{tpu_custom_call.1} parent=11 // pred_check_branch
          %364 = sbr.rel (%p362) target = $region16
        $region15: #{tpu_custom_call.1} parent=11 // pred_region
          _
        $region16: #{tpu_custom_call.1} parent=11 // pred_fallthru
          _
        // Predicated region
        $region17: #{tpu_custom_call.1} parent=11 // pred_check
          %p365 = pneg %p193
        $region18: #{tpu_custom_call.1} parent=11 // pred_check_branch
          %367 = sbr.rel (%p365) target = $region20
        $region19: #{tpu_custom_call.1} parent=11 // pred_region
          _
        $region20: #{tpu_custom_call.1} parent=11 // pred_fallthru
          _
        // Predicated region
        $region21: #{tpu_custom_call.1} parent=11 // pred_check
          %p368 = pneg %p214
        $region22: #{tpu_custom_call.1} parent=11 // pred_check_branch
          %370 = sbr.rel (%p368) target = $region24
        $region23: #{tpu_custom_call.1} parent=11 // pred_region
          _
        $region24: #{tpu_custom_call.1} parent=11 // pred_fallthru
          _
        // Predicated region
        $region25: #{tpu_custom_call.1} parent=11 // pred_check
          %p371 = pneg %p235
        $region26: #{tpu_custom_call.1} parent=11 // pred_check_branch
          %373 = sbr.rel (%p371) target = $region28
        $region27: #{tpu_custom_call.1} parent=11 // pred_region
          %s375 = ssub.s32 16, 16
          %376 = vsyncadd [#allocation11], %s375
          %s378 = sshll.u32 [#allocation12], 4
          %s379 = int_to_ptr.vmem [resolvable:$true] %s378
          %381 = dma.hbm_to_vmem [thread:$0]  %s7, 16, %s379, [#allocation11]
        $region28: #{tpu_custom_call.1} parent=11 // pred_fallthru
          _
        // Predicated region
        $region29: #{tpu_custom_call.1} parent=11 // pred_check
          %p382 = pneg %p256
        $region30: #{tpu_custom_call.1} parent=11 // pred_check_branch
          %384 = sbr.rel (%p382) target = $region32
        $region31: #{tpu_custom_call.1} parent=11 // pred_region
          %s386 = ssub.s32 256, 256
          %387 = vsyncadd [#allocation14], %s386
          %s388 = sshll.u32 [#allocation13], 4
          %s389 = int_to_ptr.vmem [resolvable:$true] %s388
          %394 = dma.hbm_to_vmem [thread:$0]  %s8, 256, %s389, [#allocation14], 64, 64, 4
        $region32: #{tpu_custom_call.1} parent=11 // pred_fallthru
          _
        // Predicated region
        $region33: #{tpu_custom_call.1} parent=11 // pred_check
          %p395 = pneg %p277
        $region34: #{tpu_custom_call.1} parent=11 // pred_check_branch
          %397 = sbr.rel (%p395) target = $region36
        $region35: #{tpu_custom_call.1} parent=11 // pred_region
          %s399 = ssub.s32 16, 16
          %400 = vsyncadd [#allocation14], %s399
          %s402 = sshll.u32 [#allocation15], 4
          %s403 = int_to_ptr.vmem [resolvable:$true] %s402
          %405 = dma.hbm_to_vmem [thread:$0]  %s9, 16, %s403, [#allocation14]
        $region36: #{tpu_custom_call.1} parent=11 // pred_fallthru
          _
        // Predicated region
        $region37: #{tpu_custom_call.1} parent=11 // pred_check
          %p406 = pneg %p298
        $region38: #{tpu_custom_call.1} parent=11 // pred_check_branch
          %408 = sbr.rel (%p406) target = $region40
        $region39: #{tpu_custom_call.1} parent=11 // pred_region
          _
        $region40: #{tpu_custom_call.1} parent=11 // pred_fallthru
          _
        // Predicated region
        $region41: #{tpu_custom_call.1} parent=11 // pred_check
          %p409 = pneg %p319
        $region42: #{tpu_custom_call.1} parent=11 // pred_check_branch
          %411 = sbr.rel (%p409) target = $region44
        $region43: #{tpu_custom_call.1} parent=11 // pred_region
          _
        $region44: #{tpu_custom_call.1} parent=11 // pred_fallthru
          _
      $region12: #{tpu_custom_call.1} parent=5 // pred_fallthru
        _
      %p412 = scmp.lt.s32.totalorder %s31, 2
      // Predicated region
      $region45: #{tpu_custom_call.1} parent=5 // pred_check
        %p413 = pneg %p412
      $region46: #{tpu_custom_call.1} parent=5 // pred_check_branch
        %415 = sbr.rel (%p413) target = $region48
      $region47: #{tpu_custom_call.1} parent=5 // pred_region
        // Predicated region
        $region49: #{tpu_custom_call.1} parent=47 // pred_check
          %p416 = pneg %p65
        $region50: #{tpu_custom_call.1} parent=47 // pred_check_branch
          %418 = sbr.rel (%p416) target = $region52
        $region51: #{tpu_custom_call.1} parent=47 // pred_region
          %s419 = sand.u32 %s55, 1
          %s420 = scalar_lea.sflag [#allocation5], %s419
          %s421 = sand.u32 %s55, 1
          %s422 = smul.addr %s421, 8
          %s423 = scalar_lea.vmem [#allocation4], %s422
          %s425 = ssub.s32 128, 128
          %426 = vsyncadd %s420, %s425
          %s427 = sadd.s32 %s39, %s38
          %s428 = smul.addr %s427, 128
          %s429 = scalar_lea.hbm %s0, %s428
          %s431 = sshll.u32 %s423, 4
          %s432 = int_to_ptr.vmem [resolvable:$true] %s431
          %434 = dma.hbm_to_vmem [thread:$0]  %s429, 128, %s432, %s420
        $region52: #{tpu_custom_call.1} parent=47 // pred_fallthru
          _
        // Predicated region
        $region53: #{tpu_custom_call.1} parent=47 // pred_check
          %p435 = pneg %p91
        $region54: #{tpu_custom_call.1} parent=47 // pred_check_branch
          %437 = sbr.rel (%p435) target = $region56
        $region55: #{tpu_custom_call.1} parent=47 // pred_region
          %s438 = sand.u32 %s31, 1
          %s439 = scalar_lea.sflag [#allocation8], %s438
          %s440 = sand.u32 %s81, 1
          %s441 = smul.addr %s440, 8
          %s442 = scalar_lea.vmem [#allocation7], %s441
          %s444 = ssub.s32 128, 128
          %445 = vsyncadd %s439, %s444
          %s446 = smul.addr %s38, 128
          %s447 = scalar_lea.hbm %s1, %s446
          %s449 = sshll.u32 %s442, 4
          %s450 = int_to_ptr.vmem [resolvable:$true] %s449
          %452 = dma.hbm_to_vmem [thread:$0]  %s447, 128, %s450, %s439
        $region56: #{tpu_custom_call.1} parent=47 // pred_fallthru
          _
        // Predicated region
        $region57: #{tpu_custom_call.1} parent=47 // pred_check
          %p453 = pneg %p117
        $region58: #{tpu_custom_call.1} parent=47 // pred_check_branch
          %455 = sbr.rel (%p453) target = $region60
        $region59: #{tpu_custom_call.1} parent=47 // pred_region
          %s456 = sand.u32 %s31, 1
          %s457 = scalar_lea.sflag [#allocation8], %s456
          %s458 = sand.u32 %s107, 1
          %s459 = smul.addr %s458, 8
          %s460 = scalar_lea.vmem [#allocation9], %s459
          %s462 = ssub.s32 128, 128
          %463 = vsyncadd %s457, %s462
          %s464 = smul.addr %s38, 128
          %s465 = scalar_lea.hbm %s2, %s464
          %s467 = sshll.u32 %s460, 4
          %s468 = int_to_ptr.vmem [resolvable:$true] %s467
          %470 = dma.hbm_to_vmem [thread:$0]  %s465, 128, %s468, %s457
        $region60: #{tpu_custom_call.1} parent=47 // pred_fallthru
          _
        // Predicated region
        $region61: #{tpu_custom_call.1} parent=47 // pred_check
          %p471 = pneg %p145
        $region62: #{tpu_custom_call.1} parent=47 // pred_check_branch
          %473 = sbr.rel (%p471) target = $region64
        $region63: #{tpu_custom_call.1} parent=47 // pred_region
          %s474 = sand.u32 %s31, 1
          %s475 = scalar_lea.sflag [#allocation11], %s474
          %s476 = sand.u32 %s135, 1
          %s477 = smul.addr %s476, 2
          %s478 = scalar_lea.vmem [#allocation10], %s477
          %s480 = ssub.s32 32, 32
          %481 = vsyncadd %s475, %s480
          %s482 = sadd.s32 %s39, %s38
          %s483 = smul.addr %s482, 32
          %s484 = scalar_lea.hbm %s3, %s483
          %s486 = sshll.u32 %s478, 4
          %s487 = int_to_ptr.vmem [resolvable:$true] %s486
          %489 = dma.hbm_to_vmem [thread:$0]  %s484, 32, %s487, %s475
        $region64: #{tpu_custom_call.1} parent=47 // pred_fallthru
          _
      $region48: #{tpu_custom_call.1} parent=5 // pred_fallthru
        _
      %p490 = scmp.le.s32.totalorder 1, %s31
      %p491 = scmp.lt.s32.totalorder %s31, 3
      %p492 = pnand %p490, %p491
      %p493 = pneg %p492
      // Predicated region
      $region65: #{tpu_custom_call.1} parent=5 // pred_check
        _
      $region66: #{tpu_custom_call.1} parent=5 // pred_check_branch
        %495 = sbr.rel (%p492) target = $region68
      $region67: #{tpu_custom_call.1} parent=5 // pred_region
        %s496 = ssub.s32 %s31, 1
        %s497 = sand.u32 %s58, 1
        %s498 = scalar_lea.sflag [#allocation5], %s497
        %s499 = sand.u32 %s58, 1
        %s500 = smul.addr %s499, 8
        %s501 = scalar_lea.vmem [#allocation4], %s500
        // Predicated region
        $region69: #{tpu_custom_call.1} parent=67 // pred_check
          %p502 = pneg %p71
        $region70: #{tpu_custom_call.1} parent=67 // pred_check_branch
          %504 = sbr.rel (%p502) target = $region72
        $region71: #{tpu_custom_call.1} parent=67 // pred_region
          %505 = dma.done %s498, 128
        $region72: #{tpu_custom_call.1} parent=67 // pred_fallthru
          _
        %s506 = sand.u32 %s36, 1
        %s507 = scalar_lea.sflag [#allocation8], %s506
        %s508 = sand.u32 %s84, 1
        %s509 = smul.addr %s508, 8
        %s510 = scalar_lea.vmem [#allocation7], %s509
        // Predicated region
        $region73: #{tpu_custom_call.1} parent=67 // pred_check
          %p511 = pneg %p97
        $region74: #{tpu_custom_call.1} parent=67 // pred_check_branch
          %513 = sbr.rel (%p511) target = $region76
        $region75: #{tpu_custom_call.1} parent=67 // pred_region
          %514 = dma.done %s507, 128
        $region76: #{tpu_custom_call.1} parent=67 // pred_fallthru
          _
        %s515 = sand.u32 %s36, 1
        %s516 = scalar_lea.sflag [#allocation8], %s515
        %s517 = sand.u32 %s110, 1
        %s518 = smul.addr %s517, 8
        %s519 = scalar_lea.vmem [#allocation9], %s518
        // Predicated region
        $region77: #{tpu_custom_call.1} parent=67 // pred_check
          %p520 = pneg %p123
        $region78: #{tpu_custom_call.1} parent=67 // pred_check_branch
          %522 = sbr.rel (%p520) target = $region80
        $region79: #{tpu_custom_call.1} parent=67 // pred_region
          %523 = dma.done %s516, 128
        $region80: #{tpu_custom_call.1} parent=67 // pred_fallthru
          _
        %s524 = sand.u32 %s36, 1
        %s525 = scalar_lea.sflag [#allocation11], %s524
        %s526 = sand.u32 %s138, 1
        %s527 = smul.addr %s526, 2
        %s528 = scalar_lea.vmem [#allocation10], %s527
        // Predicated region
        $region81: #{tpu_custom_call.1} parent=67 // pred_check
          %p529 = pneg %p151
        $region82: #{tpu_custom_call.1} parent=67 // pred_check_branch
          %531 = sbr.rel (%p529) target = $region84
        $region83: #{tpu_custom_call.1} parent=67 // pred_region
          %532 = dma.done %s525, 32
        $region84: #{tpu_custom_call.1} parent=67 // pred_fallthru
          _
        // Predicated region
        $region85: #{tpu_custom_call.1} parent=67 // pred_check
          %p533 = pneg %p235
        $region86: #{tpu_custom_call.1} parent=67 // pred_check_branch
          %535 = sbr.rel (%p533) target = $region88
        $region87: #{tpu_custom_call.1} parent=67 // pred_region
          %536 = dma.done [#allocation11], 16
        $region88: #{tpu_custom_call.1} parent=67 // pred_fallthru
          _
        // Predicated region
        $region89: #{tpu_custom_call.1} parent=67 // pred_check
          %p537 = pneg %p256
        $region90: #{tpu_custom_call.1} parent=67 // pred_check_branch
          %539 = sbr.rel (%p537) target = $region92
        $region91: #{tpu_custom_call.1} parent=67 // pred_region
          %540 = dma.done [#allocation14], 256
        $region92: #{tpu_custom_call.1} parent=67 // pred_fallthru
          _
        // Predicated region
        $region93: #{tpu_custom_call.1} parent=67 // pred_check
          %p541 = pneg %p277
        $region94: #{tpu_custom_call.1} parent=67 // pred_check_branch
          %543 = sbr.rel (%p541) target = $region96
        $region95: #{tpu_custom_call.1} parent=67 // pred_region
          %544 = dma.done [#allocation14], 16
        $region96: #{tpu_custom_call.1} parent=67 // pred_fallthru
          _
        %s545 = sand.u32 %s58, 1
        %s546 = scalar_lea.sflag [#allocation5], %s545
        %s547 = sand.u32 %s58, 1
        %s548 = smul.addr %s547, 8
        %s549 = scalar_lea.vmem [#allocation4], %s548
        %p550 = pneg %p71
        %p551 = pneg %p68
        %s552 = sand.u32 %s36, 1
        %s553 = scalar_lea.sflag [#allocation8], %s552
        %s554 = sand.u32 %s84, 1
        %s555 = smul.addr %s554, 8
        %s556 = scalar_lea.vmem [#allocation7], %s555
        %p557 = pneg %p97
        %p558 = pneg %p94
        %s559 = sand.u32 %s36, 1
        %s560 = scalar_lea.sflag [#allocation8], %s559
        %s561 = sand.u32 %s110, 1
        %s562 = smul.addr %s561, 8
        %s563 = scalar_lea.vmem [#allocation9], %s562
        %p564 = pneg %p123
        %p565 = pneg %p120
        %s566 = sand.u32 %s36, 1
        %s567 = scalar_lea.sflag [#allocation11], %s566
        %s568 = sand.u32 %s138, 1
        %s569 = smul.addr %s568, 2
        %s570 = scalar_lea.vmem [#allocation10], %s569
        %p571 = pneg %p151
        %p572 = pneg %p148
        %p573 = pneg %p172
        %p574 = pneg %p169
        %p575 = pneg %p193
        %p576 = pneg %p190
        %p577 = pneg %p214
        %p578 = pneg %p211
        %p579 = pneg %p235
        %p580 = pneg %p232
        %p581 = pneg %p256
        %p582 = pneg %p253
        %p583 = pneg %p277
        %p584 = pneg %p274
        %p585 = pneg %p298
        %p586 = pneg %p295
        %p587 = pneg %p319
        %p588 = pneg %p316
        %p589 = pneg %p347
        %p590 = pneg %p344
        %s591 = sand.u32 %s334, 1
        %s592 = scalar_lea.sflag [#allocation6], %s591
        %s593 = sand.u32 %s334, 1
        %s594 = smul.addr %s593, 8
        %s595 = scalar_lea.vmem [#allocation16], %s594
        %v599 = vld [vmem:[%s4] sm:$0x1]
        %v600 = vld [vmem:[%s5] sm:$0x1]
        %p601 = scmp.eq.s32.totalorder %s41, 0
        // Predicated region
        $region97: #{tpu_custom_call.1} parent=67 // pred_check
          %p602 = pneg %p601
        $region98: #{tpu_custom_call.1} parent=67 // pred_check_branch
          %604 = sbr.rel (%p602) target = $region100
        $region99: #{tpu_custom_call.1} parent=67 // pred_region
          %v605 = vld [vmem:[%s510] sm:$0xff]
          %vm606 = vcmask 261120
          %v607 = vsel %vm606, %v605, 0.0
          %608 = vadd.xlane.f32.xlu0 %v607
          %v609 = vpop.xlane.xlu0 %608
          %v610 = vrcp.pop 32.0
          %v611 = vmul.f32 %v609, %v610
          %v612 = vsub.f32 %v605, %v611
          %v613 = vmul.f32 %v612, %v612
          %v614 = vsel %vm606, %v613, 0.0
          %615 = vadd.xlane.f32.xlu0 %v614
          %v616 = vpop.xlane.xlu0 %615
          %v617 = vmul.f32 %v616, %v610
          %v618 = vadd.f32 %v617, 1e-05
          %v619 = vrsqrt.pop %v618
          %v620 = vmul.f32 %v612, %v619
          %v622 = vlaneseq
          %v623 = vshrl.u32 %v622, 7
          %v624 = vsub.s32 0, %v623
          %v625 = vrot.slane %v599, %v624
          %v627 = vmul.f32 %v620, %v625
          %v629 = vlaneseq
          %v630 = vshrl.u32 %v629, 7
          %v631 = vsub.s32 0, %v630
          %v632 = vrot.slane %v600, %v631
          %v634 = vadd.f32 %v627, %v632
          %v635 = vpack.c.bf16 %v634, %v634
          %v636 = vld [vmem:[%s519] sm:$0xff]
          %v637 = vsel %vm606, %v636, 0.0
          %638 = vadd.xlane.f32.xlu0 %v637
          %v639 = vpop.xlane.xlu0 %638
          %v640 = vmul.f32 %v639, %v610
          %v641 = vsub.f32 %v636, %v640
          %v642 = vmul.f32 %v641, %v641
          %v643 = vsel %vm606, %v642, 0.0
          %644 = vadd.xlane.f32.xlu0 %v643
          %v645 = vpop.xlane.xlu0 %644
          %v646 = vmul.f32 %v645, %v610
          %v647 = vadd.f32 %v646, 1e-05
          %v648 = vrsqrt.pop %v647
          %v649 = vmul.f32 %v641, %v648
          %v650 = vmul.f32 %v649, %v625
          %v651 = vadd.f32 %v650, %v632
          %v652 = vpack.c.bf16 %v651, %v651
          %v653 = vld [vmem:[#allocation13] sm:$0xf]
          %v654 = vld [vmem:[#allocation13 + $0x4] sm:$0xf]
          %v655 = vld [vmem:[#allocation13 + $0x8] sm:$0xf]
          %v656 = vld [vmem:[#allocation13 + $0xc] sm:$0xf]
          %v657 = vld [vmem:[#allocation15] sm:$0x1]
          %v659 = vlaneseq
          %v660 = vshrl.u32 %v659, 7
          %v661 = vsub.s32 0, %v660
          %v662 = vrot.slane %v657, %v661
          %v668 = vunpack.c.l.b16 %v653
          %v669 = vunpack.c.l.b16 %v654
          %v670 = vunpack.c.l.b16 %v655
          %v671 = vunpack.c.l.b16 %v656
          %v672 = vpack.c.b16 %v669, %v668
          %v673 = vpack.c.b16 %v671, %v670
          %v677 = vsel %vm606, %v635, 0
          %679 = vmatprep.subr.bf16.mxu0 0
          %680 = vmatpush1.bf16.msra.mxu0 %v672
          %681 = vmatprep.subr.bf16.mxu0 0
          %682 = vmatpush1.bf16.msra.mxu0 %v673
          %683 = vmatprep.subr.bf16.mxu0 0
          %684 = vmatpush1.bf16.msra.mxu0 0
          %685 = vmatprep.subr.bf16.mxu0 0
          %686 = vmatpush1.bf16.msra.mxu0 0
          %687 = vmatprep.subr.bf16.mxu0 0
          %688 = vmatpush1.bf16.msra.mxu0 0
          %689 = vmatprep.subr.bf16.mxu0 0
          %690 = vmatpush1.bf16.msra.mxu0 0
          %691 = vmatprep.subr.bf16.mxu0 0
          %692 = vmatpush1.bf16.msra.mxu0 0
          %693 = vmatprep.subr.bf16.mxu0 0
          %694 = vmatpush1.bf16.msra.mxu0 0
          %695 = vmatprep.subr.bf16.mxu0 0
          %696 = vmatpush1.bf16.msra.mxu0 0
          %697 = vmatprep.subr.bf16.mxu0 0
          %698 = vmatpush1.bf16.msra.mxu0 0
          %699 = vmatprep.subr.bf16.mxu0 0
          %700 = vmatpush1.bf16.msra.mxu0 0
          %701 = vmatprep.subr.bf16.mxu0 0
          %702 = vmatpush1.bf16.msra.mxu0 0
          %703 = vmatprep.subr.bf16.mxu0 0
          %704 = vmatpush1.bf16.msra.mxu0 0
          %705 = vmatprep.subr.bf16.mxu0 0
          %706 = vmatpush1.bf16.msra.mxu0 0
          %707 = vmatprep.subr.bf16.mxu0 0
          %708 = vmatpush1.bf16.msra.mxu0 0
          %709 = vmatprep.subr.bf16.mxu0 0
          %710 = vmatpush1.bf16.msra.mxu0 0
          %711 = vmatprep.mubr.bf16.mxu0 0
          %712 = vmatmul.mubr.bf16.gmra.mrb[0].mxu0 %v677
          %v713 = vpop.f32.mrb[0].mxu0
          %v714 = vadd.f32 %v662, %v713
          %v715 = vpop.f32.mrb[0].mxu0
          %v716 = vpop.f32.mrb[0].mxu0
          %v717 = vpop.f32.mrb[0].mxu0
          %718 = vdwg.mxu0
          %v719 = vld [vmem:[%s10] sm:$0xf]
          %v720 = vld [vmem:[%s10 + $0x4] sm:$0xf]
          %v721 = vld [vmem:[%s10 + $0x8] sm:$0xf]
          %v722 = vld [vmem:[%s10 + $0xc] sm:$0xf]
          %v723 = vld [vmem:[%s11] sm:$0x1]
          %v725 = vlaneseq
          %v726 = vshrl.u32 %v725, 7
          %v727 = vsub.s32 0, %v726
          %v728 = vrot.slane %v723, %v727
          %v734 = vunpack.c.l.b16 %v719
          %v735 = vunpack.c.l.b16 %v720
          %v736 = vunpack.c.l.b16 %v721
          %v737 = vunpack.c.l.b16 %v722
          %v738 = vpack.c.b16 %v735, %v734
          %v739 = vpack.c.b16 %v737, %v736
          %v743 = vsel %vm606, %v652, 0
          %745 = vmatprep.subr.bf16.mxu0 0
          %746 = vmatpush1.bf16.msra.mxu0 %v738
          %747 = vmatprep.subr.bf16.mxu0 0
          %748 = vmatpush1.bf16.msra.mxu0 %v739
          %749 = vmatprep.subr.bf16.mxu0 0
          %750 = vmatpush1.bf16.msra.mxu0 0
          %751 = vmatprep.subr.bf16.mxu0 0
          %752 = vmatpush1.bf16.msra.mxu0 0
          %753 = vmatprep.subr.bf16.mxu0 0
          %754 = vmatpush1.bf16.msra.mxu0 0
          %755 = vmatprep.subr.bf16.mxu0 0
          %756 = vmatpush1.bf16.msra.mxu0 0
          %757 = vmatprep.subr.bf16.mxu0 0
          %758 = vmatpush1.bf16.msra.mxu0 0
          %759 = vmatprep.subr.bf16.mxu0 0
          %760 = vmatpush1.bf16.msra.mxu0 0
          %761 = vmatprep.subr.bf16.mxu0 0
          %762 = vmatpush1.bf16.msra.mxu0 0
          %763 = vmatprep.subr.bf16.mxu0 0
          %764 = vmatpush1.bf16.msra.mxu0 0
          %765 = vmatprep.subr.bf16.mxu0 0
          %766 = vmatpush1.bf16.msra.mxu0 0
          %767 = vmatprep.subr.bf16.mxu0 0
          %768 = vmatpush1.bf16.msra.mxu0 0
          %769 = vmatprep.subr.bf16.mxu0 0
          %770 = vmatpush1.bf16.msra.mxu0 0
          %771 = vmatprep.subr.bf16.mxu0 0
          %772 = vmatpush1.bf16.msra.mxu0 0
          %773 = vmatprep.subr.bf16.mxu0 0
          %774 = vmatpush1.bf16.msra.mxu0 0
          %775 = vmatprep.subr.bf16.mxu0 0
          %776 = vmatpush1.bf16.msra.mxu0 0
          %777 = vmatprep.mubr.bf16.mxu0 0
          %778 = vmatmul.mubr.bf16.gmra.mrb[0].mxu0 %v743
          %v779 = vpop.f32.mrb[0].mxu0
          %v780 = vadd.f32 %v728, %v779
          %v781 = vpop.f32.mrb[0].mxu0
          %v782 = vpop.f32.mrb[0].mxu0
          %v783 = vpop.f32.mrb[0].mxu0
          %784 = vdwg.mxu0
          %786 = vrot.lane.b32.xlu0 %v714, 120
          %v787 = vpop.permute.xlu0 %786
          %789 = vrot.lane.b32.xlu0 %v714, 112
          %v790 = vpop.permute.xlu0 %789
          %792 = vrot.lane.b32.xlu0 %v714, 104
          %v793 = vpop.permute.xlu0 %792
          %v795 = vcombine.low %v714, %v790
          %v796 = vcombine.high %v714, %v790
          %v798 = vunpack.c.l.s4 1983009808
          %v799 = vunpack.c.0.s8 %v798
          %v800 = vlaneseq
          %v801 = vshrl.u32 %v800, 7
          %v802 = vsub.s32 %v799, %v801
          %v803 = vrot.slane %v795, %v802
          %v805 = vunpack.c.l.s4 1983009808
          %v806 = vunpack.c.0.s8 %v805
          %v807 = vlaneseq
          %v808 = vshrl.u32 %v807, 7
          %v809 = vsub.s32 %v806, %v808
          %v810 = vrot.slane %v796, %v809
          %v811 = vcombine.low %v787, %v793
          %v812 = vcombine.high %v787, %v793
          %v814 = vunpack.c.l.s4 1983009808
          %v815 = vunpack.c.0.s8 %v814
          %v816 = vlaneseq
          %v817 = vshrl.u32 %v816, 7
          %v818 = vsub.s32 %v815, %v817
          %v819 = vrot.slane %v811, %v818
          %v821 = vunpack.c.l.s4 1983009808
          %v822 = vunpack.c.0.s8 %v821
          %v823 = vlaneseq
          %v824 = vshrl.u32 %v823, 7
          %v825 = vsub.s32 %v822, %v824
          %v826 = vrot.slane %v812, %v825
          %v827 = vcombine.low %v803, %v819
          %v828 = vcombine.high %v803, %v819
          %v830 = vunpack.c.l.s4 1934713408
          %v831 = vunpack.c.0.s8 %v830
          %v832 = vlaneseq
          %v833 = vshrl.u32 %v832, 7
          %v834 = vsub.s32 %v831, %v833
          %v835 = vrot.slane %v827, %v834
          %v837 = vunpack.c.l.s4 1934713408
          %v838 = vunpack.c.0.s8 %v837
          %v839 = vlaneseq
          %v840 = vshrl.u32 %v839, 7
          %v841 = vsub.s32 %v838, %v840
          %v842 = vrot.slane %v828, %v841
          %v843 = vcombine.low %v810, %v826
          %v844 = vcombine.high %v810, %v826
          %v846 = vunpack.c.l.s4 1934713408
          %v847 = vunpack.c.0.s8 %v846
          %v848 = vlaneseq
          %v849 = vshrl.u32 %v848, 7
          %v850 = vsub.s32 %v847, %v849
          %v851 = vrot.slane %v843, %v850
          %v853 = vunpack.c.l.s4 1934713408
          %v854 = vunpack.c.0.s8 %v853
          %v855 = vlaneseq
          %v856 = vshrl.u32 %v855, 7
          %v857 = vsub.s32 %v854, %v856
          %v858 = vrot.slane %v844, %v857
          %v859 = vcombine.high %v835, 0.0
          %v860 = vcombine.high %v842, 0.0
          %v861 = vcombine.high %v851, 0.0
          %v862 = vcombine.high %v858, 0.0
          %v863 = vcombine.low %v835, %v842
          %v865 = vunpack.c.l.s4 1983009808
          %v866 = vunpack.c.0.s8 %v865
          %v867 = vlaneseq
          %v868 = vshrl.u32 %v867, 7
          %v869 = vsub.s32 %v866, %v868
          %v870 = vrot.slane %v863, %v869
          %v871 = vcombine.low %v859, %v860
          %v873 = vunpack.c.l.s4 1983009808
          %v874 = vunpack.c.0.s8 %v873
          %v875 = vlaneseq
          %v876 = vshrl.u32 %v875, 7
          %v877 = vsub.s32 %v874, %v876
          %v878 = vrot.slane %v871, %v877
          %v879 = vcombine.low %v851, %v858
          %v881 = vunpack.c.l.s4 1983009808
          %v882 = vunpack.c.0.s8 %v881
          %v883 = vlaneseq
          %v884 = vshrl.u32 %v883, 7
          %v885 = vsub.s32 %v882, %v884
          %v886 = vrot.slane %v879, %v885
          %v887 = vcombine.low %v861, %v862
          %v889 = vunpack.c.l.s4 1983009808
          %v890 = vunpack.c.0.s8 %v889
          %v891 = vlaneseq
          %v892 = vshrl.u32 %v891, 7
          %v893 = vsub.s32 %v890, %v892
          %v894 = vrot.slane %v887, %v893
          %v895 = vcombine.low %v870, %v878
          %v896 = vcombine.high %v870, %v878
          %v898 = vunpack.c.l.s4 1934713408
          %v899 = vunpack.c.0.s8 %v898
          %v900 = vlaneseq
          %v901 = vshrl.u32 %v900, 7
          %v902 = vsub.s32 %v899, %v901
          %v903 = vrot.slane %v895, %v902
          %v905 = vunpack.c.l.s4 1934713408
          %v906 = vunpack.c.0.s8 %v905
          %v907 = vlaneseq
          %v908 = vshrl.u32 %v907, 7
          %v909 = vsub.s32 %v906, %v908
          %v910 = vrot.slane %v896, %v909
          %v911 = vcombine.low %v886, %v894
          %v912 = vcombine.high %v886, %v894
          %v914 = vunpack.c.l.s4 1934713408
          %v915 = vunpack.c.0.s8 %v914
          %v916 = vlaneseq
          %v917 = vshrl.u32 %v916, 7
          %v918 = vsub.s32 %v915, %v917
          %v919 = vrot.slane %v911, %v918
          %v921 = vunpack.c.l.s4 1934713408
          %v922 = vunpack.c.0.s8 %v921
          %v923 = vlaneseq
          %v924 = vshrl.u32 %v923, 7
          %v925 = vsub.s32 %v922, %v924
          %v926 = vrot.slane %v912, %v925
          %v927 = vcombine.low %v903, %v919
          %v928 = vcombine.high %v903, %v919
          %v929 = vcombine.low %v910, %v926
          %v930 = vcombine.high %v910, %v926
          %v931 = vpack.c.bf16 %v927, %v927
          %v932 = vpack.c.bf16 %v928, %v928
          %v933 = vpack.c.bf16 %v929, %v929
          %v934 = vpack.c.bf16 %v930, %v930
          %vm935 = vcmask 60416
          %936 = vst.msk [vmem:[#allocation2] sm:$0xf] %vm935, %v931
          %937 = vst.msk [vmem:[#allocation2 + $0x4] sm:$0xf] %vm935, %v932
          %938 = vst.msk [vmem:[#allocation2 + $0x8] sm:$0xf] %vm935, %v933
          %939 = vst.msk [vmem:[#allocation2 + $0xc] sm:$0xf] %vm935, %v934
          %941 = vrot.lane.b32.xlu0 %v780, 120
          %v942 = vpop.permute.xlu0 %941
          %944 = vrot.lane.b32.xlu0 %v780, 112
          %v945 = vpop.permute.xlu0 %944
          %947 = vrot.lane.b32.xlu0 %v780, 104
          %v948 = vpop.permute.xlu0 %947
          %v950 = vcombine.low %v780, %v945
          %v951 = vcombine.high %v780, %v945
          %v953 = vunpack.c.l.s4 1983009808
          %v954 = vunpack.c.0.s8 %v953
          %v955 = vlaneseq
          %v956 = vshrl.u32 %v955, 7
          %v957 = vsub.s32 %v954, %v956
          %v958 = vrot.slane %v950, %v957
          %v960 = vunpack.c.l.s4 1983009808
          %v961 = vunpack.c.0.s8 %v960
          %v962 = vlaneseq
          %v963 = vshrl.u32 %v962, 7
          %v964 = vsub.s32 %v961, %v963
          %v965 = vrot.slane %v951, %v964
          %v966 = vcombine.low %v942, %v948
          %v967 = vcombine.high %v942, %v948
          %v969 = vunpack.c.l.s4 1983009808
          %v970 = vunpack.c.0.s8 %v969
          %v971 = vlaneseq
          %v972 = vshrl.u32 %v971, 7
          %v973 = vsub.s32 %v970, %v972
          %v974 = vrot.slane %v966, %v973
          %v976 = vunpack.c.l.s4 1983009808
          %v977 = vunpack.c.0.s8 %v976
          %v978 = vlaneseq
          %v979 = vshrl.u32 %v978, 7
          %v980 = vsub.s32 %v977, %v979
          %v981 = vrot.slane %v967, %v980
          %v982 = vcombine.low %v958, %v974
          %v983 = vcombine.high %v958, %v974
          %v985 = vunpack.c.l.s4 1934713408
          %v986 = vunpack.c.0.s8 %v985
          %v987 = vlaneseq
          %v988 = vshrl.u32 %v987, 7
          %v989 = vsub.s32 %v986, %v988
          %v990 = vrot.slane %v982, %v989
          %v992 = vunpack.c.l.s4 1934713408
          %v993 = vunpack.c.0.s8 %v992
          %v994 = vlaneseq
          %v995 = vshrl.u32 %v994, 7
          %v996 = vsub.s32 %v993, %v995
          %v997 = vrot.slane %v983, %v996
          %v998 = vcombine.low %v965, %v981
          %v999 = vcombine.high %v965, %v981
          %v1001 = vunpack.c.l.s4 1934713408
          %v1002 = vunpack.c.0.s8 %v1001
          %v1003 = vlaneseq
          %v1004 = vshrl.u32 %v1003, 7
          %v1005 = vsub.s32 %v1002, %v1004
          %v1006 = vrot.slane %v998, %v1005
          %v1008 = vunpack.c.l.s4 1934713408
          %v1009 = vunpack.c.0.s8 %v1008
          %v1010 = vlaneseq
          %v1011 = vshrl.u32 %v1010, 7
          %v1012 = vsub.s32 %v1009, %v1011
          %v1013 = vrot.slane %v999, %v1012
          %v1014 = vcombine.high %v990, 0.0
          %v1015 = vcombine.high %v997, 0.0
          %v1016 = vcombine.high %v1006, 0.0
          %v1017 = vcombine.high %v1013, 0.0
          %v1018 = vcombine.low %v990, %v997
          %v1020 = vunpack.c.l.s4 1983009808
          %v1021 = vunpack.c.0.s8 %v1020
          %v1022 = vlaneseq
          %v1023 = vshrl.u32 %v1022, 7
          %v1024 = vsub.s32 %v1021, %v1023
          %v1025 = vrot.slane %v1018, %v1024
          %v1026 = vcombine.low %v1014, %v1015
          %v1028 = vunpack.c.l.s4 1983009808
          %v1029 = vunpack.c.0.s8 %v1028
          %v1030 = vlaneseq
          %v1031 = vshrl.u32 %v1030, 7
          %v1032 = vsub.s32 %v1029, %v1031
          %v1033 = vrot.slane %v1026, %v1032
          %v1034 = vcombine.low %v1006, %v1013
          %v1036 = vunpack.c.l.s4 1983009808
          %v1037 = vunpack.c.0.s8 %v1036
          %v1038 = vlaneseq
          %v1039 = vshrl.u32 %v1038, 7
          %v1040 = vsub.s32 %v1037, %v1039
          %v1041 = vrot.slane %v1034, %v1040
          %v1042 = vcombine.low %v1016, %v1017
          %v1044 = vunpack.c.l.s4 1983009808
          %v1045 = vunpack.c.0.s8 %v1044
          %v1046 = vlaneseq
          %v1047 = vshrl.u32 %v1046, 7
          %v1048 = vsub.s32 %v1045, %v1047
          %v1049 = vrot.slane %v1042, %v1048
          %v1050 = vcombine.low %v1025, %v1033
          %v1051 = vcombine.high %v1025, %v1033
          %v1053 = vunpack.c.l.s4 1934713408
          %v1054 = vunpack.c.0.s8 %v1053
          %v1055 = vlaneseq
          %v1056 = vshrl.u32 %v1055, 7
          %v1057 = vsub.s32 %v1054, %v1056
          %v1058 = vrot.slane %v1050, %v1057
          %v1060 = vunpack.c.l.s4 1934713408
          %v1061 = vunpack.c.0.s8 %v1060
          %v1062 = vlaneseq
          %v1063 = vshrl.u32 %v1062, 7
          %v1064 = vsub.s32 %v1061, %v1063
          %v1065 = vrot.slane %v1051, %v1064
          %v1066 = vcombine.low %v1041, %v1049
          %v1067 = vcombine.high %v1041, %v1049
          %v1069 = vunpack.c.l.s4 1934713408
          %v1070 = vunpack.c.0.s8 %v1069
          %v1071 = vlaneseq
          %v1072 = vshrl.u32 %v1071, 7
          %v1073 = vsub.s32 %v1070, %v1072
          %v1074 = vrot.slane %v1066, %v1073
          %v1076 = vunpack.c.l.s4 1934713408
          %v1077 = vunpack.c.0.s8 %v1076
          %v1078 = vlaneseq
          %v1079 = vshrl.u32 %v1078, 7
          %v1080 = vsub.s32 %v1077, %v1079
          %v1081 = vrot.slane %v1067, %v1080
          %v1082 = vcombine.low %v1058, %v1074
          %v1083 = vcombine.high %v1058, %v1074
          %v1084 = vcombine.low %v1065, %v1081
          %v1085 = vcombine.high %v1065, %v1081
          %v1086 = vpack.c.bf16 %v1082, %v1082
          %v1087 = vpack.c.bf16 %v1083, %v1083
          %v1088 = vpack.c.bf16 %v1084, %v1084
          %v1089 = vpack.c.bf16 %v1085, %v1085
          %1090 = vst.msk [vmem:[#allocation3] sm:$0xf] %vm935, %v1086
          %1091 = vst.msk [vmem:[#allocation3 + $0x4] sm:$0xf] %vm935, %v1087
          %1092 = vst.msk [vmem:[#allocation3 + $0x8] sm:$0xf] %vm935, %v1088
          %1093 = vst.msk [vmem:[#allocation3 + $0xc] sm:$0xf] %vm935, %v1089
        $region100: #{tpu_custom_call.1} parent=67 // pred_fallthru
          _
        %v1094 = vld [vmem:[%s501] sm:$0xff]
        %vm1095 = vcmask 261120
        %v1096 = vsel %vm1095, %v1094, 0.0
        %1097 = vadd.xlane.f32.xlu0 %v1096
        %v1098 = vpop.xlane.xlu0 %1097
        %v1099 = vrcp.pop 32.0
        %v1100 = vmul.f32 %v1098, %v1099
        %v1101 = vsub.f32 %v1094, %v1100
        %v1102 = vmul.f32 %v1101, %v1101
        %v1103 = vsel %vm1095, %v1102, 0.0
        %1104 = vadd.xlane.f32.xlu0 %v1103
        %v1105 = vpop.xlane.xlu0 %1104
        %v1106 = vmul.f32 %v1105, %v1099
        %v1107 = vadd.f32 %v1106, 1e-05
        %v1108 = vrsqrt.pop %v1107
        %v1109 = vmul.f32 %v1101, %v1108
        %v1111 = vlaneseq
        %v1112 = vshrl.u32 %v1111, 7
        %v1113 = vsub.s32 0, %v1112
        %v1114 = vrot.slane %v599, %v1113
        %v1116 = vmul.f32 %v1109, %v1114
        %v1118 = vlaneseq
        %v1119 = vshrl.u32 %v1118, 7
        %v1120 = vsub.s32 0, %v1119
        %v1121 = vrot.slane %v600, %v1120
        %v1123 = vadd.f32 %v1116, %v1121
        %v1124 = vpack.c.bf16 %v1123, %v1123
        %v1125 = vld [vmem:[%s6] sm:$0xf]
        %v1126 = vld [vmem:[%s6 + $0x4] sm:$0xf]
        %v1127 = vld [vmem:[%s6 + $0x8] sm:$0xf]
        %v1128 = vld [vmem:[%s6 + $0xc] sm:$0xf]
        %v1129 = vld [vmem:[#allocation12] sm:$0x1]
        %v1131 = vlaneseq
        %v1132 = vshrl.u32 %v1131, 7
        %v1133 = vsub.s32 0, %v1132
        %v1134 = vrot.slane %v1129, %v1133
        %v1140 = vunpack.c.l.b16 %v1125
        %v1141 = vunpack.c.l.b16 %v1126
        %v1142 = vunpack.c.l.b16 %v1127
        %v1143 = vunpack.c.l.b16 %v1128
        %v1144 = vpack.c.b16 %v1141, %v1140
        %v1145 = vpack.c.b16 %v1143, %v1142
        %v1149 = vsel %vm1095, %v1124, 0
        %1151 = vmatprep.subr.bf16.mxu0 0
        %1152 = vmatpush1.bf16.msra.mxu0 %v1144
        %1153 = vmatprep.subr.bf16.mxu0 0
        %1154 = vmatpush1.bf16.msra.mxu0 %v1145
        %1155 = vmatprep.subr.bf16.mxu0 0
        %1156 = vmatpush1.bf16.msra.mxu0 0
        %1157 = vmatprep.subr.bf16.mxu0 0
        %1158 = vmatpush1.bf16.msra.mxu0 0
        %1159 = vmatprep.subr.bf16.mxu0 0
        %1160 = vmatpush1.bf16.msra.mxu0 0
        %1161 = vmatprep.subr.bf16.mxu0 0
        %1162 = vmatpush1.bf16.msra.mxu0 0
        %1163 = vmatprep.subr.bf16.mxu0 0
        %1164 = vmatpush1.bf16.msra.mxu0 0
        %1165 = vmatprep.subr.bf16.mxu0 0
        %1166 = vmatpush1.bf16.msra.mxu0 0
        %1167 = vmatprep.subr.bf16.mxu0 0
        %1168 = vmatpush1.bf16.msra.mxu0 0
        %1169 = vmatprep.subr.bf16.mxu0 0
        %1170 = vmatpush1.bf16.msra.mxu0 0
        %1171 = vmatprep.subr.bf16.mxu0 0
        %1172 = vmatpush1.bf16.msra.mxu0 0
        %1173 = vmatprep.subr.bf16.mxu0 0
        %1174 = vmatpush1.bf16.msra.mxu0 0
        %1175 = vmatprep.subr.bf16.mxu0 0
        %1176 = vmatpush1.bf16.msra.mxu0 0
        %1177 = vmatprep.subr.bf16.mxu0 0
        %1178 = vmatpush1.bf16.msra.mxu0 0
        %1179 = vmatprep.subr.bf16.mxu0 0
        %1180 = vmatpush1.bf16.msra.mxu0 0
        %1181 = vmatprep.subr.bf16.mxu0 0
        %1182 = vmatpush1.bf16.msra.mxu0 0
        %1183 = vmatprep.mubr.bf16.mxu0 0
        %1184 = vmatmul.mubr.bf16.gmra.mrb[0].mxu0 %v1149
        %v1185 = vpop.f32.mrb[0].mxu0
        %v1186 = vadd.f32 %v1134, %v1185
        %v1187 = vpop.f32.mrb[0].mxu0
        %v1188 = vpop.f32.mrb[0].mxu0
        %v1189 = vpop.f32.mrb[0].mxu0
        %1190 = vdwg.mxu0
        %v1191 = vmul.f32 %v1186, 0.35355338
        %1193 = vrot.lane.b32.xlu0 %v1191, 120
        %v1194 = vpop.permute.xlu0 %1193
        %1196 = vrot.lane.b32.xlu0 %v1191, 112
        %v1197 = vpop.permute.xlu0 %1196
        %1199 = vrot.lane.b32.xlu0 %v1191, 104
        %v1200 = vpop.permute.xlu0 %1199
        %v1202 = vcombine.low %v1191, %v1197
        %v1203 = vcombine.high %v1191, %v1197
        %v1205 = vunpack.c.l.s4 1983009808
        %v1206 = vunpack.c.0.s8 %v1205
        %v1207 = vlaneseq
        %v1208 = vshrl.u32 %v1207, 7
        %v1209 = vsub.s32 %v1206, %v1208
        %v1210 = vrot.slane %v1202, %v1209
        %v1212 = vunpack.c.l.s4 1983009808
        %v1213 = vunpack.c.0.s8 %v1212
        %v1214 = vlaneseq
        %v1215 = vshrl.u32 %v1214, 7
        %v1216 = vsub.s32 %v1213, %v1215
        %v1217 = vrot.slane %v1203, %v1216
        %v1218 = vcombine.low %v1194, %v1200
        %v1219 = vcombine.high %v1194, %v1200
        %v1221 = vunpack.c.l.s4 1983009808
        %v1222 = vunpack.c.0.s8 %v1221
        %v1223 = vlaneseq
        %v1224 = vshrl.u32 %v1223, 7
        %v1225 = vsub.s32 %v1222, %v1224
        %v1226 = vrot.slane %v1218, %v1225
        %v1228 = vunpack.c.l.s4 1983009808
        %v1229 = vunpack.c.0.s8 %v1228
        %v1230 = vlaneseq
        %v1231 = vshrl.u32 %v1230, 7
        %v1232 = vsub.s32 %v1229, %v1231
        %v1233 = vrot.slane %v1219, %v1232
        %v1234 = vcombine.low %v1210, %v1226
        %v1235 = vcombine.high %v1210, %v1226
        %v1237 = vunpack.c.l.s4 1934713408
        %v1238 = vunpack.c.0.s8 %v1237
        %v1239 = vlaneseq
        %v1240 = vshrl.u32 %v1239, 7
        %v1241 = vsub.s32 %v1238, %v1240
        %v1242 = vrot.slane %v1234, %v1241
        %v1244 = vunpack.c.l.s4 1934713408
        %v1245 = vunpack.c.0.s8 %v1244
        %v1246 = vlaneseq
        %v1247 = vshrl.u32 %v1246, 7
        %v1248 = vsub.s32 %v1245, %v1247
        %v1249 = vrot.slane %v1235, %v1248
        %v1250 = vcombine.low %v1217, %v1233
        %v1251 = vcombine.high %v1217, %v1233
        %v1253 = vunpack.c.l.s4 1934713408
        %v1254 = vunpack.c.0.s8 %v1253
        %v1255 = vlaneseq
        %v1256 = vshrl.u32 %v1255, 7
        %v1257 = vsub.s32 %v1254, %v1256
        %v1258 = vrot.slane %v1250, %v1257
        %v1260 = vunpack.c.l.s4 1934713408
        %v1261 = vunpack.c.0.s8 %v1260
        %v1262 = vlaneseq
        %v1263 = vshrl.u32 %v1262, 7
        %v1264 = vsub.s32 %v1261, %v1263
        %v1265 = vrot.slane %v1251, %v1264
        %v1266 = vcombine.high %v1242, 0.0
        %v1267 = vcombine.high %v1249, 0.0
        %v1268 = vcombine.high %v1258, 0.0
        %v1269 = vcombine.high %v1265, 0.0
        %v1270 = vcombine.low %v1242, %v1249
        %v1272 = vunpack.c.l.s4 1983009808
        %v1273 = vunpack.c.0.s8 %v1272
        %v1274 = vlaneseq
        %v1275 = vshrl.u32 %v1274, 7
        %v1276 = vsub.s32 %v1273, %v1275
        %v1277 = vrot.slane %v1270, %v1276
        %v1278 = vcombine.low %v1266, %v1267
        %v1280 = vunpack.c.l.s4 1983009808
        %v1281 = vunpack.c.0.s8 %v1280
        %v1282 = vlaneseq
        %v1283 = vshrl.u32 %v1282, 7
        %v1284 = vsub.s32 %v1281, %v1283
        %v1285 = vrot.slane %v1278, %v1284
        %v1286 = vcombine.low %v1258, %v1265
        %v1288 = vunpack.c.l.s4 1983009808
        %v1289 = vunpack.c.0.s8 %v1288
        %v1290 = vlaneseq
        %v1291 = vshrl.u32 %v1290, 7
        %v1292 = vsub.s32 %v1289, %v1291
        %v1293 = vrot.slane %v1286, %v1292
        %v1294 = vcombine.low %v1268, %v1269
        %v1296 = vunpack.c.l.s4 1983009808
        %v1297 = vunpack.c.0.s8 %v1296
        %v1298 = vlaneseq
        %v1299 = vshrl.u32 %v1298, 7
        %v1300 = vsub.s32 %v1297, %v1299
        %v1301 = vrot.slane %v1294, %v1300
        %v1302 = vcombine.low %v1277, %v1285
        %v1303 = vcombine.high %v1277, %v1285
        %v1305 = vunpack.c.l.s4 1934713408
        %v1306 = vunpack.c.0.s8 %v1305
        %v1307 = vlaneseq
        %v1308 = vshrl.u32 %v1307, 7
        %v1309 = vsub.s32 %v1306, %v1308
        %v1310 = vrot.slane %v1302, %v1309
        %v1312 = vunpack.c.l.s4 1934713408
        %v1313 = vunpack.c.0.s8 %v1312
        %v1314 = vlaneseq
        %v1315 = vshrl.u32 %v1314, 7
        %v1316 = vsub.s32 %v1313, %v1315
        %v1317 = vrot.slane %v1303, %v1316
        %v1318 = vcombine.low %v1293, %v1301
        %v1319 = vcombine.high %v1293, %v1301
        %v1321 = vunpack.c.l.s4 1934713408
        %v1322 = vunpack.c.0.s8 %v1321
        %v1323 = vlaneseq
        %v1324 = vshrl.u32 %v1323, 7
        %v1325 = vsub.s32 %v1322, %v1324
        %v1326 = vrot.slane %v1318, %v1325
        %v1328 = vunpack.c.l.s4 1934713408
        %v1329 = vunpack.c.0.s8 %v1328
        %v1330 = vlaneseq
        %v1331 = vshrl.u32 %v1330, 7
        %v1332 = vsub.s32 %v1329, %v1331
        %v1333 = vrot.slane %v1319, %v1332
        %v1334 = vcombine.low %v1310, %v1326
        %v1335 = vcombine.high %v1310, %v1326
        %v1336 = vcombine.low %v1317, %v1333
        %v1337 = vcombine.high %v1317, %v1333
        %v1338 = vpack.c.bf16 %v1334, %v1334
        %v1339 = vpack.c.bf16 %v1335, %v1335
        %v1340 = vpack.c.bf16 %v1336, %v1336
        %v1341 = vpack.c.bf16 %v1337, %v1337
        %v1342 = vld [vmem:[#allocation2] sm:$0xf]
        %v1343 = vld [vmem:[#allocation2 + $0x4] sm:$0xf]
        %v1344 = vld [vmem:[#allocation2 + $0x8] sm:$0xf]
        %v1345 = vld [vmem:[#allocation2 + $0xc] sm:$0xf]
        %vm1346 = vcmask 64512
        %v1348 = vsel %vm1346, %v1338, 0
        %v1351 = vsel %vm1346, %v1342, 0
        %1353 = vmatprep.subr.bf16.mxu0 0
        %1354 = vmatpush1.bf16.xpose.msra.mxu0 %v1351
        %1355 = vmatprep.subr.bf16.mxu0 0
        %1356 = vmatpush1.bf16.xpose.msra.mxu0 0
        %1357 = vmatprep.subr.bf16.mxu0 0
        %1358 = vmatpush1.bf16.xpose.msra.mxu0 0
        %1359 = vmatprep.subr.bf16.mxu0 0
        %1360 = vmatpush1.bf16.xpose.msra.mxu0 0
        %1361 = vmatprep.subr.bf16.mxu0 0
        %1362 = vmatpush1.bf16.xpose.msra.mxu0 0
        %1363 = vmatprep.subr.bf16.mxu0 0
        %1364 = vmatpush1.bf16.xpose.msra.mxu0 0
        %1365 = vmatprep.subr.bf16.mxu0 0
        %1366 = vmatpush1.bf16.xpose.msra.mxu0 0
        %1367 = vmatprep.subr.bf16.mxu0 0
        %1368 = vmatpush1.bf16.xpose.msra.mxu0 0
        %1369 = vmatprep.subr.bf16.mxu0 0
        %1370 = vmatpush1.bf16.xpose.msra.mxu0 0
        %1371 = vmatprep.subr.bf16.mxu0 0
        %1372 = vmatpush1.bf16.xpose.msra.mxu0 0
        %1373 = vmatprep.subr.bf16.mxu0 0
        %1374 = vmatpush1.bf16.xpose.msra.mxu0 0
        %1375 = vmatprep.subr.bf16.mxu0 0
        %1376 = vmatpush1.bf16.xpose.msra.mxu0 0
        %1377 = vmatprep.subr.bf16.mxu0 0
        %1378 = vmatpush1.bf16.xpose.msra.mxu0 0
        %1379 = vmatprep.subr.bf16.mxu0 0
        %1380 = vmatpush1.bf16.xpose.msra.mxu0 0
        %1381 = vmatprep.subr.bf16.mxu0 0
        %1382 = vmatpush1.bf16.xpose.msra.mxu0 0
        %1383 = vmatprep.subr.bf16.mxu0 0
        %1384 = vmatpush1.bf16.xpose.msra.mxu0 0
        %1385 = vmatprep.mubr.bf16.mxu0 0
        %1386 = vmatmul.mubr.bf16.gmra.mrb[0].mxu0 %v1348
        %v1387 = vpop.f32.mrb[0].mxu0
        %v1388 = vadd.f32 0.0, %v1387
        %v1389 = vpop.f32.mrb[0].mxu0
        %v1390 = vpop.f32.mrb[0].mxu0
        %v1391 = vpop.f32.mrb[0].mxu0
        %1392 = vdwg.mxu0
        %v1394 = vsel %vm1346, %v1339, 0
        %v1397 = vsel %vm1346, %v1343, 0
        %1399 = vmatprep.subr.bf16.mxu0 0
        %1400 = vmatpush1.bf16.xpose.msra.mxu0 %v1397
        %1401 = vmatprep.subr.bf16.mxu0 0
        %1402 = vmatpush1.bf16.xpose.msra.mxu0 0
        %1403 = vmatprep.subr.bf16.mxu0 0
        %1404 = vmatpush1.bf16.xpose.msra.mxu0 0
        %1405 = vmatprep.subr.bf16.mxu0 0
        %1406 = vmatpush1.bf16.xpose.msra.mxu0 0
        %1407 = vmatprep.subr.bf16.mxu0 0
        %1408 = vmatpush1.bf16.xpose.msra.mxu0 0
        %1409 = vmatprep.subr.bf16.mxu0 0
        %1410 = vmatpush1.bf16.xpose.msra.mxu0 0
        %1411 = vmatprep.subr.bf16.mxu0 0
        %1412 = vmatpush1.bf16.xpose.msra.mxu0 0
        %1413 = vmatprep.subr.bf16.mxu0 0
        %1414 = vmatpush1.bf16.xpose.msra.mxu0 0
        %1415 = vmatprep.subr.bf16.mxu0 0
        %1416 = vmatpush1.bf16.xpose.msra.mxu0 0
        %1417 = vmatprep.subr.bf16.mxu0 0
        %1418 = vmatpush1.bf16.xpose.msra.mxu0 0
        %1419 = vmatprep.subr.bf16.mxu0 0
        %1420 = vmatpush1.bf16.xpose.msra.mxu0 0
        %1421 = vmatprep.subr.bf16.mxu0 0
        %1422 = vmatpush1.bf16.xpose.msra.mxu0 0
        %1423 = vmatprep.subr.bf16.mxu0 0
        %1424 = vmatpush1.bf16.xpose.msra.mxu0 0
        %1425 = vmatprep.subr.bf16.mxu0 0
        %1426 = vmatpush1.bf16.xpose.msra.mxu0 0
        %1427 = vmatprep.subr.bf16.mxu0 0
        %1428 = vmatpush1.bf16.xpose.msra.mxu0 0
        %1429 = vmatprep.subr.bf16.mxu0 0
        %1430 = vmatpush1.bf16.xpose.msra.mxu0 0
        %1431 = vmatprep.mubr.bf16.mxu0 0
        %1432 = vmatmul.mubr.bf16.gmra.mrb[0].mxu0 %v1394
        %v1433 = vpop.f32.mrb[0].mxu0
        %v1434 = vadd.f32 0.0, %v1433
        %v1435 = vpop.f32.mrb[0].mxu0
        %v1436 = vpop.f32.mrb[0].mxu0
        %v1437 = vpop.f32.mrb[0].mxu0
        %1438 = vdwg.mxu0
        %v1440 = vsel %vm1346, %v1340, 0
        %v1443 = vsel %vm1346, %v1344, 0
        %1445 = vmatprep.subr.bf16.mxu0 0
        %1446 = vmatpush1.bf16.xpose.msra.mxu0 %v1443
        %1447 = vmatprep.subr.bf16.mxu0 0
        %1448 = vmatpush1.bf16.xpose.msra.mxu0 0
        %1449 = vmatprep.subr.bf16.mxu0 0
        %1450 = vmatpush1.bf16.xpose.msra.mxu0 0
        %1451 = vmatprep.subr.bf16.mxu0 0
        %1452 = vmatpush1.bf16.xpose.msra.mxu0 0
        %1453 = vmatprep.subr.bf16.mxu0 0
        %1454 = vmatpush1.bf16.xpose.msra.mxu0 0
        %1455 = vmatprep.subr.bf16.mxu0 0
        %1456 = vmatpush1.bf16.xpose.msra.mxu0 0
        %1457 = vmatprep.subr.bf16.mxu0 0
        %1458 = vmatpush1.bf16.xpose.msra.mxu0 0
        %1459 = vmatprep.subr.bf16.mxu0 0
        %1460 = vmatpush1.bf16.xpose.msra.mxu0 0
        %1461 = vmatprep.subr.bf16.mxu0 0
        %1462 = vmatpush1.bf16.xpose.msra.mxu0 0
        %1463 = vmatprep.subr.bf16.mxu0 0
        %1464 = vmatpush1.bf16.xpose.msra.mxu0 0
        %1465 = vmatprep.subr.bf16.mxu0 0
        %1466 = vmatpush1.bf16.xpose.msra.mxu0 0
        %1467 = vmatprep.subr.bf16.mxu0 0
        %1468 = vmatpush1.bf16.xpose.msra.mxu0 0
        %1469 = vmatprep.subr.bf16.mxu0 0
        %1470 = vmatpush1.bf16.xpose.msra.mxu0 0
        %1471 = vmatprep.subr.bf16.mxu0 0
        %1472 = vmatpush1.bf16.xpose.msra.mxu0 0
        %1473 = vmatprep.subr.bf16.mxu0 0
        %1474 = vmatpush1.bf16.xpose.msra.mxu0 0
        %1475 = vmatprep.subr.bf16.mxu0 0
        %1476 = vmatpush1.bf16.xpose.msra.mxu0 0
        %1477 = vmatprep.mubr.bf16.mxu0 0
        %1478 = vmatmul.mubr.bf16.gmra.mrb[0].mxu0 %v1440
        %v1479 = vpop.f32.mrb[0].mxu0
        %v1480 = vadd.f32 0.0, %v1479
        %v1481 = vpop.f32.mrb[0].mxu0
        %v1482 = vpop.f32.mrb[0].mxu0
        %v1483 = vpop.f32.mrb[0].mxu0
        %1484 = vdwg.mxu0
        %v1486 = vsel %vm1346, %v1341, 0
        %v1489 = vsel %vm1346, %v1345, 0
        %1491 = vmatprep.subr.bf16.mxu0 0
        %1492 = vmatpush1.bf16.xpose.msra.mxu0 %v1489
        %1493 = vmatprep.subr.bf16.mxu0 0
        %1494 = vmatpush1.bf16.xpose.msra.mxu0 0
        %1495 = vmatprep.subr.bf16.mxu0 0
        %1496 = vmatpush1.bf16.xpose.msra.mxu0 0
        %1497 = vmatprep.subr.bf16.mxu0 0
        %1498 = vmatpush1.bf16.xpose.msra.mxu0 0
        %1499 = vmatprep.subr.bf16.mxu0 0
        %1500 = vmatpush1.bf16.xpose.msra.mxu0 0
        %1501 = vmatprep.subr.bf16.mxu0 0
        %1502 = vmatpush1.bf16.xpose.msra.mxu0 0
        %1503 = vmatprep.subr.bf16.mxu0 0
        %1504 = vmatpush1.bf16.xpose.msra.mxu0 0
        %1505 = vmatprep.subr.bf16.mxu0 0
        %1506 = vmatpush1.bf16.xpose.msra.mxu0 0
        %1507 = vmatprep.subr.bf16.mxu0 0
        %1508 = vmatpush1.bf16.xpose.msra.mxu0 0
        %1509 = vmatprep.subr.bf16.mxu0 0
        %1510 = vmatpush1.bf16.xpose.msra.mxu0 0
        %1511 = vmatprep.subr.bf16.mxu0 0
        %1512 = vmatpush1.bf16.xpose.msra.mxu0 0
        %1513 = vmatprep.subr.bf16.mxu0 0
        %1514 = vmatpush1.bf16.xpose.msra.mxu0 0
        %1515 = vmatprep.subr.bf16.mxu0 0
        %1516 = vmatpush1.bf16.xpose.msra.mxu0 0
        %1517 = vmatprep.subr.bf16.mxu0 0
        %1518 = vmatpush1.bf16.xpose.msra.mxu0 0
        %1519 = vmatprep.subr.bf16.mxu0 0
        %1520 = vmatpush1.bf16.xpose.msra.mxu0 0
        %1521 = vmatprep.subr.bf16.mxu0 0
        %1522 = vmatpush1.bf16.xpose.msra.mxu0 0
        %1523 = vmatprep.mubr.bf16.mxu0 0
        %1524 = vmatmul.mubr.bf16.gmra.mrb[0].mxu0 %v1486
        %v1525 = vpop.f32.mrb[0].mxu0
        %v1526 = vadd.f32 0.0, %v1525
        %v1527 = vpop.f32.mrb[0].mxu0
        %v1528 = vpop.f32.mrb[0].mxu0
        %v1529 = vpop.f32.mrb[0].mxu0
        %1530 = vdwg.mxu0
        %v1531 = vld [vmem:[%s528] sm:$0x3]
        %vm1532 = vnez %v1531
        %v1533 = vsel %vm1532, 16843009, 0
        %v1534 = vunpack.c.0.s8 %v1533
        %vm1535 = vcmp.ne.s32.totalorder %v1534, 0
        %v1536 = vsel %vm1535, 1, 0
        %vm1537 = vcmp.eq.s32.totalorder %v1536, 1
        %v1538 = vsel %vm1537, -1e+30, %v1388
        %v1539 = vsel %vm1537, -1e+30, %v1434
        %v1540 = vsel %vm1537, -1e+30, %v1480
        %v1541 = vsel %vm1537, -1e+30, %v1526
        %v1542 = vsel %vm1346, %v1538, -inf
        %1543 = vmax.xlane.f32.xlu0 %v1542
        %v1544 = vpop.xlane.xlu0 %1543
        %v1545 = vsel %vm1346, %v1539, -inf
        %1546 = vmax.xlane.f32.xlu0 %v1545
        %v1547 = vpop.xlane.xlu0 %1546
        %v1548 = vsel %vm1346, %v1540, -inf
        %1549 = vmax.xlane.f32.xlu0 %v1548
        %v1550 = vpop.xlane.xlu0 %1549
        %v1551 = vsel %vm1346, %v1541, -inf
        %1552 = vmax.xlane.f32.xlu0 %v1551
        %v1553 = vpop.xlane.xlu0 %1552
        %v1554 = vsub.f32 %v1538, %v1544
        %v1555 = vsub.f32 %v1539, %v1547
        %v1556 = vsub.f32 %v1540, %v1550
        %v1557 = vsub.f32 %v1541, %v1553
        %v1558 = vmul.f32 %v1554, 1.442695
        %v1559 = vpow.pop %v1558
        %v1560 = vmul.f32 %v1555, 1.442695
        %v1561 = vpow.pop %v1560
        %v1562 = vmul.f32 %v1556, 1.442695
        %v1563 = vpow.pop %v1562
        %v1564 = vmul.f32 %v1557, 1.442695
        %v1565 = vpow.pop %v1564
        %v1566 = vsel %vm1346, %v1559, 0.0
        %1567 = vadd.xlane.f32.xlu0 %v1566
        %v1568 = vpop.xlane.xlu0 %1567
        %v1569 = vsel %vm1346, %v1561, 0.0
        %1570 = vadd.xlane.f32.xlu0 %v1569
        %v1571 = vpop.xlane.xlu0 %1570
        %v1572 = vsel %vm1346, %v1563, 0.0
        %1573 = vadd.xlane.f32.xlu0 %v1572
        %v1574 = vpop.xlane.xlu0 %1573
        %v1575 = vsel %vm1346, %v1565, 0.0
        %1576 = vadd.xlane.f32.xlu0 %v1575
        %v1577 = vpop.xlane.xlu0 %1576
        %v1578 = vpack.c.bf16 %v1559, %v1559
        %v1579 = vpack.c.bf16 %v1561, %v1561
        %v1580 = vpack.c.bf16 %v1563, %v1563
        %v1581 = vpack.c.bf16 %v1565, %v1565
        %v1582 = vld [vmem:[#allocation3] sm:$0xf]
        %v1583 = vld [vmem:[#allocation3 + $0x4] sm:$0xf]
        %v1584 = vld [vmem:[#allocation3 + $0x8] sm:$0xf]
        %v1585 = vld [vmem:[#allocation3 + $0xc] sm:$0xf]
        %v1587 = vsel %vm1346, %v1578, 0
        %vm1589 = vcmask 1043456
        %v1591 = vsel %vm1589, %v1582, 0
        %1593 = vmatprep.subr.bf16.mxu0 0
        %1594 = vmatpush1.bf16.msra.mxu0 %v1591
        %1595 = vmatprep.subr.bf16.mxu0 0
        %1596 = vmatpush1.bf16.msra.mxu0 0
        %1597 = vmatprep.subr.bf16.mxu0 0
        %1598 = vmatpush1.bf16.msra.mxu0 0
        %1599 = vmatprep.subr.bf16.mxu0 0
        %1600 = vmatpush1.bf16.msra.mxu0 0
        %1601 = vmatprep.subr.bf16.mxu0 0
        %1602 = vmatpush1.bf16.msra.mxu0 0
        %1603 = vmatprep.subr.bf16.mxu0 0
        %1604 = vmatpush1.bf16.msra.mxu0 0
        %1605 = vmatprep.subr.bf16.mxu0 0
        %1606 = vmatpush1.bf16.msra.mxu0 0
        %1607 = vmatprep.subr.bf16.mxu0 0
        %1608 = vmatpush1.bf16.msra.mxu0 0
        %1609 = vmatprep.subr.bf16.mxu0 0
        %1610 = vmatpush1.bf16.msra.mxu0 0
        %1611 = vmatprep.subr.bf16.mxu0 0
        %1612 = vmatpush1.bf16.msra.mxu0 0
        %1613 = vmatprep.subr.bf16.mxu0 0
        %1614 = vmatpush1.bf16.msra.mxu0 0
        %1615 = vmatprep.subr.bf16.mxu0 0
        %1616 = vmatpush1.bf16.msra.mxu0 0
        %1617 = vmatprep.subr.bf16.mxu0 0
        %1618 = vmatpush1.bf16.msra.mxu0 0
        %1619 = vmatprep.subr.bf16.mxu0 0
        %1620 = vmatpush1.bf16.msra.mxu0 0
        %1621 = vmatprep.subr.bf16.mxu0 0
        %1622 = vmatpush1.bf16.msra.mxu0 0
        %1623 = vmatprep.subr.bf16.mxu0 0
        %1624 = vmatpush1.bf16.msra.mxu0 0
        %1625 = vmatprep.mubr.bf16.mxu0 0
        %1626 = vmatmul.mubr.bf16.gmra.mrb[0].mxu0 %v1587
        %v1627 = vpop.f32.mrb[0].mxu0
        %v1628 = vadd.f32 0.0, %v1627
        %v1629 = vpop.f32.mrb[0].mxu0
        %v1630 = vpop.f32.mrb[0].mxu0
        %v1631 = vpop.f32.mrb[0].mxu0
        %1632 = vdwg.mxu0
        %v1634 = vsel %vm1346, %v1579, 0
        %v1637 = vsel %vm1589, %v1583, 0
        %1639 = vmatprep.subr.bf16.mxu0 0
        %1640 = vmatpush1.bf16.msra.mxu0 %v1637
        %1641 = vmatprep.subr.bf16.mxu0 0
        %1642 = vmatpush1.bf16.msra.mxu0 0
        %1643 = vmatprep.subr.bf16.mxu0 0
        %1644 = vmatpush1.bf16.msra.mxu0 0
        %1645 = vmatprep.subr.bf16.mxu0 0
        %1646 = vmatpush1.bf16.msra.mxu0 0
        %1647 = vmatprep.subr.bf16.mxu0 0
        %1648 = vmatpush1.bf16.msra.mxu0 0
        %1649 = vmatprep.subr.bf16.mxu0 0
        %1650 = vmatpush1.bf16.msra.mxu0 0
        %1651 = vmatprep.subr.bf16.mxu0 0
        %1652 = vmatpush1.bf16.msra.mxu0 0
        %1653 = vmatprep.subr.bf16.mxu0 0
        %1654 = vmatpush1.bf16.msra.mxu0 0
        %1655 = vmatprep.subr.bf16.mxu0 0
        %1656 = vmatpush1.bf16.msra.mxu0 0
        %1657 = vmatprep.subr.bf16.mxu0 0
        %1658 = vmatpush1.bf16.msra.mxu0 0
        %1659 = vmatprep.subr.bf16.mxu0 0
        %1660 = vmatpush1.bf16.msra.mxu0 0
        %1661 = vmatprep.subr.bf16.mxu0 0
        %1662 = vmatpush1.bf16.msra.mxu0 0
        %1663 = vmatprep.subr.bf16.mxu0 0
        %1664 = vmatpush1.bf16.msra.mxu0 0
        %1665 = vmatprep.subr.bf16.mxu0 0
        %1666 = vmatpush1.bf16.msra.mxu0 0
        %1667 = vmatprep.subr.bf16.mxu0 0
        %1668 = vmatpush1.bf16.msra.mxu0 0
        %1669 = vmatprep.subr.bf16.mxu0 0
        %1670 = vmatpush1.bf16.msra.mxu0 0
        %1671 = vmatprep.mubr.bf16.mxu0 0
        %1672 = vmatmul.mubr.bf16.gmra.mrb[0].mxu0 %v1634
        %v1673 = vpop.f32.mrb[0].mxu0
        %v1674 = vadd.f32 0.0, %v1673
        %v1675 = vpop.f32.mrb[0].mxu0
        %v1676 = vpop.f32.mrb[0].mxu0
        %v1677 = vpop.f32.mrb[0].mxu0
        %1678 = vdwg.mxu0
        %v1680 = vsel %vm1346, %v1580, 0
        %v1683 = vsel %vm1589, %v1584, 0
        %1685 = vmatprep.subr.bf16.mxu0 0
        %1686 = vmatpush1.bf16.msra.mxu0 %v1683
        %1687 = vmatprep.subr.bf16.mxu0 0
        %1688 = vmatpush1.bf16.msra.mxu0 0
        %1689 = vmatprep.subr.bf16.mxu0 0
        %1690 = vmatpush1.bf16.msra.mxu0 0
        %1691 = vmatprep.subr.bf16.mxu0 0
        %1692 = vmatpush1.bf16.msra.mxu0 0
        %1693 = vmatprep.subr.bf16.mxu0 0
        %1694 = vmatpush1.bf16.msra.mxu0 0
        %1695 = vmatprep.subr.bf16.mxu0 0
        %1696 = vmatpush1.bf16.msra.mxu0 0
        %1697 = vmatprep.subr.bf16.mxu0 0
        %1698 = vmatpush1.bf16.msra.mxu0 0
        %1699 = vmatprep.subr.bf16.mxu0 0
        %1700 = vmatpush1.bf16.msra.mxu0 0
        %1701 = vmatprep.subr.bf16.mxu0 0
        %1702 = vmatpush1.bf16.msra.mxu0 0
        %1703 = vmatprep.subr.bf16.mxu0 0
        %1704 = vmatpush1.bf16.msra.mxu0 0
        %1705 = vmatprep.subr.bf16.mxu0 0
        %1706 = vmatpush1.bf16.msra.mxu0 0
        %1707 = vmatprep.subr.bf16.mxu0 0
        %1708 = vmatpush1.bf16.msra.mxu0 0
        %1709 = vmatprep.subr.bf16.mxu0 0
        %1710 = vmatpush1.bf16.msra.mxu0 0
        %1711 = vmatprep.subr.bf16.mxu0 0
        %1712 = vmatpush1.bf16.msra.mxu0 0
        %1713 = vmatprep.subr.bf16.mxu0 0
        %1714 = vmatpush1.bf16.msra.mxu0 0
        %1715 = vmatprep.subr.bf16.mxu0 0
        %1716 = vmatpush1.bf16.msra.mxu0 0
        %1717 = vmatprep.mubr.bf16.mxu0 0
        %1718 = vmatmul.mubr.bf16.gmra.mrb[0].mxu0 %v1680
        %v1719 = vpop.f32.mrb[0].mxu0
        %v1720 = vadd.f32 0.0, %v1719
        %v1721 = vpop.f32.mrb[0].mxu0
        %v1722 = vpop.f32.mrb[0].mxu0
        %v1723 = vpop.f32.mrb[0].mxu0
        %1724 = vdwg.mxu0
        %v1726 = vsel %vm1346, %v1581, 0
        %v1729 = vsel %vm1589, %v1585, 0
        %1731 = vmatprep.subr.bf16.mxu0 0
        %1732 = vmatpush1.bf16.msra.mxu0 %v1729
        %1733 = vmatprep.subr.bf16.mxu0 0
        %1734 = vmatpush1.bf16.msra.mxu0 0
        %1735 = vmatprep.subr.bf16.mxu0 0
        %1736 = vmatpush1.bf16.msra.mxu0 0
        %1737 = vmatprep.subr.bf16.mxu0 0
        %1738 = vmatpush1.bf16.msra.mxu0 0
        %1739 = vmatprep.subr.bf16.mxu0 0
        %1740 = vmatpush1.bf16.msra.mxu0 0
        %1741 = vmatprep.subr.bf16.mxu0 0
        %1742 = vmatpush1.bf16.msra.mxu0 0
        %1743 = vmatprep.subr.bf16.mxu0 0
        %1744 = vmatpush1.bf16.msra.mxu0 0
        %1745 = vmatprep.subr.bf16.mxu0 0
        %1746 = vmatpush1.bf16.msra.mxu0 0
        %1747 = vmatprep.subr.bf16.mxu0 0
        %1748 = vmatpush1.bf16.msra.mxu0 0
        %1749 = vmatprep.subr.bf16.mxu0 0
        %1750 = vmatpush1.bf16.msra.mxu0 0
        %1751 = vmatprep.subr.bf16.mxu0 0
        %1752 = vmatpush1.bf16.msra.mxu0 0
        %1753 = vmatprep.subr.bf16.mxu0 0
        %1754 = vmatpush1.bf16.msra.mxu0 0
        %1755 = vmatprep.subr.bf16.mxu0 0
        %1756 = vmatpush1.bf16.msra.mxu0 0
        %1757 = vmatprep.subr.bf16.mxu0 0
        %1758 = vmatpush1.bf16.msra.mxu0 0
        %1759 = vmatprep.subr.bf16.mxu0 0
        %1760 = vmatpush1.bf16.msra.mxu0 0
        %1761 = vmatprep.subr.bf16.mxu0 0
        %1762 = vmatpush1.bf16.msra.mxu0 0
        %1763 = vmatprep.mubr.bf16.mxu0 0
        %1764 = vmatmul.mubr.bf16.gmra.mrb[0].mxu0 %v1726
        %v1765 = vpop.f32.mrb[0].mxu0
        %v1766 = vadd.f32 0.0, %v1765
        %v1767 = vpop.f32.mrb[0].mxu0
        %v1768 = vpop.f32.mrb[0].mxu0
        %v1769 = vpop.f32.mrb[0].mxu0
        %1770 = vdwg.mxu0
        %v1771 = vrcp.pop %v1568
        %v1772 = vrcp.pop %v1571
        %v1773 = vrcp.pop %v1574
        %v1774 = vrcp.pop %v1577
        %v1775 = vmul.f32 %v1628, %v1771
        %v1776 = vmul.f32 %v1674, %v1772
        %v1777 = vmul.f32 %v1720, %v1773
        %v1778 = vmul.f32 %v1766, %v1774
        %v1779 = vcombine.low %v1775, %v1777
        %v1780 = vcombine.high %v1775, %v1777
        %v1782 = vunpack.c.l.s4 1983009808
        %v1783 = vunpack.c.0.s8 %v1782
        %v1784 = vlaneseq
        %v1785 = vshrl.u32 %v1784, 7
        %v1786 = vsub.s32 %v1783, %v1785
        %v1787 = vrot.slane %v1779, %v1786
        %v1789 = vunpack.c.l.s4 1983009808
        %v1790 = vunpack.c.0.s8 %v1789
        %v1791 = vlaneseq
        %v1792 = vshrl.u32 %v1791, 7
        %v1793 = vsub.s32 %v1790, %v1792
        %v1794 = vrot.slane %v1780, %v1793
        %v1795 = vcombine.low %v1776, %v1778
        %v1796 = vcombine.high %v1776, %v1778
        %v1798 = vunpack.c.l.s4 1983009808
        %v1799 = vunpack.c.0.s8 %v1798
        %v1800 = vlaneseq
        %v1801 = vshrl.u32 %v1800, 7
        %v1802 = vsub.s32 %v1799, %v1801
        %v1803 = vrot.slane %v1795, %v1802
        %v1805 = vunpack.c.l.s4 1983009808
        %v1806 = vunpack.c.0.s8 %v1805
        %v1807 = vlaneseq
        %v1808 = vshrl.u32 %v1807, 7
        %v1809 = vsub.s32 %v1806, %v1808
        %v1810 = vrot.slane %v1796, %v1809
        %v1811 = vcombine.low %v1787, %v1803
        %v1812 = vcombine.high %v1787, %v1803
        %v1814 = vunpack.c.l.s4 1934713408
        %v1815 = vunpack.c.0.s8 %v1814
        %v1816 = vlaneseq
        %v1817 = vshrl.u32 %v1816, 7
        %v1818 = vsub.s32 %v1815, %v1817
        %v1819 = vrot.slane %v1811, %v1818
        %v1821 = vunpack.c.l.s4 1934713408
        %v1822 = vunpack.c.0.s8 %v1821
        %v1823 = vlaneseq
        %v1824 = vshrl.u32 %v1823, 7
        %v1825 = vsub.s32 %v1822, %v1824
        %v1826 = vrot.slane %v1812, %v1825
        %v1827 = vcombine.low %v1794, %v1810
        %v1828 = vcombine.high %v1794, %v1810
        %v1830 = vunpack.c.l.s4 1934713408
        %v1831 = vunpack.c.0.s8 %v1830
        %v1832 = vlaneseq
        %v1833 = vshrl.u32 %v1832, 7
        %v1834 = vsub.s32 %v1831, %v1833
        %v1835 = vrot.slane %v1827, %v1834
        %v1837 = vunpack.c.l.s4 1934713408
        %v1838 = vunpack.c.0.s8 %v1837
        %v1839 = vlaneseq
        %v1840 = vshrl.u32 %v1839, 7
        %v1841 = vsub.s32 %v1838, %v1840
        %v1842 = vrot.slane %v1828, %v1841
        %v1843 = vcombine.high %v1819, 0.0
        %v1844 = vcombine.high %v1826, 0.0
        %v1845 = vcombine.high %v1835, 0.0
        %v1846 = vcombine.high %v1842, 0.0
        %v1847 = vcombine.low %v1819, %v1826
        %v1849 = vunpack.c.l.s4 1983009808
        %v1850 = vunpack.c.0.s8 %v1849
        %v1851 = vlaneseq
        %v1852 = vshrl.u32 %v1851, 7
        %v1853 = vsub.s32 %v1850, %v1852
        %v1854 = vrot.slane %v1847, %v1853
        %v1855 = vcombine.low %v1843, %v1844
        %v1857 = vunpack.c.l.s4 1983009808
        %v1858 = vunpack.c.0.s8 %v1857
        %v1859 = vlaneseq
        %v1860 = vshrl.u32 %v1859, 7
        %v1861 = vsub.s32 %v1858, %v1860
        %v1862 = vrot.slane %v1855, %v1861
        %v1863 = vcombine.low %v1835, %v1842
        %v1865 = vunpack.c.l.s4 1983009808
        %v1866 = vunpack.c.0.s8 %v1865
        %v1867 = vlaneseq
        %v1868 = vshrl.u32 %v1867, 7
        %v1869 = vsub.s32 %v1866, %v1868
        %v1870 = vrot.slane %v1863, %v1869
        %v1871 = vcombine.low %v1845, %v1846
        %v1873 = vunpack.c.l.s4 1983009808
        %v1874 = vunpack.c.0.s8 %v1873
        %v1875 = vlaneseq
        %v1876 = vshrl.u32 %v1875, 7
        %v1877 = vsub.s32 %v1874, %v1876
        %v1878 = vrot.slane %v1871, %v1877
        %v1879 = vcombine.low %v1854, %v1862
        %v1880 = vcombine.high %v1854, %v1862
        %v1882 = vunpack.c.l.s4 1934713408
        %v1883 = vunpack.c.0.s8 %v1882
        %v1884 = vlaneseq
        %v1885 = vshrl.u32 %v1884, 7
        %v1886 = vsub.s32 %v1883, %v1885
        %v1887 = vrot.slane %v1879, %v1886
        %v1889 = vunpack.c.l.s4 1934713408
        %v1890 = vunpack.c.0.s8 %v1889
        %v1891 = vlaneseq
        %v1892 = vshrl.u32 %v1891, 7
        %v1893 = vsub.s32 %v1890, %v1892
        %v1894 = vrot.slane %v1880, %v1893
        %v1895 = vcombine.low %v1870, %v1878
        %v1896 = vcombine.high %v1870, %v1878
        %v1898 = vunpack.c.l.s4 1934713408
        %v1899 = vunpack.c.0.s8 %v1898
        %v1900 = vlaneseq
        %v1901 = vshrl.u32 %v1900, 7
        %v1902 = vsub.s32 %v1899, %v1901
        %v1903 = vrot.slane %v1895, %v1902
        %v1905 = vunpack.c.l.s4 1934713408
        %v1906 = vunpack.c.0.s8 %v1905
        %v1907 = vlaneseq
        %v1908 = vshrl.u32 %v1907, 7
        %v1909 = vsub.s32 %v1906, %v1908
        %v1910 = vrot.slane %v1896, %v1909
        %v1911 = vcombine.low %v1887, %v1903
        %v1912 = vcombine.high %v1887, %v1903
        %v1913 = vcombine.low %v1894, %v1910
        %v1914 = vcombine.high %v1894, %v1910
        %1916 = vrot.lane.b32.xlu0 %v1912, 8
        %v1917 = vpop.permute.xlu0 %1916
        %1920 = vrot.lane.b32.xlu0 %v1913, 16
        %v1921 = vpop.permute.xlu0 %1920
        %1924 = vrot.lane.b32.xlu0 %v1914, 24
        %v1925 = vpop.permute.xlu0 %1924
        %v1927 = vsel %vm1346, %v1911, %v1917
        %vm1928 = vcmask 130048
        %v1929 = vsel %vm1928, %v1927, %v1921
        %vm1930 = vcmask 195584
        %v1931 = vsel %vm1930, %v1929, %v1925
        %v1932 = vadd.f32 %v1931, %v1094
        %1933 = vst.msk [vmem:[%s595] sm:$0xff] %vm1095, %v1932
        %s1934 = sand.u32 %s334, 1
        %s1935 = scalar_lea.sflag [#allocation6], %s1934
        %s1936 = sand.u32 %s334, 1
        %s1937 = smul.addr %s1936, 8
        %s1938 = scalar_lea.vmem [#allocation16], %s1937
        // Predicated region
        $region101: #{tpu_custom_call.1} parent=67 // pred_check
          %p1939 = pneg %p344
        $region102: #{tpu_custom_call.1} parent=67 // pred_check_branch
          %1941 = sbr.rel (%p1939) target = $region104
        $region103: #{tpu_custom_call.1} parent=67 // pred_region
          %s1943 = ssub.s32 128, 128
          %1944 = vsyncadd %s1935, %s1943
          %s1945 = sadd.s32 %s41, %s40
          %s1946 = smul.addr %s1945, 128
          %s1947 = scalar_lea.hbm %s12, %s1946
          %s1949 = sshll.u32 %s1938, 4
          %s1950 = int_to_ptr.vmem [resolvable:$true] %s1949
          %1952 = dma.vmem_to_hbm [thread:$0]  %s1950, 128, %s1947, %s1935
        $region104: #{tpu_custom_call.1} parent=67 // pred_fallthru
          _
      $region68: #{tpu_custom_call.1} parent=5 // pred_fallthru
        _
      %p1953 = scmp.le.s32.totalorder 2, %s31
      // Predicated region
      $region105: #{tpu_custom_call.1} parent=5 // pred_check
        %p1954 = pneg %p1953
      $region106: #{tpu_custom_call.1} parent=5 // pred_check_branch
        %1956 = sbr.rel (%p1954) target = $region108
      $region107: #{tpu_custom_call.1} parent=5 // pred_region
        %s1957 = ssub.s32 %s31, 2
        // Predicated region
        $region109: #{tpu_custom_call.1} parent=107 // pred_check
          %p1958 = pneg %p350
        $region110: #{tpu_custom_call.1} parent=107 // pred_check_branch
          %1960 = sbr.rel (%p1958) target = $region112
        $region111: #{tpu_custom_call.1} parent=107 // pred_region
          %s1961 = sand.u32 %s335, 1
          %s1962 = scalar_lea.sflag [#allocation6], %s1961
          %s1963 = sand.u32 %s335, 1
          %s1964 = smul.addr %s1963, 8
          %s1965 = scalar_lea.vmem [#allocation16], %s1964
          %1966 = dma.done %s1962, 128
        $region112: #{tpu_custom_call.1} parent=107 // pred_fallthru
          _
      $region108: #{tpu_custom_call.1} parent=5 // pred_fallthru
        _
    $region6: #{tpu_custom_call.1} parent=1 // loop_footer
      %s35 = sadd.s32 1, %s31
    $region7: #{tpu_custom_call.1} parent=1 // loop_footer_branch
      %30 = sbr.rel target = $region3
    $region8: #{tpu_custom_call.1} parent=1 // loop_exit
      _
    %1967 = vsyncpa [#allocation5], 1
    %s1968 = scalar_lea.sflag [#allocation5], 1
    %1969 = vsyncpa %s1968, 1
    %1970 = vsyncpa [#allocation8], 1
    %s1971 = scalar_lea.sflag [#allocation8], 1
    %1972 = vsyncpa %s1971, 1
    %1973 = vsyncpa [#allocation11], 1
    %s1974 = scalar_lea.sflag [#allocation11], 1
    %1975 = vsyncpa %s1974, 1
    %1976 = vsyncpa [#allocation14], 1
    %1977 = vsyncpa [#allocation6], 1
    %s1978 = scalar_lea.sflag [#allocation6], 1
    %1979 = vsyncpa %s1978, 1

// kernel: tpu_custom_call.1
$region0: #{tpu_custom_call.1}
  #allocation0 [shape = 'u32[]', space=smem, size = 0x4, offset = 0x4, fixed_abs, tag = 'smem constant byte address 0x4 - core index']
  #allocation1 [shape = 'u32[144,128]{1,0:T(1,128)}', space=vmem, size = 0x12000, scoped, tag = 'internal scratch']
  #allocation2 [shape = 'bf16[4,8,8]{2,1,0:T(8,128)(2,1)}', space=vmem, size = 0x2000, scoped, tag = 'scratch operand']
  #allocation3 [shape = 'bf16[4,8,8]{2,1,0:T(8,128)(2,1)}', space=vmem, size = 0x2000, scoped, tag = 'scratch operand']
  %s0 = inlined_call_operand.hbm [shape: f32[2,8,32], index: 0, kind: input, shape index: {}]
  %s1 = inlined_call_operand.hbm [shape: f32[2,8,32], index: 1, kind: input, shape index: {}]
  %s2 = inlined_call_operand.hbm [shape: f32[2,8,32], index: 2, kind: input, shape index: {}]
  %s3 = inlined_call_operand.hbm [shape: s8[2,1,8,8], index: 3, kind: input, shape index: {}]
  %s4 = inlined_call_operand.vmem [shape: f32[1,32], index: 4, kind: input, shape index: {}]
  %s5 = inlined_call_operand.vmem [shape: f32[1,32], index: 5, kind: input, shape index: {}]
  %s6 = inlined_call_operand.vmem [shape: bf16[32,32], index: 6, kind: input, shape index: {}]
  %s7 = inlined_call_operand.hbm [shape: f32[1,32], index: 7, kind: input, shape index: {}]
  %s8 = inlined_call_operand.hbm [shape: bf16[32,32], index: 8, kind: input, shape index: {}]
  %s9 = inlined_call_operand.hbm [shape: f32[1,32], index: 9, kind: input, shape index: {}]
  %s10 = inlined_call_operand.vmem [shape: bf16[32,32], index: 10, kind: input, shape index: {}]
  %s11 = inlined_call_operand.vmem [shape: f32[1,32], index: 11, kind: input, shape index: {}]
  %s12 = inlined_call_operand.hbm [shape: f32[2,8,32], index: 12, kind: output, shape index: {}]
  %s13 = sld [smem:[#allocation0]]
  $region113: #{tpu_custom_call.1} parent=0
    _
  %s15 = ssub.s32 1, %s13
  %s16 = scalar_select 0, %s15, %s13
  $region1: #{tpu_custom_call.1} parent=0
    #allocation4 [shape = 'u8[8192]{0}', space=vmem, size = 0x2000, scoped, tag = 'input window, operand 0']
    #allocation5 [shape = 's32[2]{0}', space=sflag, size = 0x8, scoped, tag = 'scoped memory for tpu_custom_call.1']
    #allocation6 [shape = 's32[2]{0}', space=sflag, size = 0x8, scoped, tag = 'scoped memory for tpu_custom_call.1']
    #allocation7 [shape = 'u8[8192]{0}', space=vmem, size = 0x2000, scoped, tag = 'input window, operand 1']
    #allocation8 [shape = 's32[2]{0}', space=sflag, size = 0x8, scoped, tag = 'scoped memory for tpu_custom_call.1']
    #allocation9 [shape = 'u8[8192]{0}', space=vmem, size = 0x2000, scoped, tag = 'input window, operand 2']
    #allocation10 [shape = 'u8[2048]{0}', space=vmem, size = 0x800, scoped, tag = 'input window, operand 3']
    #allocation11 [shape = 's32[2]{0}', space=sflag, size = 0x8, scoped, tag = 'scoped memory for tpu_custom_call.1']
    #allocation12 [shape = 'u8[512]{0}', space=vmem, size = 0x400, scoped, tag = 'input window, operand 7, single buffered']
    #allocation13 [shape = 'u8[8192]{0}', space=vmem, size = 0x2000, scoped, tag = 'input window, operand 8, single buffered']
    #allocation14 [shape = 's32[1]{0}', space=sflag, size = 0x4, scoped, tag = 'scoped memory for tpu_custom_call.1']
    #allocation15 [shape = 'u8[512]{0}', space=vmem, size = 0x400, scoped, tag = 'input window, operand 9, single buffered']
    #allocation16 [shape = 'u8[8192]{0}', space=vmem, size = 0x2000, scoped, tag = 'output window, operand 0']
    %17 = vsyncpa [#allocation5], 0
    %s18 = scalar_lea.sflag [#allocation5], 1
    %19 = vsyncpa %s18, 0
    %20 = vsyncpa [#allocation8], 0
    %s21 = scalar_lea.sflag [#allocation8], 1
    %22 = vsyncpa %s21, 0
    %23 = vsyncpa [#allocation11], 0
    %s24 = scalar_lea.sflag [#allocation11], 1
    %25 = vsyncpa %s24, 0
    %26 = vsyncpa [#allocation14], 0
    %27 = vsyncpa [#allocation6], 0
    %s28 = scalar_lea.sflag [#allocation6], 1
    %29 = vsyncpa %s28, 0
    loop: start=0, step=1, limit=4
    $region2: #{tpu_custom_call.1} parent=1 // loop_pre_header
      _
    $region3: #{tpu_custom_call.1} parent=1 // loop_header
      %s31 = sphi 0, %s35
      %p32 = scmp.ge.s32.totalorder %s31, 4
      %s38 = sphi 0, %s50
      %s39 = sphi 0, %s46
      %s40 = sphi 0, %s38
      %s41 = sphi 0, %s39
      %s42 = sphi 0, %s40
      %s43 = sphi 0, %s41
      %s55 = sphi 0, %s57
      %s58 = sphi 0, %s55
      %s59 = sphi 0, %s58
      %s75 = sphi 0, %s59
      %s81 = sphi 0, %s83
      %s84 = sphi 0, %s81
      %s85 = sphi 0, %s84
      %s101 = sphi 0, %s85
      %s107 = sphi 0, %s109
      %s110 = sphi 0, %s107
      %s111 = sphi 0, %s110
      %s127 = sphi 0, %s111
      %s135 = sphi 0, %s137
      %s138 = sphi 0, %s135
      %s139 = sphi 0, %s138
      %s155 = sphi 0, %s139
      %s159 = sphi 0, %s159
      %s161 = sphi 0, %s159
      %s162 = sphi 0, %s161
      %s176 = sphi 0, %s162
      %s180 = sphi 0, %s180
      %s182 = sphi 0, %s180
      %s183 = sphi 0, %s182
      %s197 = sphi 0, %s183
      %s201 = sphi 0, %s201
      %s203 = sphi 0, %s201
      %s204 = sphi 0, %s203
      %s218 = sphi 0, %s204
      %s222 = sphi 0, %s222
      %s224 = sphi 0, %s222
      %s225 = sphi 0, %s224
      %s239 = sphi 0, %s225
      %s243 = sphi 0, %s243
      %s245 = sphi 0, %s243
      %s246 = sphi 0, %s245
      %s260 = sphi 0, %s246
      %s264 = sphi 0, %s264
      %s266 = sphi 0, %s264
      %s267 = sphi 0, %s266
      %s281 = sphi 0, %s267
      %s285 = sphi 0, %s285
      %s287 = sphi 0, %s285
      %s288 = sphi 0, %s287
      %s302 = sphi 0, %s288
      %s306 = sphi 0, %s306
      %s308 = sphi 0, %s306
      %s309 = sphi 0, %s308
      %s323 = sphi 0, %s309
      %s331 = sphi 0, %s333
      %s334 = sphi 0, %s331
      %s335 = sphi 0, %s334
      %s351 = sphi 0, %s335
    $region4: #{tpu_custom_call.1} parent=1 // loop_header_branch
      %34 = sbr.rel (%p32) target = $region8
    $region5: #{tpu_custom_call.1} parent=1 // loop_body
      %s36 = ssub.s32 %s31, 1
      %s37 = ssub.s32 %s31, 2
      %s44 = sadd.s32 1, %s39
      %p45 = scmp.ge.s32.totalorder %s44, 1
      %s46 = scalar_select %p45, 0, %s44
      %s47 = sadd.s32 1, %s38
      %s48 = scalar_select %p45, %s47, %s38
      %p49 = scmp.ge.s32.totalorder %s48, 2
      %s50 = scalar_select %p49, 0, %s48
      %s51 = ssub.s32 %s38, %s50
      %s52 = ssub.s32 %s39, %s46
      %s53 = sor.u32 %s51, %s52
      %p54 = scmp.eq.s32.totalorder %s53, 0
      %s56 = sadd.s32 %s55, 1
      %s57 = scalar_select %p54, %s55, %s56
      %p60 = pneg %p54
      %p61 = scmp.eq.s32.totalorder %s31, 1
      %p62 = por %p60, %p61
      %p63 = scmp.ne.s32.totalorder %s55, %s58
      %p64 = scmp.eq.s32.totalorder %s31, 0
      %p65 = por %p63, %p64
      %p66 = scmp.ne.s32.totalorder %s55, %s58
      %p67 = scmp.eq.s32.totalorder %s36, 1
      %p68 = por %p66, %p67
      %p69 = scmp.ne.s32.totalorder %s58, %s59
      %p70 = scmp.eq.s32.totalorder %s36, 0
      %p71 = por %p69, %p70
      %p72 = scmp.ne.s32.totalorder %s58, %s59
      %p73 = scmp.eq.s32.totalorder %s37, 1
      %p74 = por %p72, %p73
      %p76 = scmp.ne.s32.totalorder %s59, %s75
      %p77 = scmp.eq.s32.totalorder %s37, 0
      %p78 = por %p76, %p77
      %s79 = ssub.s32 %s38, %s50
      %p80 = scmp.eq.s32.totalorder %s79, 0
      %s82 = sadd.s32 %s81, 1
      %s83 = scalar_select %p80, %s81, %s82
      %p86 = pneg %p80
      %p87 = scmp.eq.s32.totalorder %s31, 1
      %p88 = por %p86, %p87
      %p89 = scmp.ne.s32.totalorder %s81, %s84
      %p90 = scmp.eq.s32.totalorder %s31, 0
      %p91 = por %p89, %p90
      %p92 = scmp.ne.s32.totalorder %s81, %s84
      %p93 = scmp.eq.s32.totalorder %s36, 1
      %p94 = por %p92, %p93
      %p95 = scmp.ne.s32.totalorder %s84, %s85
      %p96 = scmp.eq.s32.totalorder %s36, 0
      %p97 = por %p95, %p96
      %p98 = scmp.ne.s32.totalorder %s84, %s85
      %p99 = scmp.eq.s32.totalorder %s37, 1
      %p100 = por %p98, %p99
      %p102 = scmp.ne.s32.totalorder %s85, %s101
      %p103 = scmp.eq.s32.totalorder %s37, 0
      %p104 = por %p102, %p103
      %s105 = ssub.s32 %s38, %s50
      %p106 = scmp.eq.s32.totalorder %s105, 0
      %s108 = sadd.s32 %s107, 1
      %s109 = scalar_select %p106, %s107, %s108
      %p112 = pneg %p106
      %p113 = scmp.eq.s32.totalorder %s31, 1
      %p114 = por %p112, %p113
      %p115 = scmp.ne.s32.totalorder %s107, %s110
      %p116 = scmp.eq.s32.totalorder %s31, 0
      %p117 = por %p115, %p116
      %p118 = scmp.ne.s32.totalorder %s107, %s110
      %p119 = scmp.eq.s32.totalorder %s36, 1
      %p120 = por %p118, %p119
      %p121 = scmp.ne.s32.totalorder %s110, %s111
      %p122 = scmp.eq.s32.totalorder %s36, 0
      %p123 = por %p121, %p122
      %p124 = scmp.ne.s32.totalorder %s110, %s111
      %p125 = scmp.eq.s32.totalorder %s37, 1
      %p126 = por %p124, %p125
      %p128 = scmp.ne.s32.totalorder %s111, %s127
      %p129 = scmp.eq.s32.totalorder %s37, 0
      %p130 = por %p128, %p129
      %s131 = ssub.s32 %s38, %s50
      %s132 = ssub.s32 %s39, %s46
      %s133 = sor.u32 %s131, %s132
      %p134 = scmp.eq.s32.totalorder %s133, 0
      %s136 = sadd.s32 %s135, 1
      %s137 = scalar_select %p134, %s135, %s136
      %p140 = pneg %p134
      %p141 = scmp.eq.s32.totalorder %s31, 1
      %p142 = por %p140, %p141
      %p143 = scmp.ne.s32.totalorder %s135, %s138
      %p144 = scmp.eq.s32.totalorder %s31, 0
      %p145 = por %p143, %p144
      %p146 = scmp.ne.s32.totalorder %s135, %s138
      %p147 = scmp.eq.s32.totalorder %s36, 1
      %p148 = por %p146, %p147
      %p149 = scmp.ne.s32.totalorder %s138, %s139
      %p150 = scmp.eq.s32.totalorder %s36, 0
      %p151 = por %p149, %p150
      %p152 = scmp.ne.s32.totalorder %s138, %s139
      %p153 = scmp.eq.s32.totalorder %s37, 1
      %p154 = por %p152, %p153
      %p156 = scmp.ne.s32.totalorder %s139, %s155
      %p157 = scmp.eq.s32.totalorder %s37, 0
      %p158 = por %p156, %p157
      %s160 = sadd.s32 %s159, 1
      %p163 = scmp.eq.s32.totalorder %s31, 1
      %p164 = scmp.ne.s32.totalorder %s159, %s161
      %p165 = scmp.eq.s32.totalorder %s31, 0
      %p166 = por %p164, %p165
      %p167 = scmp.ne.s32.totalorder %s159, %s161
      %p168 = scmp.eq.s32.totalorder %s36, 1
      %p169 = por %p167, %p168
      %p170 = scmp.ne.s32.totalorder %s161, %s162
      %p171 = scmp.eq.s32.totalorder %s36, 0
      %p172 = por %p170, %p171
      %p173 = scmp.ne.s32.totalorder %s161, %s162
      %p174 = scmp.eq.s32.totalorder %s37, 1
      %p175 = por %p173, %p174
      %p177 = scmp.ne.s32.totalorder %s162, %s176
      %p178 = scmp.eq.s32.totalorder %s37, 0
      %p179 = por %p177, %p178
      %s181 = sadd.s32 %s180, 1
      %p184 = scmp.eq.s32.totalorder %s31, 1
      %p185 = scmp.ne.s32.totalorder %s180, %s182
      %p186 = scmp.eq.s32.totalorder %s31, 0
      %p187 = por %p185, %p186
      %p188 = scmp.ne.s32.totalorder %s180, %s182
      %p189 = scmp.eq.s32.totalorder %s36, 1
      %p190 = por %p188, %p189
      %p191 = scmp.ne.s32.totalorder %s182, %s183
      %p192 = scmp.eq.s32.totalorder %s36, 0
      %p193 = por %p191, %p192
      %p194 = scmp.ne.s32.totalorder %s182, %s183
      %p195 = scmp.eq.s32.totalorder %s37, 1
      %p196 = por %p194, %p195
      %p198 = scmp.ne.s32.totalorder %s183, %s197
      %p199 = scmp.eq.s32.totalorder %s37, 0
      %p200 = por %p198, %p199
      %s202 = sadd.s32 %s201, 1
      %p205 = scmp.eq.s32.totalorder %s31, 1
      %p206 = scmp.ne.s32.totalorder %s201, %s203
      %p207 = scmp.eq.s32.totalorder %s31, 0
      %p208 = por %p206, %p207
      %p209 = scmp.ne.s32.totalorder %s201, %s203
      %p210 = scmp.eq.s32.totalorder %s36, 1
      %p211 = por %p209, %p210
      %p212 = scmp.ne.s32.totalorder %s203, %s204
      %p213 = scmp.eq.s32.totalorder %s36, 0
      %p214 = por %p212, %p213
      %p215 = scmp.ne.s32.totalorder %s203, %s204
      %p216 = scmp.eq.s32.totalorder %s37, 1
      %p217 = por %p215, %p216
      %p219 = scmp.ne.s32.totalorder %s204, %s218
      %p220 = scmp.eq.s32.totalorder %s37, 0
      %p221 = por %p219, %p220
      %s223 = sadd.s32 %s222, 1
      %p226 = scmp.eq.s32.totalorder %s31, 1
      %p227 = scmp.ne.s32.totalorder %s222, %s224
      %p228 = scmp.eq.s32.totalorder %s31, 0
      %p229 = por %p227, %p228
      %p230 = scmp.ne.s32.totalorder %s222, %s224
      %p231 = scmp.eq.s32.totalorder %s36, 1
      %p232 = por %p230, %p231
      %p233 = scmp.ne.s32.totalorder %s224, %s225
      %p234 = scmp.eq.s32.totalorder %s36, 0
      %p235 = por %p233, %p234
      %p236 = scmp.ne.s32.totalorder %s224, %s225
      %p237 = scmp.eq.s32.totalorder %s37, 1
      %p238 = por %p236, %p237
      %p240 = scmp.ne.s32.totalorder %s225, %s239
      %p241 = scmp.eq.s32.totalorder %s37, 0
      %p242 = por %p240, %p241
      %s244 = sadd.s32 %s243, 1
      %p247 = scmp.eq.s32.totalorder %s31, 1
      %p248 = scmp.ne.s32.totalorder %s243, %s245
      %p249 = scmp.eq.s32.totalorder %s31, 0
      %p250 = por %p248, %p249
      %p251 = scmp.ne.s32.totalorder %s243, %s245
      %p252 = scmp.eq.s32.totalorder %s36, 1
      %p253 = por %p251, %p252
      %p254 = scmp.ne.s32.totalorder %s245, %s246
      %p255 = scmp.eq.s32.totalorder %s36, 0
      %p256 = por %p254, %p255
      %p257 = scmp.ne.s32.totalorder %s245, %s246
      %p258 = scmp.eq.s32.totalorder %s37, 1
      %p259 = por %p257, %p258
      %p261 = scmp.ne.s32.totalorder %s246, %s260
      %p262 = scmp.eq.s32.totalorder %s37, 0
      %p263 = por %p261, %p262
      %s265 = sadd.s32 %s264, 1
      %p268 = scmp.eq.s32.totalorder %s31, 1
      %p269 = scmp.ne.s32.totalorder %s264, %s266
      %p270 = scmp.eq.s32.totalorder %s31, 0
      %p271 = por %p269, %p270
      %p272 = scmp.ne.s32.totalorder %s264, %s266
      %p273 = scmp.eq.s32.totalorder %s36, 1
      %p274 = por %p272, %p273
      %p275 = scmp.ne.s32.totalorder %s266, %s267
      %p276 = scmp.eq.s32.totalorder %s36, 0
      %p277 = por %p275, %p276
      %p278 = scmp.ne.s32.totalorder %s266, %s267
      %p279 = scmp.eq.s32.totalorder %s37, 1
      %p280 = por %p278, %p279
      %p282 = scmp.ne.s32.totalorder %s267, %s281
      %p283 = scmp.eq.s32.totalorder %s37, 0
      %p284 = por %p282, %p283
      %s286 = sadd.s32 %s285, 1
      %p289 = scmp.eq.s32.totalorder %s31, 1
      %p290 = scmp.ne.s32.totalorder %s285, %s287
      %p291 = scmp.eq.s32.totalorder %s31, 0
      %p292 = por %p290, %p291
      %p293 = scmp.ne.s32.totalorder %s285, %s287
      %p294 = scmp.eq.s32.totalorder %s36, 1
      %p295 = por %p293, %p294
      %p296 = scmp.ne.s32.totalorder %s287, %s288
      %p297 = scmp.eq.s32.totalorder %s36, 0
      %p298 = por %p296, %p297
      %p299 = scmp.ne.s32.totalorder %s287, %s288
      %p300 = scmp.eq.s32.totalorder %s37, 1
      %p301 = por %p299, %p300
      %p303 = scmp.ne.s32.totalorder %s288, %s302
      %p304 = scmp.eq.s32.totalorder %s37, 0
      %p305 = por %p303, %p304
      %s307 = sadd.s32 %s306, 1
      %p310 = scmp.eq.s32.totalorder %s31, 1
      %p311 = scmp.ne.s32.totalorder %s306, %s308
      %p312 = scmp.eq.s32.totalorder %s31, 0
      %p313 = por %p311, %p312
      %p314 = scmp.ne.s32.totalorder %s306, %s308
      %p315 = scmp.eq.s32.totalorder %s36, 1
      %p316 = por %p314, %p315
      %p317 = scmp.ne.s32.totalorder %s308, %s309
      %p318 = scmp.eq.s32.totalorder %s36, 0
      %p319 = por %p317, %p318
      %p320 = scmp.ne.s32.totalorder %s308, %s309
      %p321 = scmp.eq.s32.totalorder %s37, 1
      %p322 = por %p320, %p321
      %p324 = scmp.ne.s32.totalorder %s309, %s323
      %p325 = scmp.eq.s32.totalorder %s37, 0
      %p326 = por %p324, %p325
      %s327 = ssub.s32 %s38, %s50
      %s328 = ssub.s32 %s39, %s46
      %s329 = sor.u32 %s327, %s328
      %p330 = scmp.eq.s32.totalorder %s329, 0
      %s332 = sadd.s32 %s331, 1
      %s333 = scalar_select %p330, %s331, %s332
      %p336 = pneg %p330
      %p337 = scmp.eq.s32.totalorder %s31, 1
      %p338 = por %p336, %p337
      %p339 = scmp.ne.s32.totalorder %s331, %s334
      %p340 = scmp.eq.s32.totalorder %s31, 0
      %p341 = por %p339, %p340
      %p342 = scmp.ne.s32.totalorder %s331, %s334
      %p343 = scmp.eq.s32.totalorder %s36, 1
      %p344 = por %p342, %p343
      %p345 = scmp.ne.s32.totalorder %s334, %s335
      %p346 = scmp.eq.s32.totalorder %s36, 0
      %p347 = por %p345, %p346
      %p348 = scmp.ne.s32.totalorder %s334, %s335
      %p349 = scmp.eq.s32.totalorder %s37, 1
      %p350 = por %p348, %p349
      %p352 = scmp.ne.s32.totalorder %s335, %s351
      %p353 = scmp.eq.s32.totalorder %s37, 0
      %p354 = por %p352, %p353
      %p355 = scmp.le.s32.totalorder 1, %s31
      %p356 = scmp.lt.s32.totalorder %s31, 3
      %p357 = pnand %p355, %p356
      %p358 = pneg %p357
      // Predicated region
      $region9: #{tpu_custom_call.1} parent=5 // pred_check
        _
      $region10: #{tpu_custom_call.1} parent=5 // pred_check_branch
        %360 = sbr.rel (%p357) target = $region12
      $region11: #{tpu_custom_call.1} parent=5 // pred_region
        %s361 = ssub.s32 %s31, 1
        // Predicated region
        $region13: #{tpu_custom_call.1} parent=11 // pred_check
          %p362 = pneg %p172
        $region14: #{tpu_custom_call.1} parent=11 // pred_check_branch
          %364 = sbr.rel (%p362) target = $region16
        $region15: #{tpu_custom_call.1} parent=11 // pred_region
          _
        $region16: #{tpu_custom_call.1} parent=11 // pred_fallthru
          _
        // Predicated region
        $region17: #{tpu_custom_call.1} parent=11 // pred_check
          %p365 = pneg %p193
        $region18: #{tpu_custom_call.1} parent=11 // pred_check_branch
          %367 = sbr.rel (%p365) target = $region20
        $region19: #{tpu_custom_call.1} parent=11 // pred_region
          _
        $region20: #{tpu_custom_call.1} parent=11 // pred_fallthru
          _
        // Predicated region
        $region21: #{tpu_custom_call.1} parent=11 // pred_check
          %p368 = pneg %p214
        $region22: #{tpu_custom_call.1} parent=11 // pred_check_branch
          %370 = sbr.rel (%p368) target = $region24
        $region23: #{tpu_custom_call.1} parent=11 // pred_region
          _
        $region24: #{tpu_custom_call.1} parent=11 // pred_fallthru
          _
        // Predicated region
        $region25: #{tpu_custom_call.1} parent=11 // pred_check
          %p371 = pneg %p235
        $region26: #{tpu_custom_call.1} parent=11 // pred_check_branch
          %373 = sbr.rel (%p371) target = $region28
        $region27: #{tpu_custom_call.1} parent=11 // pred_region
          %s375 = ssub.s32 16, 16
          %376 = vsyncadd [#allocation11], %s375
          %s378 = sshll.u32 [#allocation12], 4
          %s379 = int_to_ptr.vmem [resolvable:$true] %s378
          %381 = dma.hbm_to_vmem [thread:$0]  %s7, 16, %s379, [#allocation11]
        $region28: #{tpu_custom_call.1} parent=11 // pred_fallthru
          _
        // Predicated region
        $region29: #{tpu_custom_call.1} parent=11 // pred_check
          %p382 = pneg %p256
        $region30: #{tpu_custom_call.1} parent=11 // pred_check_branch
          %384 = sbr.rel (%p382) target = $region32
        $region31: #{tpu_custom_call.1} parent=11 // pred_region
          %s386 = ssub.s32 256, 256
          %387 = vsyncadd [#allocation14], %s386
          %s388 = sshll.u32 [#allocation13], 4
          %s389 = int_to_ptr.vmem [resolvable:$true] %s388
          %394 = dma.hbm_to_vmem [thread:$0]  %s8, 256, %s389, [#allocation14], 64, 64, 4
        $region32: #{tpu_custom_call.1} parent=11 // pred_fallthru
          _
        // Predicated region
        $region33: #{tpu_custom_call.1} parent=11 // pred_check
          %p395 = pneg %p277
        $region34: #{tpu_custom_call.1} parent=11 // pred_check_branch
          %397 = sbr.rel (%p395) target = $region36
        $region35: #{tpu_custom_call.1} parent=11 // pred_region
          %s399 = ssub.s32 16, 16
          %400 = vsyncadd [#allocation14], %s399
          %s402 = sshll.u32 [#allocation15], 4
          %s403 = int_to_ptr.vmem [resolvable:$true] %s402
          %405 = dma.hbm_to_vmem [thread:$0]  %s9, 16, %s403, [#allocation14]
        $region36: #{tpu_custom_call.1} parent=11 // pred_fallthru
          _
        // Predicated region
        $region37: #{tpu_custom_call.1} parent=11 // pred_check
          %p406 = pneg %p298
        $region38: #{tpu_custom_call.1} parent=11 // pred_check_branch
          %408 = sbr.rel (%p406) target = $region40
        $region39: #{tpu_custom_call.1} parent=11 // pred_region
          _
        $region40: #{tpu_custom_call.1} parent=11 // pred_fallthru
          _
        // Predicated region
        $region41: #{tpu_custom_call.1} parent=11 // pred_check
          %p409 = pneg %p319
        $region42: #{tpu_custom_call.1} parent=11 // pred_check_branch
          %411 = sbr.rel (%p409) target = $region44
        $region43: #{tpu_custom_call.1} parent=11 // pred_region
          _
        $region44: #{tpu_custom_call.1} parent=11 // pred_fallthru
          _
      $region12: #{tpu_custom_call.1} parent=5 // pred_fallthru
        _
      %p412 = scmp.lt.s32.totalorder %s31, 2
      // Predicated region
      $region45: #{tpu_custom_call.1} parent=5 // pred_check
        %p413 = pneg %p412
      $region46: #{tpu_custom_call.1} parent=5 // pred_check_branch
        %415 = sbr.rel (%p413) target = $region48
      $region47: #{tpu_custom_call.1} parent=5 // pred_region
        // Predicated region
        $region49: #{tpu_custom_call.1} parent=47 // pred_check
          %p416 = pneg %p65
        $region50: #{tpu_custom_call.1} parent=47 // pred_check_branch
          %418 = sbr.rel (%p416) target = $region52
        $region51: #{tpu_custom_call.1} parent=47 // pred_region
          %s419 = sand.u32 %s55, 1
          %s420 = scalar_lea.sflag [#allocation5], %s419
          %s421 = sand.u32 %s55, 1
          %s422 = smul.addr %s421, 8
          %s423 = scalar_lea.vmem [#allocation4], %s422
          %s425 = ssub.s32 128, 128
          %426 = vsyncadd %s420, %s425
          %s427 = sadd.s32 %s39, %s38
          %s428 = smul.addr %s427, 128
          %s429 = scalar_lea.hbm %s0, %s428
          %s431 = sshll.u32 %s423, 4
          %s432 = int_to_ptr.vmem [resolvable:$true] %s431
          %434 = dma.hbm_to_vmem [thread:$0]  %s429, 128, %s432, %s420
        $region52: #{tpu_custom_call.1} parent=47 // pred_fallthru
          _
        // Predicated region
        $region53: #{tpu_custom_call.1} parent=47 // pred_check
          %p435 = pneg %p91
        $region54: #{tpu_custom_call.1} parent=47 // pred_check_branch
          %437 = sbr.rel (%p435) target = $region56
        $region55: #{tpu_custom_call.1} parent=47 // pred_region
          %s438 = sand.u32 %s31, 1
          %s439 = scalar_lea.sflag [#allocation8], %s438
          %s440 = sand.u32 %s81, 1
          %s441 = smul.addr %s440, 8
          %s442 = scalar_lea.vmem [#allocation7], %s441
          %s444 = ssub.s32 128, 128
          %445 = vsyncadd %s439, %s444
          %s446 = smul.addr %s38, 128
          %s447 = scalar_lea.hbm %s1, %s446
          %s449 = sshll.u32 %s442, 4
          %s450 = int_to_ptr.vmem [resolvable:$true] %s449
          %452 = dma.hbm_to_vmem [thread:$0]  %s447, 128, %s450, %s439
        $region56: #{tpu_custom_call.1} parent=47 // pred_fallthru
          _
        // Predicated region
        $region57: #{tpu_custom_call.1} parent=47 // pred_check
          %p453 = pneg %p117
        $region58: #{tpu_custom_call.1} parent=47 // pred_check_branch
          %455 = sbr.rel (%p453) target = $region60
        $region59: #{tpu_custom_call.1} parent=47 // pred_region
          %s456 = sand.u32 %s31, 1
          %s457 = scalar_lea.sflag [#allocation8], %s456
          %s458 = sand.u32 %s107, 1
          %s459 = smul.addr %s458, 8
          %s460 = scalar_lea.vmem [#allocation9], %s459
          %s462 = ssub.s32 128, 128
          %463 = vsyncadd %s457, %s462
          %s464 = smul.addr %s38, 128
          %s465 = scalar_lea.hbm %s2, %s464
          %s467 = sshll.u32 %s460, 4
          %s468 = int_to_ptr.vmem [resolvable:$true] %s467
          %470 = dma.hbm_to_vmem [thread:$0]  %s465, 128, %s468, %s457
        $region60: #{tpu_custom_call.1} parent=47 // pred_fallthru
          _
        // Predicated region
        $region61: #{tpu_custom_call.1} parent=47 // pred_check
          %p471 = pneg %p145
        $region62: #{tpu_custom_call.1} parent=47 // pred_check_branch
          %473 = sbr.rel (%p471) target = $region64
        $region63: #{tpu_custom_call.1} parent=47 // pred_region
          %s474 = sand.u32 %s31, 1
          %s475 = scalar_lea.sflag [#allocation11], %s474
          %s476 = sand.u32 %s135, 1
          %s477 = smul.addr %s476, 2
          %s478 = scalar_lea.vmem [#allocation10], %s477
          %s480 = ssub.s32 32, 32
          %481 = vsyncadd %s475, %s480
          %s482 = sadd.s32 %s39, %s38
          %s483 = smul.addr %s482, 32
          %s484 = scalar_lea.hbm %s3, %s483
          %s486 = sshll.u32 %s478, 4
          %s487 = int_to_ptr.vmem [resolvable:$true] %s486
          %489 = dma.hbm_to_vmem [thread:$0]  %s484, 32, %s487, %s475
        $region64: #{tpu_custom_call.1} parent=47 // pred_fallthru
          _
      $region48: #{tpu_custom_call.1} parent=5 // pred_fallthru
        _
      %p490 = scmp.le.s32.totalorder 1, %s31
      %p491 = scmp.lt.s32.totalorder %s31, 3
      %p492 = pnand %p490, %p491
      %p493 = pneg %p492
      // Predicated region
      $region65: #{tpu_custom_call.1} parent=5 // pred_check
        _
      $region66: #{tpu_custom_call.1} parent=5 // pred_check_branch
        %495 = sbr.rel (%p492) target = $region68
      $region67: #{tpu_custom_call.1} parent=5 // pred_region
        %s496 = ssub.s32 %s31, 1
        %s497 = sand.u32 %s58, 1
        %s498 = scalar_lea.sflag [#allocation5], %s497
        %s499 = sand.u32 %s58, 1
        %s500 = smul.addr %s499, 8
        %s501 = scalar_lea.vmem [#allocation4], %s500
        // Predicated region
        $region69: #{tpu_custom_call.1} parent=67 // pred_check
          %p502 = pneg %p71
        $region70: #{tpu_custom_call.1} parent=67 // pred_check_branch
          %504 = sbr.rel (%p502) target = $region72
        $region71: #{tpu_custom_call.1} parent=67 // pred_region
          %505 = dma.done %s498, 128
        $region72: #{tpu_custom_call.1} parent=67 // pred_fallthru
          _
        %s506 = sand.u32 %s36, 1
        %s507 = scalar_lea.sflag [#allocation8], %s506
        %s508 = sand.u32 %s84, 1
        %s509 = smul.addr %s508, 8
        %s510 = scalar_lea.vmem [#allocation7], %s509
        // Predicated region
        $region73: #{tpu_custom_call.1} parent=67 // pred_check
          %p511 = pneg %p97
        $region74: #{tpu_custom_call.1} parent=67 // pred_check_branch
          %513 = sbr.rel (%p511) target = $region76
        $region75: #{tpu_custom_call.1} parent=67 // pred_region
          %514 = dma.done %s507, 128
        $region76: #{tpu_custom_call.1} parent=67 // pred_fallthru
          _
        %s515 = sand.u32 %s36, 1
        %s516 = scalar_lea.sflag [#allocation8], %s515
        %s517 = sand.u32 %s110, 1
        %s518 = smul.addr %s517, 8
        %s519 = scalar_lea.vmem [#allocation9], %s518
        // Predicated region
        $region77: #{tpu_custom_call.1} parent=67 // pred_check
          %p520 = pneg %p123
        $region78: #{tpu_custom_call.1} parent=67 // pred_check_branch
          %522 = sbr.rel (%p520) target = $region80
        $region79: #{tpu_custom_call.1} parent=67 // pred_region
          %523 = dma.done %s516, 128
        $region80: #{tpu_custom_call.1} parent=67 // pred_fallthru
          _
        %s524 = sand.u32 %s36, 1
        %s525 = scalar_lea.sflag [#allocation11], %s524
        %s526 = sand.u32 %s138, 1
        %s527 = smul.addr %s526, 2
        %s528 = scalar_lea.vmem [#allocation10], %s527
        // Predicated region
        $region81: #{tpu_custom_call.1} parent=67 // pred_check
          %p529 = pneg %p151
        $region82: #{tpu_custom_call.1} parent=67 // pred_check_branch
          %531 = sbr.rel (%p529) target = $region84
        $region83: #{tpu_custom_call.1} parent=67 // pred_region
          %532 = dma.done %s525, 32
        $region84: #{tpu_custom_call.1} parent=67 // pred_fallthru
          _
        // Predicated region
        $region85: #{tpu_custom_call.1} parent=67 // pred_check
          %p533 = pneg %p235
        $region86: #{tpu_custom_call.1} parent=67 // pred_check_branch
          %535 = sbr.rel (%p533) target = $region88
        $region87: #{tpu_custom_call.1} parent=67 // pred_region
          %536 = dma.done [#allocation11], 16
        $region88: #{tpu_custom_call.1} parent=67 // pred_fallthru
          _
        // Predicated region
        $region89: #{tpu_custom_call.1} parent=67 // pred_check
          %p537 = pneg %p256
        $region90: #{tpu_custom_call.1} parent=67 // pred_check_branch
          %539 = sbr.rel (%p537) target = $region92
        $region91: #{tpu_custom_call.1} parent=67 // pred_region
          %540 = dma.done [#allocation14], 256
        $region92: #{tpu_custom_call.1} parent=67 // pred_fallthru
          _
        // Predicated region
        $region93: #{tpu_custom_call.1} parent=67 // pred_check
          %p541 = pneg %p277
        $region94: #{tpu_custom_call.1} parent=67 // pred_check_branch
          %543 = sbr.rel (%p541) target = $region96
        $region95: #{tpu_custom_call.1} parent=67 // pred_region
          %544 = dma.done [#allocation14], 16
        $region96: #{tpu_custom_call.1} parent=67 // pred_fallthru
          _
        %s545 = sand.u32 %s58, 1
        %s546 = scalar_lea.sflag [#allocation5], %s545
        %s547 = sand.u32 %s58, 1
        %s548 = smul.addr %s547, 8
        %s549 = scalar_lea.vmem [#allocation4], %s548
        %p550 = pneg %p71
        %p551 = pneg %p68
        %s552 = sand.u32 %s36, 1
        %s553 = scalar_lea.sflag [#allocation8], %s552
        %s554 = sand.u32 %s84, 1
        %s555 = smul.addr %s554, 8
        %s556 = scalar_lea.vmem [#allocation7], %s555
        %p557 = pneg %p97
        %p558 = pneg %p94
        %s559 = sand.u32 %s36, 1
        %s560 = scalar_lea.sflag [#allocation8], %s559
        %s561 = sand.u32 %s110, 1
        %s562 = smul.addr %s561, 8
        %s563 = scalar_lea.vmem [#allocation9], %s562
        %p564 = pneg %p123
        %p565 = pneg %p120
        %s566 = sand.u32 %s36, 1
        %s567 = scalar_lea.sflag [#allocation11], %s566
        %s568 = sand.u32 %s138, 1
        %s569 = smul.addr %s568, 2
        %s570 = scalar_lea.vmem [#allocation10], %s569
        %p571 = pneg %p151
        %p572 = pneg %p148
        %p573 = pneg %p172
        %p574 = pneg %p169
        %p575 = pneg %p193
        %p576 = pneg %p190
        %p577 = pneg %p214
        %p578 = pneg %p211
        %p579 = pneg %p235
        %p580 = pneg %p232
        %p581 = pneg %p256
        %p582 = pneg %p253
        %p583 = pneg %p277
        %p584 = pneg %p274
        %p585 = pneg %p298
        %p586 = pneg %p295
        %p587 = pneg %p319
        %p588 = pneg %p316
        %p589 = pneg %p347
        %p590 = pneg %p344
        %s591 = sand.u32 %s334, 1
        %s592 = scalar_lea.sflag [#allocation6], %s591
        %s593 = sand.u32 %s334, 1
        %s594 = smul.addr %s593, 8
        %s595 = scalar_lea.vmem [#allocation16], %s594
        %v599 = vld [vmem:[%s4] sm:$0x1]
        %v600 = vld [vmem:[%s5] sm:$0x1]
        %p601 = scmp.eq.s32.totalorder %s41, 0
        // Predicated region
        $region97: #{tpu_custom_call.1} parent=67 // pred_check
          %p602 = pneg %p601
        $region98: #{tpu_custom_call.1} parent=67 // pred_check_branch
          %604 = sbr.rel (%p602) target = $region100
        $region99: #{tpu_custom_call.1} parent=67 // pred_region
          %v605 = vld [vmem:[%s510] sm:$0xff]
          %vm606 = vcmask 261120
          %v607 = vsel %vm606, %v605, 0.0
          %608 = vadd.xlane.f32.xlu0 %v607
          %v609 = vpop.xlane.xlu0 %608
          %v610 = vrcp.pop 32.0
          %v611 = vmul.f32 %v609, %v610
          %v612 = vsub.f32 %v605, %v611
          %v613 = vmul.f32 %v612, %v612
          %v614 = vsel %vm606, %v613, 0.0
          %615 = vadd.xlane.f32.xlu0 %v614
          %v616 = vpop.xlane.xlu0 %615
          %v617 = vmul.f32 %v616, %v610
          %v618 = vadd.f32 %v617, 1e-05
          %v619 = vrsqrt.pop %v618
          %v620 = vmul.f32 %v612, %v619
          %v622 = vlaneseq
          %v623 = vshrl.u32 %v622, 7
          %v624 = vsub.s32 0, %v623
          %v625 = vrot.slane %v599, %v624
          %v627 = vmul.f32 %v620, %v625
          %v629 = vlaneseq
          %v630 = vshrl.u32 %v629, 7
          %v631 = vsub.s32 0, %v630
          %v632 = vrot.slane %v600, %v631
          %v634 = vadd.f32 %v627, %v632
          %v635 = vpack.c.bf16 %v634, %v634
          %v636 = vld [vmem:[%s519] sm:$0xff]
          %v637 = vsel %vm606, %v636, 0.0
          %638 = vadd.xlane.f32.xlu0 %v637
          %v639 = vpop.xlane.xlu0 %638
          %v640 = vmul.f32 %v639, %v610
          %v641 = vsub.f32 %v636, %v640
          %v642 = vmul.f32 %v641, %v641
          %v643 = vsel %vm606, %v642, 0.0
          %644 = vadd.xlane.f32.xlu0 %v643
          %v645 = vpop.xlane.xlu0 %644
          %v646 = vmul.f32 %v645, %v610
          %v647 = vadd.f32 %v646, 1e-05
          %v648 = vrsqrt.pop %v647
          %v649 = vmul.f32 %v641, %v648
          %v650 = vmul.f32 %v649, %v625
          %v651 = vadd.f32 %v650, %v632
          %v652 = vpack.c.bf16 %v651, %v651
          %v653 = vld [vmem:[#allocation13] sm:$0xf]
          %v654 = vld [vmem:[#allocation13 + $0x4] sm:$0xf]
          %v655 = vld [vmem:[#allocation13 + $0x8] sm:$0xf]
          %v656 = vld [vmem:[#allocation13 + $0xc] sm:$0xf]
          %v657 = vld [vmem:[#allocation15] sm:$0x1]
          %v659 = vlaneseq
          %v660 = vshrl.u32 %v659, 7
          %v661 = vsub.s32 0, %v660
          %v662 = vrot.slane %v657, %v661
          %v668 = vunpack.c.l.b16 %v653
          %v669 = vunpack.c.l.b16 %v654
          %v670 = vunpack.c.l.b16 %v655
          %v671 = vunpack.c.l.b16 %v656
          %v672 = vpack.c.b16 %v669, %v668
          %v673 = vpack.c.b16 %v671, %v670
          %v677 = vsel %vm606, %v635, 0
          %679 = vmatprep.subr.bf16.mxu0 0
          %680 = vmatpush1.bf16.msra.mxu0 %v672
          %681 = vmatprep.subr.bf16.mxu0 0
          %682 = vmatpush1.bf16.msra.mxu0 %v673
          %683 = vmatprep.subr.bf16.mxu0 0
          %684 = vmatpush1.bf16.msra.mxu0 0
          %685 = vmatprep.subr.bf16.mxu0 0
          %686 = vmatpush1.bf16.msra.mxu0 0
          %687 = vmatprep.subr.bf16.mxu0 0
          %688 = vmatpush1.bf16.msra.mxu0 0
          %689 = vmatprep.subr.bf16.mxu0 0
          %690 = vmatpush1.bf16.msra.mxu0 0
          %691 = vmatprep.subr.bf16.mxu0 0
          %692 = vmatpush1.bf16.msra.mxu0 0
          %693 = vmatprep.subr.bf16.mxu0 0
          %694 = vmatpush1.bf16.msra.mxu0 0
          %695 = vmatprep.subr.bf16.mxu0 0
          %696 = vmatpush1.bf16.msra.mxu0 0
          %697 = vmatprep.subr.bf16.mxu0 0
          %698 = vmatpush1.bf16.msra.mxu0 0
          %699 = vmatprep.subr.bf16.mxu0 0
          %700 = vmatpush1.bf16.msra.mxu0 0
          %701 = vmatprep.subr.bf16.mxu0 0
          %702 = vmatpush1.bf16.msra.mxu0 0
          %703 = vmatprep.subr.bf16.mxu0 0
          %704 = vmatpush1.bf16.msra.mxu0 0
          %705 = vmatprep.subr.bf16.mxu0 0
          %706 = vmatpush1.bf16.msra.mxu0 0
          %707 = vmatprep.subr.bf16.mxu0 0
          %708 = vmatpush1.bf16.msra.mxu0 0
          %709 = vmatprep.subr.bf16.mxu0 0
          %710 = vmatpush1.bf16.msra.mxu0 0
          %711 = vmatprep.mubr.bf16.mxu0 0
          %712 = vmatmul.mubr.bf16.gmra.mrb[0].mxu0 %v677
          %v713 = vpop.f32.mrb[0].mxu0
          %v714 = vadd.f32 %v662, %v713
          %v715 = vpop.f32.mrb[0].mxu0
          %v716 = vpop.f32.mrb[0].mxu0
          %v717 = vpop.f32.mrb[0].mxu0
          %718 = vdwg.mxu0
          %v719 = vld [vmem:[%s10] sm:$0xf]
          %v720 = vld [vmem:[%s10 + $0x4] sm:$0xf]
          %v721 = vld [vmem:[%s10 + $0x8] sm:$0xf]
          %v722 = vld [vmem:[%s10 + $0xc] sm:$0xf]
          %v723 = vld [vmem:[%s11] sm:$0x1]
          %v725 = vlaneseq
          %v726 = vshrl.u32 %v725, 7
          %v727 = vsub.s32 0, %v726
          %v728 = vrot.slane %v723, %v727
          %v734 = vunpack.c.l.b16 %v719
          %v735 = vunpack.c.l.b16 %v720
          %v736 = vunpack.c.l.b16 %v721
          %v737 = vunpack.c.l.b16 %v722
          %v738 = vpack.c.b16 %v735, %v734
          %v739 = vpack.c.b16 %v737, %v736
          %v743 = vsel %vm606, %v652, 0
          %745 = vmatprep.subr.bf16.mxu0 0
          %746 = vmatpush1.bf16.msra.mxu0 %v738
          %747 = vmatprep.subr.bf16.mxu0 0
          %748 = vmatpush1.bf16.msra.mxu0 %v739
          %749 = vmatprep.subr.bf16.mxu0 0
          %750 = vmatpush1.bf16.msra.mxu0 0
          %751 = vmatprep.subr.bf16.mxu0 0
          %752 = vmatpush1.bf16.msra.mxu0 0
          %753 = vmatprep.subr.bf16.mxu0 0
          %754 = vmatpush1.bf16.msra.mxu0 0
          %755 = vmatprep.subr.bf16.mxu0 0
          %756 = vmatpush1.bf16.msra.mxu0 0
          %757 = vmatprep.subr.bf16.mxu0 0
          %758 = vmatpush1.bf16.msra.mxu0 0
          %759 = vmatprep.subr.bf16.mxu0 0
          %760 = vmatpush1.bf16.msra.mxu0 0
          %761 = vmatprep.subr.bf16.mxu0 0
          %762 = vmatpush1.bf16.msra.mxu0 0
          %763 = vmatprep.subr.bf16.mxu0 0
          %764 = vmatpush1.bf16.msra.mxu0 0
          %765 = vmatprep.subr.bf16.mxu0 0
          %766 = vmatpush1.bf16.msra.mxu0 0
          %767 = vmatprep.subr.bf16.mxu0 0
          %768 = vmatpush1.bf16.msra.mxu0 0
          %769 = vmatprep.subr.bf16.mxu0 0
          %770 = vmatpush1.bf16.msra.mxu0 0
          %771 = vmatprep.subr.bf16.mxu0 0
          %772 = vmatpush1.bf16.msra.mxu0 0
          %773 = vmatprep.subr.bf16.mxu0 0
          %774 = vmatpush1.bf16.msra.mxu0 0
          %775 = vmatprep.subr.bf16.mxu0 0
          %776 = vmatpush1.bf16.msra.mxu0 0
          %777 = vmatprep.mubr.bf16.mxu0 0
          %778 = vmatmul.mubr.bf16.gmra.mrb[0].mxu0 %v743
          %v779 = vpop.f32.mrb[0].mxu0
          %v780 = vadd.f32 %v728, %v779
          %v781 = vpop.f32.mrb[0].mxu0
          %v782 = vpop.f32.mrb[0].mxu0
          %v783 = vpop.f32.mrb[0].mxu0
          %784 = vdwg.mxu0
          %786 = vrot.lane.b32.xlu0 %v714, 120
          %v787 = vpop.permute.xlu0 %786
          %789 = vrot.lane.b32.xlu0 %v714, 112
          %v790 = vpop.permute.xlu0 %789
          %792 = vrot.lane.b32.xlu0 %v714, 104
          %v793 = vpop.permute.xlu0 %792
          %v795 = vcombine.low %v714, %v790
          %v796 = vcombine.high %v714, %v790
          %v798 = vunpack.c.l.s4 1983009808
          %v799 = vunpack.c.0.s8 %v798
          %v800 = vlaneseq
          %v801 = vshrl.u32 %v800, 7
          %v802 = vsub.s32 %v799, %v801
          %v803 = vrot.slane %v795, %v802
          %v805 = vunpack.c.l.s4 1983009808
          %v806 = vunpack.c.0.s8 %v805
          %v807 = vlaneseq
          %v808 = vshrl.u32 %v807, 7
          %v809 = vsub.s32 %v806, %v808
          %v810 = vrot.slane %v796, %v809
          %v811 = vcombine.low %v787, %v793
          %v812 = vcombine.high %v787, %v793
          %v814 = vunpack.c.l.s4 1983009808
          %v815 = vunpack.c.0.s8 %v814
          %v816 = vlaneseq
          %v817 = vshrl.u32 %v816, 7
          %v818 = vsub.s32 %v815, %v817
          %v819 = vrot.slane %v811, %v818
          %v821 = vunpack.c.l.s4 1983009808
          %v822 = vunpack.c.0.s8 %v821
          %v823 = vlaneseq
          %v824 = vshrl.u32 %v823, 7
          %v825 = vsub.s32 %v822, %v824
          %v826 = vrot.slane %v812, %v825
          %v827 = vcombine.low %v803, %v819
          %v828 = vcombine.high %v803, %v819
          %v830 = vunpack.c.l.s4 1934713408
          %v831 = vunpack.c.0.s8 %v830
          %v832 = vlaneseq
          %v833 = vshrl.u32 %v832, 7
          %v834 = vsub.s32 %v831, %v833
          %v835 = vrot.slane %v827, %v834
          %v837 = vunpack.c.l.s4 1934713408
          %v838 = vunpack.c.0.s8 %v837
          %v839 = vlaneseq
          %v840 = vshrl.u32 %v839, 7
          %v841 = vsub.s32 %v838, %v840
          %v842 = vrot.slane %v828, %v841
          %v843 = vcombine.low %v810, %v826
          %v844 = vcombine.high %v810, %v826
          %v846 = vunpack.c.l.s4 1934713408
          %v847 = vunpack.c.0.s8 %v846
          %v848 = vlaneseq
          %v849 = vshrl.u32 %v848, 7
          %v850 = vsub.s32 %v847, %v849
          %v851 = vrot.slane %v843, %v850
          %v853 = vunpack.c.l.s4 1934713408
          %v854 = vunpack.c.0.s8 %v853
          %v855 = vlaneseq
          %v856 = vshrl.u32 %v855, 7
          %v857 = vsub.s32 %v854, %v856
          %v858 = vrot.slane %v844, %v857
          %v859 = vcombine.high %v835, 0.0
          %v860 = vcombine.high %v842, 0.0
          %v861 = vcombine.high %v851, 0.0
          %v862 = vcombine.high %v858, 0.0
          %v863 = vcombine.low %v835, %v842
          %v865 = vunpack.c.l.s4 1983009808
          %v866 = vunpack.c.0.s8 %v865
          %v867 = vlaneseq
          %v868 = vshrl.u32 %v867, 7
          %v869 = vsub.s32 %v866, %v868
          %v870 = vrot.slane %v863, %v869
          %v871 = vcombine.low %v859, %v860
          %v873 = vunpack.c.l.s4 1983009808
          %v874 = vunpack.c.0.s8 %v873
          %v875 = vlaneseq
          %v876 = vshrl.u32 %v875, 7
          %v877 = vsub.s32 %v874, %v876
          %v878 = vrot.slane %v871, %v877
          %v879 = vcombine.low %v851, %v858
          %v881 = vunpack.c.l.s4 1983009808
          %v882 = vunpack.c.0.s8 %v881
          %v883 = vlaneseq
          %v884 = vshrl.u32 %v883, 7
          %v885 = vsub.s32 %v882, %v884
          %v886 = vrot.slane %v879, %v885
          %v887 = vcombine.low %v861, %v862
          %v889 = vunpack.c.l.s4 1983009808
          %v890 = vunpack.c.0.s8 %v889
          %v891 = vlaneseq
          %v892 = vshrl.u32 %v891, 7
          %v893 = vsub.s32 %v890, %v892
          %v894 = vrot.slane %v887, %v893
          %v895 = vcombine.low %v870, %v878
          %v896 = vcombine.high %v870, %v878
          %v898 = vunpack.c.l.s4 1934713408
          %v899 = vunpack.c.0.s8 %v898
          %v900 = vlaneseq
          %v901 = vshrl.u32 %v900, 7
          %v902 = vsub.s32 %v899, %v901
          %v903 = vrot.slane %v895, %v902
          %v905 = vunpack.c.l.s4 1934713408
          %v906 = vunpack.c.0.s8 %v905
          %v907 = vlaneseq
          %v908 = vshrl.u32 %v907, 7
          %v909 = vsub.s32 %v906, %v908
          %v910 = vrot.slane %v896, %v909
          %v911 = vcombine.low %v886, %v894
          %v912 = vcombine.high %v886, %v894
          %v914 = vunpack.c.l.s4 1934713408
          %v915 = vunpack.c.0.s8 %v914
          %v916 = vlaneseq
          %v917 = vshrl.u32 %v916, 7
          %v918 = vsub.s32 %v915, %v917
          %v919 = vrot.slane %v911, %v918
          %v921 = vunpack.c.l.s4 1934713408
          %v922 = vunpack.c.0.s8 %v921
          %v923 = vlaneseq
          %v924 = vshrl.u32 %v923, 7
          %v925 = vsub.s32 %v922, %v924
          %v926 = vrot.slane %v912, %v925
          %v927 = vcombine.low %v903, %v919
          %v928 = vcombine.high %v903, %v919
          %v929 = vcombine.low %v910, %v926
          %v930 = vcombine.high %v910, %v926
          %v931 = vpack.c.bf16 %v927, %v927
          %v932 = vpack.c.bf16 %v928, %v928
          %v933 = vpack.c.bf16 %v929, %v929
          %v934 = vpack.c.bf16 %v930, %v930
          %vm935 = vcmask 60416
          %936 = vst.msk [vmem:[#allocation2] sm:$0xf] %vm935, %v931
          %937 = vst.msk [vmem:[#allocation2 + $0x4] sm:$0xf] %vm935, %v932
          %938 = vst.msk [vmem:[#allocation2 + $0x8] sm:$0xf] %vm935, %v933
          %939 = vst.msk [vmem:[#allocation2 + $0xc] sm:$0xf] %vm935, %v934
          %941 = vrot.lane.b32.xlu0 %v780, 120
          %v942 = vpop.permute.xlu0 %941
          %944 = vrot.lane.b32.xlu0 %v780, 112
          %v945 = vpop.permute.xlu0 %944
          %947 = vrot.lane.b32.xlu0 %v780, 104
          %v948 = vpop.permute.xlu0 %947
          %v950 = vcombine.low %v780, %v945
          %v951 = vcombine.high %v780, %v945
          %v953 = vunpack.c.l.s4 1983009808
          %v954 = vunpack.c.0.s8 %v953
          %v955 = vlaneseq
          %v956 = vshrl.u32 %v955, 7
          %v957 = vsub.s32 %v954, %v956
          %v958 = vrot.slane %v950, %v957
          %v960 = vunpack.c.l.s4 1983009808
          %v961 = vunpack.c.0.s8 %v960
          %v962 = vlaneseq
          %v963 = vshrl.u32 %v962, 7
          %v964 = vsub.s32 %v961, %v963
          %v965 = vrot.slane %v951, %v964
          %v966 = vcombine.low %v942, %v948
          %v967 = vcombine.high %v942, %v948
          %v969 = vunpack.c.l.s4 1983009808
          %v970 = vunpack.c.0.s8 %v969
          %v971 = vlaneseq
          %v972 = vshrl.u32 %v971, 7
          %v973 = vsub.s32 %v970, %v972
          %v974 = vrot.slane %v966, %v973
          %v976 = vunpack.c.l.s4 1983009808
          %v977 = vunpack.c.0.s8 %v976
          %v978 = vlaneseq
          %v979 = vshrl.u32 %v978, 7
          %v980 = vsub.s32 %v977, %v979
          %v981 = vrot.slane %v967, %v980
          %v982 = vcombine.low %v958, %v974
          %v983 = vcombine.high %v958, %v974
          %v985 = vunpack.c.l.s4 1934713408
          %v986 = vunpack.c.0.s8 %v985
          %v987 = vlaneseq
          %v988 = vshrl.u32 %v987, 7
          %v989 = vsub.s32 %v986, %v988
          %v990 = vrot.slane %v982, %v989
          %v992 = vunpack.c.l.s4 1934713408
          %v993 = vunpack.c.0.s8 %v992
          %v994 = vlaneseq
          %v995 = vshrl.u32 %v994, 7
          %v996 = vsub.s32 %v993, %v995
          %v997 = vrot.slane %v983, %v996
          %v998 = vcombine.low %v965, %v981
          %v999 = vcombine.high %v965, %v981
          %v1001 = vunpack.c.l.s4 1934713408
          %v1002 = vunpack.c.0.s8 %v1001
          %v1003 = vlaneseq
          %v1004 = vshrl.u32 %v1003, 7
          %v1005 = vsub.s32 %v1002, %v1004
          %v1006 = vrot.slane %v998, %v1005
          %v1008 = vunpack.c.l.s4 1934713408
          %v1009 = vunpack.c.0.s8 %v1008
          %v1010 = vlaneseq
          %v1011 = vshrl.u32 %v1010, 7
          %v1012 = vsub.s32 %v1009, %v1011
          %v1013 = vrot.slane %v999, %v1012
          %v1014 = vcombine.high %v990, 0.0
          %v1015 = vcombine.high %v997, 0.0
          %v1016 = vcombine.high %v1006, 0.0
          %v1017 = vcombine.high %v1013, 0.0
          %v1018 = vcombine.low %v990, %v997
          %v1020 = vunpack.c.l.s4 1983009808
          %v1021 = vunpack.c.0.s8 %v1020
          %v1022 = vlaneseq
          %v1023 = vshrl.u32 %v1022, 7
          %v1024 = vsub.s32 %v1021, %v1023
          %v1025 = vrot.slane %v1018, %v1024
          %v1026 = vcombine.low %v1014, %v1015
          %v1028 = vunpack.c.l.s4 1983009808
          %v1029 = vunpack.c.0.s8 %v1028
          %v1030 = vlaneseq
          %v1031 = vshrl.u32 %v1030, 7
          %v1032 = vsub.s32 %v1029, %v1031
          %v1033 = vrot.slane %v1026, %v1032
          %v1034 = vcombine.low %v1006, %v1013
          %v1036 = vunpack.c.l.s4 1983009808
          %v1037 = vunpack.c.0.s8 %v1036
          %v1038 = vlaneseq
          %v1039 = vshrl.u32 %v1038, 7
          %v1040 = vsub.s32 %v1037, %v1039
          %v1041 = vrot.slane %v1034, %v1040
          %v1042 = vcombine.low %v1016, %v1017
          %v1044 = vunpack.c.l.s4 1983009808
          %v1045 = vunpack.c.0.s8 %v1044
          %v1046 = vlaneseq
          %v1047 = vshrl.u32 %v1046, 7
          %v1048 = vsub.s32 %v1045, %v1047
          %v1049 = vrot.slane %v1042, %v1048
          %v1050 = vcombine.low %v1025, %v1033
          %v1051 = vcombine.high %v1025, %v1033
          %v1053 = vunpack.c.l.s4 1934713408
          %v1054 = vunpack.c.0.s8 %v1053
          %v1055 = vlaneseq
          %v1056 = vshrl.u32 %v1055, 7
          %v1057 = vsub.s32 %v1054, %v1056
          %v1058 = vrot.slane %v1050, %v1057
          %v1060 = vunpack.c.l.s4 1934713408
          %v1061 = vunpack.c.0.s8 %v1060
          %v1062 = vlaneseq
          %v1063 = vshrl.u32 %v1062, 7
          %v1064 = vsub.s32 %v1061, %v1063
          %v1065 = vrot.slane %v1051, %v1064
          %v1066 = vcombine.low %v1041, %v1049
          %v1067 = vcombine.high %v1041, %v1049
          %v1069 = vunpack.c.l.s4 1934713408
          %v1070 = vunpack.c.0.s8 %v1069
          %v1071 = vlaneseq
          %v1072 = vshrl.u32 %v1071, 7
          %v1073 = vsub.s32 %v1070, %v1072
          %v1074 = vrot.slane %v1066, %v1073
          %v1076 = vunpack.c.l.s4 1934713408
          %v1077 = vunpack.c.0.s8 %v1076
          %v1078 = vlaneseq
          %v1079 = vshrl.u32 %v1078, 7
          %v1080 = vsub.s32 %v1077, %v1079
          %v1081 = vrot.slane %v1067, %v1080
          %v1082 = vcombine.low %v1058, %v1074
          %v1083 = vcombine.high %v1058, %v1074
          %v1084 = vcombine.low %v1065, %v1081
          %v1085 = vcombine.high %v1065, %v1081
          %v1086 = vpack.c.bf16 %v1082, %v1082
          %v1087 = vpack.c.bf16 %v1083, %v1083
          %v1088 = vpack.c.bf16 %v1084, %v1084
          %v1089 = vpack.c.bf16 %v1085, %v1085
          %1090 = vst.msk [vmem:[#allocation3] sm:$0xf] %vm935, %v1086
          %1091 = vst.msk [vmem:[#allocation3 + $0x4] sm:$0xf] %vm935, %v1087
          %1092 = vst.msk [vmem:[#allocation3 + $0x8] sm:$0xf] %vm935, %v1088
          %1093 = vst.msk [vmem:[#allocation3 + $0xc] sm:$0xf] %vm935, %v1089
        $region100: #{tpu_custom_call.1} parent=67 // pred_fallthru
          _
        %v1094 = vld [vmem:[%s501] sm:$0xff]
        %vm1095 = vcmask 261120
        %v1096 = vsel %vm1095, %v1094, 0.0
        %1097 = vadd.xlane.f32.xlu0 %v1096
        %v1098 = vpop.xlane.xlu0 %1097
        %v1099 = vrcp.pop 32.0
        %v1100 = vmul.f32 %v1098, %v1099
        %v1101 = vsub.f32 %v1094, %v1100
        %v1102 = vmul.f32 %v1101, %v1101
        %v1103 = vsel %vm1095, %v1102, 0.0
        %1104 = vadd.xlane.f32.xlu0 %v1103
        %v1105 = vpop.xlane.xlu0 %1104
        %v1106 = vmul.f32 %v1105, %v1099
        %v1107 = vadd.f32 %v1106, 1e-05
        %v1108 = vrsqrt.pop %v1107
        %v1109 = vmul.f32 %v1101, %v1108
        %v1111 = vlaneseq
        %v1112 = vshrl.u32 %v1111, 7
        %v1113 = vsub.s32 0, %v1112
        %v1114 = vrot.slane %v599, %v1113
        %v1116 = vmul.f32 %v1109, %v1114
        %v1118 = vlaneseq
        %v1119 = vshrl.u32 %v1118, 7
        %v1120 = vsub.s32 0, %v1119
        %v1121 = vrot.slane %v600, %v1120
        %v1123 = vadd.f32 %v1116, %v1121
        %v1124 = vpack.c.bf16 %v1123, %v1123
        %v1125 = vld [vmem:[%s6] sm:$0xf]
        %v1126 = vld [vmem:[%s6 + $0x4] sm:$0xf]
        %v1127 = vld [vmem:[%s6 + $0x8] sm:$0xf]
        %v1128 = vld [vmem:[%s6 + $0xc] sm:$0xf]
        %v1129 = vld [vmem:[#allocation12] sm:$0x1]
        %v1131 = vlaneseq
        %v1132 = vshrl.u32 %v1131, 7
        %v1133 = vsub.s32 0, %v1132
        %v1134 = vrot.slane %v1129, %v1133
        %v1140 = vunpack.c.l.b16 %v1125
        %v1141 = vunpack.c.l.b16 %v1126
        %v1142 = vunpack.c.l.b16 %v1127
        %v1143 = vunpack.c.l.b16 %v1128
        %v1144 = vpack.c.b16 %v1141, %v1140
        %v1145 = vpack.c.b16 %v1143, %v1142
        %v1149 = vsel %vm1095, %v1124, 0
        %1151 = vmatprep.subr.bf16.mxu0 0
        %1152 = vmatpush1.bf16.msra.mxu0 %v1144
        %1153 = vmatprep.subr.bf16.mxu0 0
        %1154 = vmatpush1.bf16.msra.mxu0 %v1145
        %1155 = vmatprep.subr.bf16.mxu0 0
        %1156 = vmatpush1.bf16.msra.mxu0 0
        %1157 = vmatprep.subr.bf16.mxu0 0
        %1158 = vmatpush1.bf16.msra.mxu0 0
        %1159 = vmatprep.subr.bf16.mxu0 0
        %1160 = vmatpush1.bf16.msra.mxu0 0
        %1161 = vmatprep.subr.bf16.mxu0 0
        %1162 = vmatpush1.bf16.msra.mxu0 0
        %1163 = vmatprep.subr.bf16.mxu0 0
        %1164 = vmatpush1.bf16.msra.mxu0 0
        %1165 = vmatprep.subr.bf16.mxu0 0
        %1166 = vmatpush1.bf16.msra.mxu0 0
        %1167 = vmatprep.subr.bf16.mxu0 0
        %1168 = vmatpush1.bf16.msra.mxu0 0
        %1169 = vmatprep.subr.bf16.mxu0 0
        %1170 = vmatpush1.bf16.msra.mxu0 0
        %1171 = vmatprep.subr.bf16.mxu0 0
        %1172 = vmatpush1.bf16.msra.mxu0 0
        %1173 = vmatprep.subr.bf16.mxu0 0
        %1174 = vmatpush1.bf16.msra.mxu0 0
        %1175 = vmatprep.subr.bf16.mxu0 0
        %1176 = vmatpush1.bf16.msra.mxu0 0
        %1177 = vmatprep.subr.bf16.mxu0 0
        %1178 = vmatpush1.bf16.msra.mxu0 0
        %1179 = vmatprep.subr.bf16.mxu0 0
        %1180 = vmatpush1.bf16.msra.mxu0 0
        %1181 = vmatprep.subr.bf16.mxu0 0
        %1182 = vmatpush1.bf16.msra.mxu0 0
        %1183 = vmatprep.mubr.bf16.mxu0 0
        %1184 = vmatmul.mubr.bf16.gmra.mrb[0].mxu0 %v1149
        %v1185 = vpop.f32.mrb[0].mxu0
        %v1186 = vadd.f32 %v1134, %v1185
        %v1187 = vpop.f32.mrb[0].mxu0
        %v1188 = vpop.f32.mrb[0].mxu0
        %v1189 = vpop.f32.mrb[0].mxu0
        %1190 = vdwg.mxu0
        %v1191 = vmul.f32 %v1186, 0.35355338
        %1193 = vrot.lane.b32.xlu0 %v1191, 120
        %v1194 = vpop.permute.xlu0 %1193
        %1196 = vrot.lane.b32.xlu0 %v1191, 112
        %v1197 = vpop.permute.xlu0 %1196
        %1199 = vrot.lane.b32.xlu0 %v1191, 104
        %v1200 = vpop.permute.xlu0 %1199
        %v1202 = vcombine.low %v1191, %v1197
        %v1203 = vcombine.high %v1191, %v1197
        %v1205 = vunpack.c.l.s4 1983009808
        %v1206 = vunpack.c.0.s8 %v1205
        %v1207 = vlaneseq
        %v1208 = vshrl.u32 %v1207, 7
        %v1209 = vsub.s32 %v1206, %v1208
        %v1210 = vrot.slane %v1202, %v1209
        %v1212 = vunpack.c.l.s4 1983009808
        %v1213 = vunpack.c.0.s8 %v1212
        %v1214 = vlaneseq
        %v1215 = vshrl.u32 %v1214, 7
        %v1216 = vsub.s32 %v1213, %v1215
        %v1217 = vrot.slane %v1203, %v1216
        %v1218 = vcombine.low %v1194, %v1200
        %v1219 = vcombine.high %v1194, %v1200
        %v1221 = vunpack.c.l.s4 1983009808
        %v1222 = vunpack.c.0.s8 %v1221
        %v1223 = vlaneseq
        %v1224 = vshrl.u32 %v1223, 7
        %v1225 = vsub.s32 %v1222, %v1224
        %v1226 = vrot.slane %v1218, %v1225
        %v1228 = vunpack.c.l.s4 1983009808
        %v1229 = vunpack.c.0.s8 %v1228
        %v1230 = vlaneseq
        %v1231 = vshrl.u32 %v1230, 7
        %v1232 = vsub.s32 %v1229, %v1231
        %v1233 = vrot.slane %v1219, %v1232
        %v1234 = vcombine.low %v1210, %v1226
        %v1235 = vcombine.high %v1210, %v1226
        %v1237 = vunpack.c.l.s4 1934713408
        %v1238 = vunpack.c.0.s8 %v1237
        %v1239 = vlaneseq
        %v1240 = vshrl.u32 %v1239, 7
        %v1241 = vsub.s32 %v1238, %v1240
        %v1242 = vrot.slane %v1234, %v1241
        %v1244 = vunpack.c.l.s4 1934713408
        %v1245 = vunpack.c.0.s8 %v1244
        %v1246 = vlaneseq
        %v1247 = vshrl.u32 %v1246, 7
        %v1248 = vsub.s32 %v1245, %v1247
        %v1249 = vrot.slane %v1235, %v1248
        %v1250 = vcombine.low %v1217, %v1233
        %v1251 = vcombine.high %v1217, %v1233
        %v1253 = vunpack.c.l.s4 1934713408
        %v1254 = vunpack.c.0.s8 %v1253
        %v1255 = vlaneseq
        %v1256 = vshrl.u32 %v1255, 7
        %v1257 = vsub.s32 %v1254, %v1256
        %v1258 = vrot.slane %v1250, %v1257
        %v1260 = vunpack.c.l.s4 1934713408
        %v1261 = vunpack.c.0.s8 %v1260
        %v1262 = vlaneseq
        %v1263 = vshrl.u32 %v1262, 7
        %v1264 = vsub.s32 %v1261, %v1263
        %v1265 = vrot.slane %v1251, %v1264
        %v1266 = vcombine.high %v1242, 0.0
        %v1267 = vcombine.high %v1249, 0.0
        %v1268 = vcombine.high %v1258, 0.0
        %v1269 = vcombine.high %v1265, 0.0
        %v1270 = vcombine.low %v1242, %v1249
        %v1272 = vunpack.c.l.s4 1983009808
        %v1273 = vunpack.c.0.s8 %v1272
        %v1274 = vlaneseq
        %v1275 = vshrl.u32 %v1274, 7
        %v1276 = vsub.s32 %v1273, %v1275
        %v1277 = vrot.slane %v1270, %v1276
        %v1278 = vcombine.low %v1266, %v1267
        %v1280 = vunpack.c.l.s4 1983009808
        %v1281 = vunpack.c.0.s8 %v1280
        %v1282 = vlaneseq
        %v1283 = vshrl.u32 %v1282, 7
        %v1284 = vsub.s32 %v1281, %v1283
        %v1285 = vrot.slane %v1278, %v1284
        %v1286 = vcombine.low %v1258, %v1265
        %v1288 = vunpack.c.l.s4 1983009808
        %v1289 = vunpack.c.0.s8 %v1288
        %v1290 = vlaneseq
        %v1291 = vshrl.u32 %v1290, 7
        %v1292 = vsub.s32 %v1289, %v1291
        %v1293 = vrot.slane %v1286, %v1292
        %v1294 = vcombine.low %v1268, %v1269
        %v1296 = vunpack.c.l.s4 1983009808
        %v1297 = vunpack.c.0.s8 %v1296
        %v1298 = vlaneseq
        %v1299 = vshrl.u32 %v1298, 7
        %v1300 = vsub.s32 %v1297, %v1299
        %v1301 = vrot.slane %v1294, %v1300
        %v1302 = vcombine.low %v1277, %v1285
        %v1303 = vcombine.high %v1277, %v1285
        %v1305 = vunpack.c.l.s4 1934713408
        %v1306 = vunpack.c.0.s8 %v1305
        %v1307 = vlaneseq
        %v1308 = vshrl.u32 %v1307, 7
        %v1309 = vsub.s32 %v1306, %v1308
        %v1310 = vrot.slane %v1302, %v1309
        %v1312 = vunpack.c.l.s4 1934713408
        %v1313 = vunpack.c.0.s8 %v1312
        %v1314 = vlaneseq
        %v1315 = vshrl.u32 %v1314, 7
        %v1316 = vsub.s32 %v1313, %v1315
        %v1317 = vrot.slane %v1303, %v1316
        %v1318 = vcombine.low %v1293, %v1301
        %v1319 = vcombine.high %v1293, %v1301
        %v1321 = vunpack.c.l.s4 1934713408
        %v1322 = vunpack.c.0.s8 %v1321
        %v1323 = vlaneseq
        %v1324 = vshrl.u32 %v1323, 7
        %v1325 = vsub.s32 %v1322, %v1324
        %v1326 = vrot.slane %v1318, %v1325
        %v1328 = vunpack.c.l.s4 1934713408
        %v1329 = vunpack.c.0.s8 %v1328
        %v1330 = vlaneseq
        %v1331 = vshrl.u32 %v1330, 7
        %v1332 = vsub.s32 %v1329, %v1331
        %v1333 = vrot.slane %v1319, %v1332
        %v1334 = vcombine.low %v1310, %v1326
        %v1335 = vcombine.high %v1310, %v1326
        %v1336 = vcombine.low %v1317, %v1333
        %v1337 = vcombine.high %v1317, %v1333
        %v1338 = vpack.c.bf16 %v1334, %v1334
        %v1339 = vpack.c.bf16 %v1335, %v1335
        %v1340 = vpack.c.bf16 %v1336, %v1336
        %v1341 = vpack.c.bf16 %v1337, %v1337
        %v1342 = vld [vmem:[#allocation2] sm:$0xf]
        %v1343 = vld [vmem:[#allocation2 + $0x4] sm:$0xf]
        %v1344 = vld [vmem:[#allocation2 + $0x8] sm:$0xf]
        %v1345 = vld [vmem:[#allocation2 + $0xc] sm:$0xf]
        %vm1346 = vcmask 64512
        %v1348 = vsel %vm1346, %v1338, 0
        %v1351 = vsel %vm1346, %v1342, 0
        %1353 = vmatprep.subr.bf16.mxu0 0
        %1354 = vmatpush1.bf16.xpose.msra.mxu0 %v1351
        %1355 = vmatprep.subr.bf16.mxu0 0
        %1356 = vmatpush1.bf16.xpose.msra.mxu0 0
        %1357 = vmatprep.subr.bf16.mxu0 0
        %1358 = vmatpush1.bf16.xpose.msra.mxu0 0
        %1359 = vmatprep.subr.bf16.mxu0 0
        %1360 = vmatpush1.bf16.xpose.msra.mxu0 0
        %1361 = vmatprep.subr.bf16.mxu0 0
        %1362 = vmatpush1.bf16.xpose.msra.mxu0 0
        %1363 = vmatprep.subr.bf16.mxu0 0
        %1364 = vmatpush1.bf16.xpose.msra.mxu0 0
        %1365 = vmatprep.subr.bf16.mxu0 0
        %1366 = vmatpush1.bf16.xpose.msra.mxu0 0
        %1367 = vmatprep.subr.bf16.mxu0 0
        %1368 = vmatpush1.bf16.xpose.msra.mxu0 0
        %1369 = vmatprep.subr.bf16.mxu0 0
        %1370 = vmatpush1.bf16.xpose.msra.mxu0 0
        %1371 = vmatprep.subr.bf16.mxu0 0
        %1372 = vmatpush1.bf16.xpose.msra.mxu0 0
        %1373 = vmatprep.subr.bf16.mxu0 0
        %1374 = vmatpush1.bf16.xpose.msra.mxu0 0
        %1375 = vmatprep.subr.bf16.mxu0 0
        %1376 = vmatpush1.bf16.xpose.msra.mxu0 0
        %1377 = vmatprep.subr.bf16.mxu0 0
        %1378 = vmatpush1.bf16.xpose.msra.mxu0 0
        %1379 = vmatprep.subr.bf16.mxu0 0
        %1380 = vmatpush1.bf16.xpose.msra.mxu0 0
        %1381 = vmatprep.subr.bf16.mxu0 0
        %1382 = vmatpush1.bf16.xpose.msra.mxu0 0
        %1383 = vmatprep.subr.bf16.mxu0 0
        %1384 = vmatpush1.bf16.xpose.msra.mxu0 0
        %1385 = vmatprep.mubr.bf16.mxu0 0
        %1386 = vmatmul.mubr.bf16.gmra.mrb[0].mxu0 %v1348
        %v1387 = vpop.f32.mrb[0].mxu0
        %v1388 = vadd.f32 0.0, %v1387
        %v1389 = vpop.f32.mrb[0].mxu0
        %v1390 = vpop.f32.mrb[0].mxu0
        %v1391 = vpop.f32.mrb[0].mxu0
        %1392 = vdwg.mxu0
        %v1394 = vsel %vm1346, %v1339, 0
        %v1397 = vsel %vm1346, %v1343, 0
        %1399 = vmatprep.subr.bf16.mxu0 0
        %1400 = vmatpush1.bf16.xpose.msra.mxu0 %v1397
        %1401 = vmatprep.subr.bf16.mxu0 0
        %1402 = vmatpush1.bf16.xpose.msra.mxu0 0
        %1403 = vmatprep.subr.bf16.mxu0 0
        %1404 = vmatpush1.bf16.xpose.msra.mxu0 0
        %1405 = vmatprep.subr.bf16.mxu0 0
        %1406 = vmatpush1.bf16.xpose.msra.mxu0 0
        %1407 = vmatprep.subr.bf16.mxu0 0
        %1408 = vmatpush1.bf16.xpose.msra.mxu0 0
        %1409 = vmatprep.subr.bf16.mxu0 0
        %1410 = vmatpush1.bf16.xpose.msra.mxu0 0
        %1411 = vmatprep.subr.bf16.mxu0 0
        %1412 = vmatpush1.bf16.xpose.msra.mxu0 0
        %1413 = vmatprep.subr.bf16.mxu0 0
        %1414 = vmatpush1.bf16.xpose.msra.mxu0 0
        %1415 = vmatprep.subr.bf16.mxu0 0
        %1416 = vmatpush1.bf16.xpose.msra.mxu0 0
        %1417 = vmatprep.subr.bf16.mxu0 0
        %1418 = vmatpush1.bf16.xpose.msra.mxu0 0
        %1419 = vmatprep.subr.bf16.mxu0 0
        %1420 = vmatpush1.bf16.xpose.msra.mxu0 0
        %1421 = vmatprep.subr.bf16.mxu0 0
        %1422 = vmatpush1.bf16.xpose.msra.mxu0 0
        %1423 = vmatprep.subr.bf16.mxu0 0
        %1424 = vmatpush1.bf16.xpose.msra.mxu0 0
        %1425 = vmatprep.subr.bf16.mxu0 0
        %1426 = vmatpush1.bf16.xpose.msra.mxu0 0
        %1427 = vmatprep.subr.bf16.mxu0 0
        %1428 = vmatpush1.bf16.xpose.msra.mxu0 0
        %1429 = vmatprep.subr.bf16.mxu0 0
        %1430 = vmatpush1.bf16.xpose.msra.mxu0 0
        %1431 = vmatprep.mubr.bf16.mxu0 0
        %1432 = vmatmul.mubr.bf16.gmra.mrb[0].mxu0 %v1394
        %v1433 = vpop.f32.mrb[0].mxu0
        %v1434 = vadd.f32 0.0, %v1433
        %v1435 = vpop.f32.mrb[0].mxu0
        %v1436 = vpop.f32.mrb[0].mxu0
        %v1437 = vpop.f32.mrb[0].mxu0
        %1438 = vdwg.mxu0
        %v1440 = vsel %vm1346, %v1340, 0
        %v1443 = vsel %vm1346, %v1344, 0
        %1445 = vmatprep.subr.bf16.mxu0 0
        %1446 = vmatpush1.bf16.xpose.msra.mxu0 %v1443
        %1447 = vmatprep.subr.bf16.mxu0 0
        %1448 = vmatpush1.bf16.xpose.msra.mxu0 0
        %1449 = vmatprep.subr.bf16.mxu0 0
        %1450 = vmatpush1.bf16.xpose.msra.mxu0 0
        %1451 = vmatprep.subr.bf16.mxu0 0
        %1452 = vmatpush1.bf16.xpose.msra.mxu0 0
        %1453 = vmatprep.subr.bf16.mxu0 0
        %1454 = vmatpush1.bf16.xpose.msra.mxu0 0
        %1455 = vmatprep.subr.bf16.mxu0 0
        %1456 = vmatpush1.bf16.xpose.msra.mxu0 0
        %1457 = vmatprep.subr.bf16.mxu0 0
        %1458 = vmatpush1.bf16.xpose.msra.mxu0 0
        %1459 = vmatprep.subr.bf16.mxu0 0
        %1460 = vmatpush1.bf16.xpose.msra.mxu0 0
        %1461 = vmatprep.subr.bf16.mxu0 0
        %1462 = vmatpush1.bf16.xpose.msra.mxu0 0
        %1463 = vmatprep.subr.bf16.mxu0 0
        %1464 = vmatpush1.bf16.xpose.msra.mxu0 0
        %1465 = vmatprep.subr.bf16.mxu0 0
        %1466 = vmatpush1.bf16.xpose.msra.mxu0 0
        %1467 = vmatprep.subr.bf16.mxu0 0
        %1468 = vmatpush1.bf16.xpose.msra.mxu0 0
        %1469 = vmatprep.subr.bf16.mxu0 0
        %1470 = vmatpush1.bf16.xpose.msra.mxu0 0
        %1471 = vmatprep.subr.bf16.mxu0 0
        %1472 = vmatpush1.bf16.xpose.msra.mxu0 0
        %1473 = vmatprep.subr.bf16.mxu0 0
        %1474 = vmatpush1.bf16.xpose.msra.mxu0 0
        %1475 = vmatprep.subr.bf16.mxu0 0
        %1476 = vmatpush1.bf16.xpose.msra.mxu0 0
        %1477 = vmatprep.mubr.bf16.mxu0 0
        %1478 = vmatmul.mubr.bf16.gmra.mrb[0].mxu0 %v1440
        %v1479 = vpop.f32.mrb[0].mxu0
        %v1480 = vadd.f32 0.0, %v1479
        %v1481 = vpop.f32.mrb[0].mxu0
        %v1482 = vpop.f32.mrb[0].mxu0
        %v1483 = vpop.f32.mrb[0].mxu0
        %1484 = vdwg.mxu0
        %v1486 = vsel %vm1346, %v1341, 0
        %v1489 = vsel %vm1346, %v1345, 0
        %1491 = vmatprep.subr.bf16.mxu0 0
        %1492 = vmatpush1.bf16.xpose.msra.mxu0 %v1489
        %1493 = vmatprep.subr.bf16.mxu0 0
        %1494 = vmatpush1.bf16.xpose.msra.mxu0 0
        %1495 = vmatprep.subr.bf16.mxu0 0
        %1496 = vmatpush1.bf16.xpose.msra.mxu0 0
        %1497 = vmatprep.subr.bf16.mxu0 0
        %1498 = vmatpush1.bf16.xpose.msra.mxu0 0
        %1499 = vmatprep.subr.bf16.mxu0 0
        %1500 = vmatpush1.bf16.xpose.msra.mxu0 0
        %1501 = vmatprep.subr.bf16.mxu0 0
        %1502 = vmatpush1.bf16.xpose.msra.mxu0 0
        %1503 = vmatprep.subr.bf16.mxu0 0
        %1504 = vmatpush1.bf16.xpose.msra.mxu0 0
        %1505 = vmatprep.subr.bf16.mxu0 0
        %1506 = vmatpush1.bf16.xpose.msra.mxu0 0
        %1507 = vmatprep.subr.bf16.mxu0 0
        %1508 = vmatpush1.bf16.xpose.msra.mxu0 0
        %1509 = vmatprep.subr.bf16.mxu0 0
        %1510 = vmatpush1.bf16.xpose.msra.mxu0 0
        %1511 = vmatprep.subr.bf16.mxu0 0
        %1512 = vmatpush1.bf16.xpose.msra.mxu0 0
        %1513 = vmatprep.subr.bf16.mxu0 0
        %1514 = vmatpush1.bf16.xpose.msra.mxu0 0
        %1515 = vmatprep.subr.bf16.mxu0 0
        %1516 = vmatpush1.bf16.xpose.msra.mxu0 0
        %1517 = vmatprep.subr.bf16.mxu0 0
        %1518 = vmatpush1.bf16.xpose.msra.mxu0 0
        %1519 = vmatprep.subr.bf16.mxu0 0
        %1520 = vmatpush1.bf16.xpose.msra.mxu0 0
        %1521 = vmatprep.subr.bf16.mxu0 0
        %1522 = vmatpush1.bf16.xpose.msra.mxu0 0
        %1523 = vmatprep.mubr.bf16.mxu0 0
        %1524 = vmatmul.mubr.bf16.gmra.mrb[0].mxu0 %v1486
        %v1525 = vpop.f32.mrb[0].mxu0
        %v1526 = vadd.f32 0.0, %v1525
        %v1527 = vpop.f32.mrb[0].mxu0
        %v1528 = vpop.f32.mrb[0].mxu0
        %v1529 = vpop.f32.mrb[0].mxu0
        %1530 = vdwg.mxu0
        %v1531 = vld [vmem:[%s528] sm:$0x3]
        %vm1532 = vnez %v1531
        %v1533 = vsel %vm1532, 16843009, 0
        %v1534 = vunpack.c.0.s8 %v1533
        %vm1535 = vcmp.ne.s32.totalorder %v1534, 0
        %v1536 = vsel %vm1535, 1, 0
        %vm1537 = vcmp.eq.s32.totalorder %v1536, 1
        %v1538 = vsel %vm1537, -1e+30, %v1388
        %v1539 = vsel %vm1537, -1e+30, %v1434
        %v1540 = vsel %vm1537, -1e+30, %v1480
        %v1541 = vsel %vm1537, -1e+30, %v1526
        %v1542 = vsel %vm1346, %v1538, -inf
        %1543 = vmax.xlane.f32.xlu0 %v1542
        %v1544 = vpop.xlane.xlu0 %1543
        %v1545 = vsel %vm1346, %v1539, -inf
        %1546 = vmax.xlane.f32.xlu0 %v1545
        %v1547 = vpop.xlane.xlu0 %1546
        %v1548 = vsel %vm1346, %v1540, -inf
        %1549 = vmax.xlane.f32.xlu0 %v1548
        %v1550 = vpop.xlane.xlu0 %1549
        %v1551 = vsel %vm1346, %v1541, -inf
        %1552 = vmax.xlane.f32.xlu0 %v1551
        %v1553 = vpop.xlane.xlu0 %1552
        %v1554 = vsub.f32 %v1538, %v1544
        %v1555 = vsub.f32 %v1539, %v1547
        %v1556 = vsub.f32 %v1540, %v1550
        %v1557 = vsub.f32 %v1541, %v1553
        %v1558 = vmul.f32 %v1554, 1.442695
        %v1559 = vpow.pop %v1558
        %v1560 = vmul.f32 %v1555, 1.442695
        %v1561 = vpow.pop %v1560
        %v1562 = vmul.f32 %v1556, 1.442695
        %v1563 = vpow.pop %v1562
        %v1564 = vmul.f32 %v1557, 1.442695
        %v1565 = vpow.pop %v1564
        %v1566 = vsel %vm1346, %v1559, 0.0
        %1567 = vadd.xlane.f32.xlu0 %v1566
        %v1568 = vpop.xlane.xlu0 %1567
        %v1569 = vsel %vm1346, %v1561, 0.0
        %1570 = vadd.xlane.f32.xlu0 %v1569
        %v1571 = vpop.xlane.xlu0 %1570
        %v1572 = vsel %vm1346, %v1563, 0.0
        %1573 = vadd.xlane.f32.xlu0 %v1572
        %v1574 = vpop.xlane.xlu0 %1573
        %v1575 = vsel %vm1346, %v1565, 0.0
        %1576 = vadd.xlane.f32.xlu0 %v1575
        %v1577 = vpop.xlane.xlu0 %1576
        %v1578 = vpack.c.bf16 %v1559, %v1559
        %v1579 = vpack.c.bf16 %v1561, %v1561
        %v1580 = vpack.c.bf16 %v1563, %v1563
        %v1581 = vpack.c.bf16 %v1565, %v1565
        %v1582 = vld [vmem:[#allocation3] sm:$0xf]
        %v1583 = vld [vmem:[#allocation3 + $0x4] sm:$0xf]
        %v1584 = vld [vmem:[#allocation3 + $0x8] sm:$0xf]
        %v1585 = vld [vmem:[#allocation3 + $0xc] sm:$0xf]
        %v1587 = vsel %vm1346, %v1578, 0
        %vm1589 = vcmask 1043456
        %v1591 = vsel %vm1589, %v1582, 0
        %1593 = vmatprep.subr.bf16.mxu0 0
        %1594 = vmatpush1.bf16.msra.mxu0 %v1591
        %1595 = vmatprep.subr.bf16.mxu0 0
        %1596 = vmatpush1.bf16.msra.mxu0 0
        %1597 = vmatprep.subr.bf16.mxu0 0
        %1598 = vmatpush1.bf16.msra.mxu0 0
        %1599 = vmatprep.subr.bf16.mxu0 0
        %1600 = vmatpush1.bf16.msra.mxu0 0
        %1601 = vmatprep.subr.bf16.mxu0 0
        %1602 = vmatpush1.bf16.msra.mxu0 0
        %1603 = vmatprep.subr.bf16.mxu0 0
        %1604 = vmatpush1.bf16.msra.mxu0 0
        %1605 = vmatprep.subr.bf16.mxu0 0
        %1606 = vmatpush1.bf16.msra.mxu0 0
        %1607 = vmatprep.subr.bf16.mxu0 0
        %1608 = vmatpush1.bf16.msra.mxu0 0
        %1609 = vmatprep.subr.bf16.mxu0 0
        %1610 = vmatpush1.bf16.msra.mxu0 0
        %1611 = vmatprep.subr.bf16.mxu0 0
        %1612 = vmatpush1.bf16.msra.mxu0 0
        %1613 = vmatprep.subr.bf16.mxu0 0
        %1614 = vmatpush1.bf16.msra.mxu0 0
        %1615 = vmatprep.subr.bf16.mxu0 0
        %1616 = vmatpush1.bf16.msra.mxu0 0
        %1617 = vmatprep.subr.bf16.mxu0 0
        %1618 = vmatpush1.bf16.msra.mxu0 0
        %1619 = vmatprep.subr.bf16.mxu0 0
        %1620 = vmatpush1.bf16.msra.mxu0 0
        %1621 = vmatprep.subr.bf16.mxu0 0
        %1622 = vmatpush1.bf16.msra.mxu0 0
        %1623 = vmatprep.subr.bf16.mxu0 0
        %1624 = vmatpush1.bf16.msra.mxu0 0
        %1625 = vmatprep.mubr.bf16.mxu0 0
        %1626 = vmatmul.mubr.bf16.gmra.mrb[0].mxu0 %v1587
        %v1627 = vpop.f32.mrb[0].mxu0
        %v1628 = vadd.f32 0.0, %v1627
        %v1629 = vpop.f32.mrb[0].mxu0
        %v1630 = vpop.f32.mrb[0].mxu0
        %v1631 = vpop.f32.mrb[0].mxu0
        %1632 = vdwg.mxu0
        %v1634 = vsel %vm1346, %v1579, 0
        %v1637 = vsel %vm1589, %v1583, 0
        %1639 = vmatprep.subr.bf16.mxu0 0
        %1640 = vmatpush1.bf16.msra.mxu0 %v1637
        %1641 = vmatprep.subr.bf16.mxu0 0
        %1642 = vmatpush1.bf16.msra.mxu0 0
        %1643 = vmatprep.subr.bf16.mxu0 0
        %1644 = vmatpush1.bf16.msra.mxu0 0
        %1645 = vmatprep.subr.bf16.mxu0 0
        %1646 = vmatpush1.bf16.msra.mxu0 0
        %1647 = vmatprep.subr.bf16.mxu0 0
        %1648 = vmatpush1.bf16.msra.mxu0 0
        %1649 = vmatprep.subr.bf16.mxu0 0
        %1650 = vmatpush1.bf16.msra.mxu0 0
        %1651 = vmatprep.subr.bf16.mxu0 0
        %1652 = vmatpush1.bf16.msra.mxu0 0
        %1653 = vmatprep.subr.bf16.mxu0 0
        %1654 = vmatpush1.bf16.msra.mxu0 0
        %1655 = vmatprep.subr.bf16.mxu0 0
        %1656 = vmatpush1.bf16.msra.mxu0 0
        %1657 = vmatprep.subr.bf16.mxu0 0
        %1658 = vmatpush1.bf16.msra.mxu0 0
        %1659 = vmatprep.subr.bf16.mxu0 0
        %1660 = vmatpush1.bf16.msra.mxu0 0
        %1661 = vmatprep.subr.bf16.mxu0 0
        %1662 = vmatpush1.bf16.msra.mxu0 0
        %1663 = vmatprep.subr.bf16.mxu0 0
        %1664 = vmatpush1.bf16.msra.mxu0 0
        %1665 = vmatprep.subr.bf16.mxu0 0
        %1666 = vmatpush1.bf16.msra.mxu0 0
        %1667 = vmatprep.subr.bf16.mxu0 0
        %1668 = vmatpush1.bf16.msra.mxu0 0
        %1669 = vmatprep.subr.bf16.mxu0 0
        %1670 = vmatpush1.bf16.msra.mxu0 0
        %1671 = vmatprep.mubr.bf16.mxu0 0
        %1672 = vmatmul.mubr.bf16.gmra.mrb[0].mxu0 %v1634
        %v1673 = vpop.f32.mrb[0].mxu0
        %v1674 = vadd.f32 0.0, %v1673
        %v1675 = vpop.f32.mrb[0].mxu0
        %v1676 = vpop.f32.mrb[0].mxu0
        %v1677 = vpop.f32.mrb[0].mxu0
        %1678 = vdwg.mxu0
        %v1680 = vsel %vm1346, %v1580, 0
        %v1683 = vsel %vm1589, %v1584, 0
        %1685 = vmatprep.subr.bf16.mxu0 0
        %1686 = vmatpush1.bf16.msra.mxu0 %v1683
        %1687 = vmatprep.subr.bf16.mxu0 0
        %1688 = vmatpush1.bf16.msra.mxu0 0
        %1689 = vmatprep.subr.bf16.mxu0 0
        %1690 = vmatpush1.bf16.msra.mxu0 0
        %1691 = vmatprep.subr.bf16.mxu0 0
        %1692 = vmatpush1.bf16.msra.mxu0 0
        %1693 = vmatprep.subr.bf16.mxu0 0
        %1694 = vmatpush1.bf16.msra.mxu0 0
        %1695 = vmatprep.subr.bf16.mxu0 0
        %1696 = vmatpush1.bf16.msra.mxu0 0
        %1697 = vmatprep.subr.bf16.mxu0 0
        %1698 = vmatpush1.bf16.msra.mxu0 0
        %1699 = vmatprep.subr.bf16.mxu0 0
        %1700 = vmatpush1.bf16.msra.mxu0 0
        %1701 = vmatprep.subr.bf16.mxu0 0
        %1702 = vmatpush1.bf16.msra.mxu0 0
        %1703 = vmatprep.subr.bf16.mxu0 0
        %1704 = vmatpush1.bf16.msra.mxu0 0
        %1705 = vmatprep.subr.bf16.mxu0 0
        %1706 = vmatpush1.bf16.msra.mxu0 0
        %1707 = vmatprep.subr.bf16.mxu0 0
        %1708 = vmatpush1.bf16.msra.mxu0 0
        %1709 = vmatprep.subr.bf16.mxu0 0
        %1710 = vmatpush1.bf16.msra.mxu0 0
        %1711 = vmatprep.subr.bf16.mxu0 0
        %1712 = vmatpush1.bf16.msra.mxu0 0
        %1713 = vmatprep.subr.bf16.mxu0 0
        %1714 = vmatpush1.bf16.msra.mxu0 0
        %1715 = vmatprep.subr.bf16.mxu0 0
        %1716 = vmatpush1.bf16.msra.mxu0 0
        %1717 = vmatprep.mubr.bf16.mxu0 0
        %1718 = vmatmul.mubr.bf16.gmra.mrb[0].mxu0 %v1680
        %v1719 = vpop.f32.mrb[0].mxu0
        %v1720 = vadd.f32 0.0, %v1719
        %v1721 = vpop.f32.mrb[0].mxu0
        %v1722 = vpop.f32.mrb[0].mxu0
        %v1723 = vpop.f32.mrb[0].mxu0
        %1724 = vdwg.mxu0
        %v1726 = vsel %vm1346, %v1581, 0
        %v1729 = vsel %vm1589, %v1585, 0
        %1731 = vmatprep.subr.bf16.mxu0 0
        %1732 = vmatpush1.bf16.msra.mxu0 %v1729
        %1733 = vmatprep.subr.bf16.mxu0 0
        %1734 = vmatpush1.bf16.msra.mxu0 0
        %1735 = vmatprep.subr.bf16.mxu0 0
        %1736 = vmatpush1.bf16.msra.mxu0 0
        %1737 = vmatprep.subr.bf16.mxu0 0
        %1738 = vmatpush1.bf16.msra.mxu0 0
        %1739 = vmatprep.subr.bf16.mxu0 0
        %1740 = vmatpush1.bf16.msra.mxu0 0
        %1741 = vmatprep.subr.bf16.mxu0 0
        %1742 = vmatpush1.bf16.msra.mxu0 0
        %1743 = vmatprep.subr.bf16.mxu0 0
        %1744 = vmatpush1.bf16.msra.mxu0 0
        %1745 = vmatprep.subr.bf16.mxu0 0
        %1746 = vmatpush1.bf16.msra.mxu0 0
        %1747 = vmatprep.subr.bf16.mxu0 0
        %1748 = vmatpush1.bf16.msra.mxu0 0
        %1749 = vmatprep.subr.bf16.mxu0 0
        %1750 = vmatpush1.bf16.msra.mxu0 0
        %1751 = vmatprep.subr.bf16.mxu0 0
        %1752 = vmatpush1.bf16.msra.mxu0 0
        %1753 = vmatprep.subr.bf16.mxu0 0
        %1754 = vmatpush1.bf16.msra.mxu0 0
        %1755 = vmatprep.subr.bf16.mxu0 0
        %1756 = vmatpush1.bf16.msra.mxu0 0
        %1757 = vmatprep.subr.bf16.mxu0 0
        %1758 = vmatpush1.bf16.msra.mxu0 0
        %1759 = vmatprep.subr.bf16.mxu0 0
        %1760 = vmatpush1.bf16.msra.mxu0 0
        %1761 = vmatprep.subr.bf16.mxu0 0
        %1762 = vmatpush1.bf16.msra.mxu0 0
        %1763 = vmatprep.mubr.bf16.mxu0 0
        %1764 = vmatmul.mubr.bf16.gmra.mrb[0].mxu0 %v1726
        %v1765 = vpop.f32.mrb[0].mxu0
        %v1766 = vadd.f32 0.0, %v1765
        %v1767 = vpop.f32.mrb[0].mxu0
        %v1768 = vpop.f32.mrb[0].mxu0
        %v1769 = vpop.f32.mrb[0].mxu0
        %1770 = vdwg.mxu0
        %v1771 = vrcp.pop %v1568
        %v1772 = vrcp.pop %v1571
        %v1773 = vrcp.pop %v1574
        %v1774 = vrcp.pop %v1577
        %v1775 = vmul.f32 %v1628, %v1771
        %v1776 = vmul.f32 %v1674, %v1772
        %v1777 = vmul.f32 %v1720, %v1773
        %v1778 = vmul.f32 %v1766, %v1774
        %v1779 = vcombine.low %v1775, %v1777
        %v1780 = vcombine.high %v1775, %v1777
        %v1782 = vunpack.c.l.s4 1983009808
        %v1783 = vunpack.c.0.s8 %v1782
        %v1784 = vlaneseq
        %v1785 = vshrl.u32 %v1784, 7
        %v1786 = vsub.s32 %v1783, %v1785
        %v1787 = vrot.slane %v1779, %v1786
        %v1789 = vunpack.c.l.s4 1983009808
        %v1790 = vunpack.c.0.s8 %v1789
        %v1791 = vlaneseq
        %v1792 = vshrl.u32 %v1791, 7
        %v1793 = vsub.s32 %v1790, %v1792
        %v1794 = vrot.slane %v1780, %v1793
        %v1795 = vcombine.low %v1776, %v1778
        %v1796 = vcombine.high %v1776, %v1778
        %v1798 = vunpack.c.l.s4 1983009808
        %v1799 = vunpack.c.0.s8 %v1798
        %v1800 = vlaneseq
        %v1801 = vshrl.u32 %v1800, 7
        %v1802 = vsub.s32 %v1799, %v1801
        %v1803 = vrot.slane %v1795, %v1802
        %v1805 = vunpack.c.l.s4 1983009808
        %v1806 = vunpack.c.0.s8 %v1805
        %v1807 = vlaneseq
        %v1808 = vshrl.u32 %v1807, 7
        %v1809 = vsub.s32 %v1806, %v1808
        %v1810 = vrot.slane %v1796, %v1809
        %v1811 = vcombine.low %v1787, %v1803
        %v1812 = vcombine.high %v1787, %v1803
        %v1814 = vunpack.c.l.s4 1934713408
        %v1815 = vunpack.c.0.s8 %v1814
        %v1816 = vlaneseq
        %v1817 = vshrl.u32 %v1816, 7
        %v1818 = vsub.s32 %v1815, %v1817
        %v1819 = vrot.slane %v1811, %v1818
        %v1821 = vunpack.c.l.s4 1934713408
        %v1822 = vunpack.c.0.s8 %v1821
        %v1823 = vlaneseq
        %v1824 = vshrl.u32 %v1823, 7
        %v1825 = vsub.s32 %v1822, %v1824
        %v1826 = vrot.slane %v1812, %v1825
        %v1827 = vcombine.low %v1794, %v1810
        %v1828 = vcombine.high %v1794, %v1810
        %v1830 = vunpack.c.l.s4 1934713408
        %v1831 = vunpack.c.0.s8 %v1830
        %v1832 = vlaneseq
        %v1833 = vshrl.u32 %v1832, 7
        %v1834 = vsub.s32 %v1831, %v1833
        %v1835 = vrot.slane %v1827, %v1834
        %v1837 = vunpack.c.l.s4 1934713408
        %v1838 = vunpack.c.0.s8 %v1837
        %v1839 = vlaneseq
        %v1840 = vshrl.u32 %v1839, 7
        %v1841 = vsub.s32 %v1838, %v1840
        %v1842 = vrot.slane %v1828, %v1841
        %v1843 = vcombine.high %v1819, 0.0
        %v1844 = vcombine.high %v1826, 0.0
        %v1845 = vcombine.high %v1835, 0.0
        %v1846 = vcombine.high %v1842, 0.0
        %v1847 = vcombine.low %v1819, %v1826
        %v1849 = vunpack.c.l.s4 1983009808
        %v1850 = vunpack.c.0.s8 %v1849
        %v1851 = vlaneseq
        %v1852 = vshrl.u32 %v1851, 7
        %v1853 = vsub.s32 %v1850, %v1852
        %v1854 = vrot.slane %v1847, %v1853
        %v1855 = vcombine.low %v1843, %v1844
        %v1857 = vunpack.c.l.s4 1983009808
        %v1858 = vunpack.c.0.s8 %v1857
        %v1859 = vlaneseq
        %v1860 = vshrl.u32 %v1859, 7
        %v1861 = vsub.s32 %v1858, %v1860
        %v1862 = vrot.slane %v1855, %v1861
        %v1863 = vcombine.low %v1835, %v1842
        %v1865 = vunpack.c.l.s4 1983009808
        %v1866 = vunpack.c.0.s8 %v1865
        %v1867 = vlaneseq
        %v1868 = vshrl.u32 %v1867, 7
        %v1869 = vsub.s32 %v1866, %v1868
        %v1870 = vrot.slane %v1863, %v1869
        %v1871 = vcombine.low %v1845, %v1846
        %v1873 = vunpack.c.l.s4 1983009808
        %v1874 = vunpack.c.0.s8 %v1873
        %v1875 = vlaneseq
        %v1876 = vshrl.u32 %v1875, 7
        %v1877 = vsub.s32 %v1874, %v1876
        %v1878 = vrot.slane %v1871, %v1877
        %v1879 = vcombine.low %v1854, %v1862
        %v1880 = vcombine.high %v1854, %v1862
        %v1882 = vunpack.c.l.s4 1934713408
        %v1883 = vunpack.c.0.s8 %v1882
        %v1884 = vlaneseq
        %v1885 = vshrl.u32 %v1884, 7
        %v1886 = vsub.s32 %v1883, %v1885
        %v1887 = vrot.slane %v1879, %v1886
        %v1889 = vunpack.c.l.s4 1934713408
        %v1890 = vunpack.c.0.s8 %v1889
        %v1891 = vlaneseq
        %v1892 = vshrl.u32 %v1891, 7
        %v1893 = vsub.s32 %v1890, %v1892
        %v1894 = vrot.slane %v1880, %v1893
        %v1895 = vcombine.low %v1870, %v1878
        %v1896 = vcombine.high %v1870, %v1878
        %v1898 = vunpack.c.l.s4 1934713408
        %v1899 = vunpack.c.0.s8 %v1898
        %v1900 = vlaneseq
        %v1901 = vshrl.u32 %v1900, 7
        %v1902 = vsub.s32 %v1899, %v1901
        %v1903 = vrot.slane %v1895, %v1902
        %v1905 = vunpack.c.l.s4 1934713408
        %v1906 = vunpack.c.0.s8 %v1905
        %v1907 = vlaneseq
        %v1908 = vshrl.u32 %v1907, 7
        %v1909 = vsub.s32 %v1906, %v1908
        %v1910 = vrot.slane %v1896, %v1909
        %v1911 = vcombine.low %v1887, %v1903
        %v1912 = vcombine.high %v1887, %v1903
        %v1913 = vcombine.low %v1894, %v1910
        %v1914 = vcombine.high %v1894, %v1910
        %1916 = vrot.lane.b32.xlu0 %v1912, 8
        %v1917 = vpop.permute.xlu0 %1916
        %1920 = vrot.lane.b32.xlu0 %v1913, 16
        %v1921 = vpop.permute.xlu0 %1920
        %1924 = vrot.lane.b32.xlu0 %v1914, 24
        %v1925 = vpop.permute.xlu0 %1924
        %v1927 = vsel %vm1346, %v1911, %v1917
        %vm1928 = vcmask 130048
        %v1929 = vsel %vm1928, %v1927, %v1921
        %vm1930 = vcmask 195584
        %v1931 = vsel %vm1930, %v1929, %v1925
        %v1932 = vadd.f32 %v1931, %v1094
        %1933 = vst.msk [vmem:[%s595] sm:$0xff] %vm1095, %v1932
        %s1934 = sand.u32 %s334, 1
        %s1935 = scalar_lea.sflag [#allocation6], %s1934
        %s1936 = sand.u32 %s334, 1
        %s1937 = smul.addr %s1936, 8
        %s1938 = scalar_lea.vmem [#allocation16], %s1937
        // Predicated region
        $region101: #{tpu_custom_call.1} parent=67 // pred_check
          %p1939 = pneg %p344
        $region102: #{tpu_custom_call.1} parent=67 // pred_check_branch
          %1941 = sbr.rel (%p1939) target = $region104
        $region103: #{tpu_custom_call.1} parent=67 // pred_region
          %s1943 = ssub.s32 128, 128
          %1944 = vsyncadd %s1935, %s1943
          %s1945 = sadd.s32 %s41, %s40
          %s1946 = smul.addr %s1945, 128
          %s1947 = scalar_lea.hbm %s12, %s1946
          %s1949 = sshll.u32 %s1938, 4
          %s1950 = int_to_ptr.vmem [resolvable:$true] %s1949
          %1952 = dma.vmem_to_hbm [thread:$0]  %s1950, 128, %s1947, %s1935
        $region104: #{tpu_custom_call.1} parent=67 // pred_fallthru
          _
      $region68: #{tpu_custom_call.1} parent=5 // pred_fallthru
        _
      %p1953 = scmp.le.s32.totalorder 2, %s31
      // Predicated region
      $region105: #{tpu_custom_call.1} parent=5 // pred_check
        %p1954 = pneg %p1953
      $region106: #{tpu_custom_call.1} parent=5 // pred_check_branch
        %1956 = sbr.rel (%p1954) target = $region108
      $region107: #{tpu_custom_call.1} parent=5 // pred_region
        %s1957 = ssub.s32 %s31, 2
        // Predicated region
        $region109: #{tpu_custom_call.1} parent=107 // pred_check
          %p1958 = pneg %p350
        $region110: #{tpu_custom_call.1} parent=107 // pred_check_branch
          %1960 = sbr.rel (%p1958) target = $region112
        $region111: #{tpu_custom_call.1} parent=107 // pred_region
          %s1961 = sand.u32 %s335, 1
          %s1962 = scalar_lea.sflag [#allocation6], %s1961
          %s1963 = sand.u32 %s335, 1
          %s1964 = smul.addr %s1963, 8
          %s1965 = scalar_lea.vmem [#allocation16], %s1964
          %1966 = dma.done %s1962, 128
        $region112: #{tpu_custom_call.1} parent=107 // pred_fallthru
          _
      $region108: #{tpu_custom_call.1} parent=5 // pred_fallthru
        _
    $region6: #{tpu_custom_call.1} parent=1 // loop_footer
      %s35 = sadd.s32 1, %s31
    $region7: #{tpu_custom_call.1} parent=1 // loop_footer_branch
      %30 = sbr.rel target = $region3
    $region8: #{tpu_custom_call.1} parent=1 // loop_exit
      _
    %1967 = vsyncpa [#allocation5], 1
    %s1968 = scalar_lea.sflag [#allocation5], 1
    %1969 = vsyncpa %s1968, 1
    %1970 = vsyncpa [#allocation8], 1
    %s1971 = scalar_lea.sflag [#allocation8], 1
    %1972 = vsyncpa %s1971, 1
    %1973 = vsyncpa [#allocation11], 1
    %s1974 = scalar_lea.sflag [#allocation11], 1
    %1975 = vsyncpa %s1974, 1
    %1976 = vsyncpa [#allocation14], 1
    %1977 = vsyncpa [#allocation6], 1
    %s1978 = scalar_lea.sflag [#allocation6], 1
    %1979 = vsyncpa %s1978, 1

</llo_original>
